<compile_context>
chip_gen: v7x
topology: tpu7x:2x2x1
jax: 0.10.0
libtpu: 0.0.40
codegen_flags: <defaults>
</compile_context>

<pallas_src>
import functools

import jax
import jax.numpy as jnp
from jax.experimental import pallas as pl
from jax.experimental.pallas import tpu as pltpu

EPS = 1e-5  # PyTorch InstanceNorm2d default eps


def _vmem_limit_bytes(block_bytes):
    # >= the 32 MiB default scoped limit, with headroom below v7x's 64 MiB VMEM.
    return int(min(56 * 2**20, max(32 * 2**20, 3 * block_bytes)))


# ----------------------------- Pallas kernels ------------------------------

def _conv_instnorm_kernel(p_ref, w_ref, g_ref, b_ref, *rest,
                          act, parity_groups, has_residual):
    """Fused im2col-conv matmul + InstanceNorm(+ReLU)(+residual) for one sample.

    p_ref : (1, K, M)   bf16 patches (K on sublanes, spatial on lanes)
    w_ref : (Co, K)     bf16 flattened conv weight, Co = parity_groups * Cphys
    g_ref : (Cphys, 1)  f32 gamma      b_ref : (Cphys, 1) f32 beta
    rest  : [r_ref (1, Cphys, M) f32 residual,] o_ref (1, Co, M) f32
    """
    if has_residual:
        r_ref, o_ref = rest
    else:
        (o_ref,) = rest

    # MXU matmul, f32 accumulation; result is lane-dense (spatial on lanes).
    acc = jnp.dot(w_ref[...], p_ref[0], preferred_element_type=jnp.float32)  # (Co, M)
    co, m = acc.shape
    cphys = co // parity_groups
    n = parity_groups * m  # spatial elements per physical channel

    # InstanceNorm statistics per physical channel.  For the sub-pixel
    # transposed-conv path (parity_groups == 4) the 4 parity row-blocks of a
    # channel jointly tile the full upsampled spatial extent.
    parts = [acc[g * cphys:(g + 1) * cphys, :] for g in range(parity_groups)]
    s = parts[0]
    for p in parts[1:]:
        s = s + p
    mean = jnp.sum(s, axis=1, keepdims=True) * (1.0 / n)          # (Cphys, 1)
    cent = [p - mean for p in parts]
    ss = cent[0] * cent[0]
    for cp in cent[1:]:
        ss = ss + cp * cp
    var = jnp.sum(ss, axis=1, keepdims=True) * (1.0 / n)          # biased, like PyTorch
    scale = jax.lax.rsqrt(var + EPS) * g_ref[...]
    shift = b_ref[...]

    for g in range(parity_groups):
        y = cent[g] * scale + shift
        if act == "relu":
            y = jnp.maximum(y, 0.0)
        if has_residual:
            y = y + r_ref[0]
        o_ref[0, g * cphys:(g + 1) * cphys, :] = y


def _conv_relu6_kernel(p_ref, w_ref, o_ref):
    """Final conv tile: MXU matmul + fused ReLU6 + /6 epilogue (lane-dense)."""
    acc = jnp.dot(w_ref[...], p_ref[0], preferred_element_type=jnp.float32)
    o_ref[0, :, :] = jnp.clip(acc, 0.0, 6.0) * (1.0 / 6.0)


# ------------------------------ wrappers ------------------------------------

def _im2col_nchw(x, kh, kw, stride, pad):
    """im2col on NCHW input -> (B, kh*kw*C, Ho*Wo); plain-JAX glue."""
    B, C, H, W = x.shape
    xp = jnp.pad(x, ((0, 0), (0, 0), (pad, pad), (pad, pad)))
    Hp, Wp = H + 2 * pad, W + 2 * pad
    Ho = (Hp - kh) // stride + 1
    Wo = (Wp - kw) // stride + 1
    cols = []
    for i in range(kh):
        for j in range(kw):
            cols.append(xp[:, :, i:i + (Ho - 1) * stride + 1:stride,
                              j:j + (Wo - 1) * stride + 1:stride])
    pat = jnp.stack(cols, axis=1)                     # (B, kh*kw, C, Ho, Wo)
    return pat.reshape(B, kh * kw * C, Ho * Wo), Ho, Wo


def fused_conv_instnorm(patches, w_mat, gamma, beta, *, act=None,
                        residual=None, parity_groups=1):
    """patches: (B, K, M), w_mat: (Co, K) -> (B, Co, M) f32."""
    B, K, M = patches.shape
    Co = w_mat.shape[0]
    Cphys = Co // parity_groups

    pb = patches.astype(jnp.bfloat16)
    wb = w_mat.astype(jnp.bfloat16)
    g2 = gamma.reshape(Cphys, 1).astype(jnp.float32)
    b2 = beta.reshape(Cphys, 1).astype(jnp.float32)

    in_specs = [
        pl.BlockSpec((1, K, M), lambda b: (b, 0, 0)),
        pl.BlockSpec((Co, K), lambda b: (0, 0)),
        pl.BlockSpec((Cphys, 1), lambda b: (0, 0)),
        pl.BlockSpec((Cphys, 1), lambda b: (0, 0)),
    ]
    args = [pb, wb, g2, b2]
    has_res = residual is not None
    if has_res:
        rr = residual.astype(jnp.float32)
        in_specs.append(pl.BlockSpec((1, Cphys, M), lambda b: (b, 0, 0)))
        args.append(rr)

    blk_bytes = K * M * 2 + Co * K * 2 + Co * M * 4 + (Cphys * M * 4 if has_res else 0)
    bytes_accessed = (B * K * M * 2 + Co * K * 2 + B * Co * M * 4
                      + (B * Cphys * M * 4 if has_res else 0))

    return pl.pallas_call(
        functools.partial(_conv_instnorm_kernel, act=act,
                          parity_groups=parity_groups, has_residual=has_res),
        grid=(B,),
        in_specs=in_specs,
        out_specs=pl.BlockSpec((1, Co, M), lambda b: (b, 0, 0)),
        out_shape=jax.ShapeDtypeStruct((B, Co, M), jnp.float32),
        compiler_params=pltpu.CompilerParams(
            dimension_semantics=("parallel",),
            vmem_limit_bytes=_vmem_limit_bytes(blk_bytes)),
        cost_estimate=pl.CostEstimate(flops=2 * B * Co * K * M,
                                      transcendentals=B * Cphys,
                                      bytes_accessed=bytes_accessed),
    )(*args)


def conv_in_block(x, w, gamma, beta, *, stride, pad, act=None, residual=None):
    """Conv2d (PyTorch (Cout,Cin,kh,kw), no bias) + InstanceNorm(+act)(+residual)."""
    Cout, Cin, kh, kw = w.shape
    B = x.shape[0]
    patches, Ho, Wo = _im2col_nchw(x, kh, kw, stride, pad)
    w_mat = jnp.transpose(w, (0, 2, 3, 1)).reshape(Cout, kh * kw * Cin)
    res = None if residual is None else residual.reshape(B, Cout, Ho * Wo)
    out = fused_conv_instnorm(patches, w_mat, gamma, beta, act=act,
                              residual=res, parity_groups=1)
    return out.reshape(B, Cout, Ho, Wo)


def _subpixel_weight(w):
    """ConvTranspose2d(k=4,s=2,p=1) weight (Cin, Cout, 4, 4) -> (4*Cout, 9*Cin).

    Sub-pixel decomposition: output parity (py, px) is a stride-1 conv of the
    un-dilated input with taps at spatial offsets {-1, 0, +1}; weight tap
    (ty, tx) maps to ConvTranspose tap (3+py-2*ty, 3+px-2*tx) when in range.
    Row block index g = py*2 + px.
    """
    Cin, Cout, kh, kw = w.shape
    assert (kh, kw) == (4, 4)
    rows = []
    for py in range(2):
        for px in range(2):
            taps = []
            for ty in range(3):
                for tx in range(3):
                    i = 3 + py - 2 * ty
                    j = 3 + px - 2 * tx
                    if 0 <= i < 4 and 0 <= j < 4:
                        taps.append(jnp.transpose(w[:, :, i, j]))    # (Cout, Cin)
                    else:
                        taps.append(jnp.zeros((Cout, Cin), w.dtype))
            rows.append(jnp.concatenate(taps, axis=1))               # (Cout, 9*Cin)
    return jnp.concatenate(rows, axis=0)                             # (4*Cout, 9*Cin)


def upconv_in_relu(x, w_t, gamma, beta):
    """ConvTranspose2d(k=4,s=2,p=1, no bias) + InstanceNorm + ReLU (sub-pixel)."""
    B, Cin, H, W = x.shape
    Cout = w_t.shape[1]
    patches, _, _ = _im2col_nchw(x, 3, 3, 1, 1)            # (B, 9*Cin, H*W)
    w_mat = _subpixel_weight(w_t)                          # (4*Cout, 9*Cin)
    out = fused_conv_instnorm(patches, w_mat, gamma, beta, act="relu",
                              parity_groups=4)             # (B, 4*Cout, H*W)
    out = out.reshape(B, 2, 2, Cout, H, W)                 # (b, py, px, c, u, v)
    out = jnp.transpose(out, (0, 3, 4, 1, 5, 2))           # (b, c, u, py, v, px)
    return out.reshape(B, Cout, 2 * H, 2 * W)              # pixel shuffle


def conv_relu6_div6(x, w, *, stride, pad):
    """Final Conv2d + ReLU6 + /6, tiled over (batch, spatial)."""
    Cout, Cin, kh, kw = w.shape
    patches, Ho, Wo = _im2col_nchw(x, kh, kw, stride, pad)
    B, K, M = patches.shape
    pb = patches.astype(jnp.bfloat16)
    wb = jnp.transpose(w, (0, 2, 3, 1)).reshape(Cout, kh * kw * Cin).astype(jnp.bfloat16)

    tm = M
    for t in (512, 256, 128):        # lane-aligned M tiles; fall back to full M
        if M % t == 0:
            tm = t
            break

    blk_bytes = K * tm * 2 + Cout * K * 2 + Cout * tm * 4
    out = pl.pallas_call(
        _conv_relu6_kernel,
        grid=(B, M // tm),
        in_specs=[pl.BlockSpec((1, K, tm), lambda b, m: (b, 0, m)),
                  pl.BlockSpec((Cout, K), lambda b, m: (0, 0))],
        out_specs=pl.BlockSpec((1, Cout, tm), lambda b, m: (b, 0, m)),
        out_shape=jax.ShapeDtypeStruct((B, Cout, M), jnp.float32),
        compiler_params=pltpu.CompilerParams(
            dimension_semantics=("parallel", "parallel"),
            vmem_limit_bytes=_vmem_limit_bytes(blk_bytes)),
        cost_estimate=pl.CostEstimate(
            flops=2 * B * Cout * K * M, transcendentals=0,
            bytes_accessed=B * K * M * 2 + Cout * K * 2 + B * Cout * M * 4),
    )(pb, wb)
    return out.reshape(B, Cout, Ho, Wo)


# ------------------------------ model ---------------------------------------

def init_params(key, conv_dim=8, repeat_num=2):
    params = {}

    def nxt():
        nonlocal key
        key, sub = jax.random.split(key)
        return sub

    def conv_w(cout, cin, k):
        return 0.05 * jax.random.normal(nxt(), (cout, cin, k, k), jnp.float32)

    params["w0"] = conv_w(conv_dim, 4, 7)
    params["g0"] = jnp.ones((conv_dim,), jnp.float32)
    params["b0"] = jnp.zeros((conv_dim,), jnp.float32)
    curr = conv_dim
    for i in range(2):                            # downsampling
        params[f"dw{i}"] = conv_w(curr * 2, curr, 4)
        params[f"dg{i}"] = jnp.ones((curr * 2,), jnp.float32)
        params[f"db{i}"] = jnp.zeros((curr * 2,), jnp.float32)
        curr *= 2
    for i in range(repeat_num):                   # residual blocks
        params[f"r{i}_w1"] = conv_w(curr, curr, 3)
        params[f"r{i}_g1"] = jnp.ones((curr,), jnp.float32)
        params[f"r{i}_b1"] = jnp.zeros((curr,), jnp.float32)
        params[f"r{i}_w2"] = conv_w(curr, curr, 3)
        params[f"r{i}_g2"] = jnp.ones((curr,), jnp.float32)
        params[f"r{i}_b2"] = jnp.zeros((curr,), jnp.float32)
    for i in range(2):                            # upsampling (ConvTranspose)
        params[f"uw{i}"] = 0.05 * jax.random.normal(
            nxt(), (curr, curr // 2, 4, 4), jnp.float32)   # (Cin, Cout, kh, kw)
        params[f"ug{i}"] = jnp.ones((curr // 2,), jnp.float32)
        params[f"ub{i}"] = jnp.zeros((curr // 2,), jnp.float32)
        curr //= 2
    params["wf"] = conv_w(3, curr, 7)
    return params


def hnet_forward(params, x_nchw, c, repeat_num=2):
    # x_nchw: (B, 3, H, W), c: (B,)
    B, _, H, W = x_nchw.shape
    cmap = jnp.broadcast_to(c.reshape(B, 1, 1, 1).astype(x_nchw.dtype), (B, 1, H, W))
    h = jnp.concatenate([x_nchw, cmap], axis=1)            # (B, 4, H, W)

    h = conv_in_block(h, params["w0"], params["g0"], params["b0"],
                      stride=1, pad=3, act="relu")
    for i in range(2):                                     # downsampling
        h = conv_in_block(h, params[f"dw{i}"], params[f"dg{i}"], params[f"db{i}"],
                          stride=2, pad=1, act="relu")
    for i in range(repeat_num):                            # residual blocks
        r = h
        t = conv_in_block(h, params[f"r{i}_w1"], params[f"r{i}_g1"], params[f"r{i}_b1"],
                          stride=1, pad=1, act="relu")
        h = conv_in_block(t, params[f"r{i}_w2"], params[f"r{i}_g2"], params[f"r{i}_b2"],
                          stride=1, pad=1, residual=r)
    for i in range(2):                                     # upsampling
        h = upconv_in_relu(h, params[f"uw{i}"], params[f"ug{i}"], params[f"ub{i}"])
    # final Conv2d 7x7 -> ReLU6, then the module-level /6 (fused epilogue)
    return conv_relu6_div6(h, params["wf"], stride=1, pad=3)   # (B, 3, H, W)


if __name__ == "__main__":
    key = jax.random.PRNGKey(0)
    k_x, k_c, k_p = jax.random.split(key, 3)

    B, H, W = 2, 16, 16
    conv_dim, repeat_num = 8, 2                   # small shapes for the demo

    x = jax.random.normal(k_x, (B, 3, H, W), jnp.float32)
    c = jax.random.uniform(k_c, (B,), jnp.float32)
    params = init_params(k_p, conv_dim=conv_dim, repeat_num=repeat_num)

    fwd = jax.jit(functools.partial(hnet_forward, repeat_num=repeat_num))
    out = fwd(params, x, c)
    jax.block_until_ready(out)
    assert out.shape == (B, 3, H, W), out.shape
    print("KERNEL_OK")
</pallas_src>

<mosaic_0001>
module attributes {stable_mosaic.version = 11 : i64} {
  func.func @_conv_instnorm_kernel(%arg0: i32, %arg1: memref<1x196x256xbf16, #tpu.memory_space<vmem>>, %arg2: memref<8x196xbf16, #tpu.memory_space<vmem>>, %arg3: memref<8x1xf32, #tpu.memory_space<vmem>>, %arg4: memref<8x1xf32, #tpu.memory_space<vmem>>, %arg5: memref<1x8x256xf32, #tpu.memory_space<vmem>>) attributes {dimension_semantics = [#tpu.dimension_semantics<parallel>], iteration_bounds = array<i64: 2>, scalar_prefetch = 0 : i64, scratch_operands = 0 : i64, tpu.core_type = #tpu.core_type<tc>, window_params = [{transform_indices = @transform_0, window_bounds = array<i64: 1, 196, 256>}, {pipeline_mode = #tpu.pipeline_mode<synchronous>, transform_indices = @transform_1, window_bounds = array<i64: 8, 196>}, {pipeline_mode = #tpu.pipeline_mode<synchronous>, transform_indices = @transform_2, window_bounds = array<i64: 8, 1>}, {pipeline_mode = #tpu.pipeline_mode<synchronous>, transform_indices = @transform_3, window_bounds = array<i64: 8, 1>}, {transform_indices = @transform_4, window_bounds = array<i64: 1, 8, 256>}]} {
    %c0 = arith.constant 0 : index
    %c0_0 = arith.constant 0 : index
    %0 = vector.load %arg2[%c0, %c0_0] : memref<8x196xbf16, #tpu.memory_space<vmem>>, vector<8x196xbf16>
    %c0_1 = arith.constant 0 : index
    %c0_2 = arith.constant 0 : index
    %c0_3 = arith.constant 0 : index
    %1 = vector.load %arg1[%c0_1, %c0_2, %c0_3] : memref<1x196x256xbf16, #tpu.memory_space<vmem>>, vector<1x196x256xbf16>
    %2 = vector.shape_cast %1 : vector<1x196x256xbf16> to vector<196x256xbf16>
    %cst = arith.constant dense<0.000000e+00> : vector<8x256xf32>
    %3 = tpu.matmul %0, %2, %cst {dimension_numbers = #tpu.dot_dimension_numbers<[1], [0], [0], [1], [0, 0, 1, 1], [], []>} : vector<8x196xbf16>, vector<196x256xbf16>, vector<8x256xf32> -> vector<8x256xf32>
    %cst_4 = arith.constant dense<0.000000e+00> : vector<8xf32>
    %4 = vector.multi_reduction <add>, %3, %cst_4 [1] : vector<8x256xf32> to vector<8xf32>
    %5 = vector.shape_cast %4 : vector<8xf32> to vector<8x1xf32>
    %cst_5 = arith.constant 3.906250e-03 : f32
    %6 = vector.broadcast %cst_5 : f32 to vector<8x1xf32>
    %7 = arith.mulf %5, %6 : vector<8x1xf32>
    %8 = vector.broadcast %7 : vector<8x1xf32> to vector<8x256xf32>
    %9 = arith.subf %3, %8 : vector<8x256xf32>
    %10 = arith.mulf %9, %9 : vector<8x256xf32>
    %cst_6 = arith.constant dense<0.000000e+00> : vector<8xf32>
    %11 = vector.multi_reduction <add>, %10, %cst_6 [1] : vector<8x256xf32> to vector<8xf32>
    %12 = vector.shape_cast %11 : vector<8xf32> to vector<8x1xf32>
    %cst_7 = arith.constant 3.906250e-03 : f32
    %13 = vector.broadcast %cst_7 : f32 to vector<8x1xf32>
    %14 = arith.mulf %12, %13 : vector<8x1xf32>
    %cst_8 = arith.constant 9.99999974E-6 : f32
    %15 = vector.broadcast %cst_8 : f32 to vector<8x1xf32>
    %16 = arith.addf %14, %15 : vector<8x1xf32>
    %17 = math.rsqrt %16 : vector<8x1xf32>
    %c0_9 = arith.constant 0 : index
    %c0_10 = arith.constant 0 : index
    %18 = vector.load %arg3[%c0_9, %c0_10] : memref<8x1xf32, #tpu.memory_space<vmem>>, vector<8x1xf32>
    %19 = arith.mulf %17, %18 : vector<8x1xf32>
    %c0_11 = arith.constant 0 : index
    %c0_12 = arith.constant 0 : index
    %20 = vector.load %arg4[%c0_11, %c0_12] : memref<8x1xf32, #tpu.memory_space<vmem>>, vector<8x1xf32>
    %21 = vector.broadcast %19 : vector<8x1xf32> to vector<8x256xf32>
    %22 = arith.mulf %9, %21 : vector<8x256xf32>
    %23 = vector.broadcast %20 : vector<8x1xf32> to vector<8x256xf32>
    %24 = arith.addf %22, %23 : vector<8x256xf32>
    %cst_13 = arith.constant 0.000000e+00 : f32
    %25 = vector.broadcast %cst_13 : f32 to vector<8x256xf32>
    %26 = arith.maximumf %24, %25 : vector<8x256xf32>
    %c0_14 = arith.constant 0 : index
    %c0_15 = arith.constant 0 : index
    %c0_16 = arith.constant 0 : index
    %27 = vector.load %arg5[%c0_14, %c0_15, %c0_16] : memref<1x8x256xf32, #tpu.memory_space<vmem>>, vector<1x8x256xf32>
    %28 = vector.shape_cast %27 : vector<1x8x256xf32> to vector<8x256xf32>
    %29 = vector.shape_cast %26 : vector<8x256xf32> to vector<1x8x256xf32>
    tpu.vector_store %arg5[%c0_14, %c0_15, %c0_16], %29 {strides = array<i32>} : memref<1x8x256xf32, #tpu.memory_space<vmem>>, vector<1x8x256xf32>,
    return
  }
  func.func @transform_0(%arg0: i32) -> (i32, i32, i32) {
    %c0_i32 = arith.constant 0 : i32
    %c0_i32_0 = arith.constant 0 : i32
    %c0_i32_1 = arith.constant 0 : i32
    return %arg0, %c0_i32, %c0_i32_0 : i32, i32, i32
  }
  func.func @transform_1(%arg0: i32) -> (i32, i32) {
    %c0_i32 = arith.constant 0 : i32
    %c0_i32_0 = arith.constant 0 : i32
    %c0_i32_1 = arith.constant 0 : i32
    return %c0_i32, %c0_i32_0 : i32, i32
  }
  func.func @transform_2(%arg0: i32) -> (i32, i32) {
    %c0_i32 = arith.constant 0 : i32
    %c0_i32_0 = arith.constant 0 : i32
    %c0_i32_1 = arith.constant 0 : i32
    return %c0_i32, %c0_i32_0 : i32, i32
  }
  func.func @transform_3(%arg0: i32) -> (i32, i32) {
    %c0_i32 = arith.constant 0 : i32
    %c0_i32_0 = arith.constant 0 : i32
    %c0_i32_1 = arith.constant 0 : i32
    return %c0_i32, %c0_i32_0 : i32, i32
  }
  func.func @transform_4(%arg0: i32) -> (i32, i32, i32) {
    %c0_i32 = arith.constant 0 : i32
    %c0_i32_0 = arith.constant 0 : i32
    %c0_i32_1 = arith.constant 0 : i32
    return %arg0, %c0_i32, %c0_i32_0 : i32, i32, i32
  }
}

module attributes {stable_mosaic.version = 11 : i64} {
  func.func @_conv_instnorm_kernel(%arg0: i32, %arg1: memref<1x128x64xbf16, #tpu.memory_space<vmem>>, %arg2: memref<16x128xbf16, #tpu.memory_space<vmem>>, %arg3: memref<16x1xf32, #tpu.memory_space<vmem>>, %arg4: memref<16x1xf32, #tpu.memory_space<vmem>>, %arg5: memref<1x16x64xf32, #tpu.memory_space<vmem>>) attributes {dimension_semantics = [#tpu.dimension_semantics<parallel>], iteration_bounds = array<i64: 2>, scalar_prefetch = 0 : i64, scratch_operands = 0 : i64, tpu.core_type = #tpu.core_type<tc>, window_params = [{transform_indices = @transform_0, window_bounds = array<i64: 1, 128, 64>}, {pipeline_mode = #tpu.pipeline_mode<synchronous>, transform_indices = @transform_1, window_bounds = array<i64: 16, 128>}, {pipeline_mode = #tpu.pipeline_mode<synchronous>, transform_indices = @transform_2, window_bounds = array<i64: 16, 1>}, {pipeline_mode = #tpu.pipeline_mode<synchronous>, transform_indices = @transform_3, window_bounds = array<i64: 16, 1>}, {transform_indices = @transform_4, window_bounds = array<i64: 1, 16, 64>}]} {
    %c0 = arith.constant 0 : index
    %c0_0 = arith.constant 0 : index
    %0 = vector.load %arg2[%c0, %c0_0] : memref<16x128xbf16, #tpu.memory_space<vmem>>, vector<16x128xbf16>
    %c0_1 = arith.constant 0 : index
    %c0_2 = arith.constant 0 : index
    %c0_3 = arith.constant 0 : index
    %1 = vector.load %arg1[%c0_1, %c0_2, %c0_3] : memref<1x128x64xbf16, #tpu.memory_space<vmem>>, vector<1x128x64xbf16>
    %2 = vector.shape_cast %1 : vector<1x128x64xbf16> to vector<128x64xbf16>
    %cst = arith.constant dense<0.000000e+00> : vector<16x64xf32>
    %3 = tpu.matmul %0, %2, %cst {dimension_numbers = #tpu.dot_dimension_numbers<[1], [0], [0], [1], [0, 0, 1, 1], [], []>} : vector<16x128xbf16>, vector<128x64xbf16>, vector<16x64xf32> -> vector<16x64xf32>
    %cst_4 = arith.constant dense<0.000000e+00> : vector<16xf32>
    %4 = vector.multi_reduction <add>, %3, %cst_4 [1] : vector<16x64xf32> to vector<16xf32>
    %5 = vector.shape_cast %4 : vector<16xf32> to vector<16x1xf32>
    %cst_5 = arith.constant 1.562500e-02 : f32
    %6 = vector.broadcast %cst_5 : f32 to vector<16x1xf32>
    %7 = arith.mulf %5, %6 : vector<16x1xf32>
    %8 = vector.broadcast %7 : vector<16x1xf32> to vector<16x64xf32>
    %9 = arith.subf %3, %8 : vector<16x64xf32>
    %10 = arith.mulf %9, %9 : vector<16x64xf32>
    %cst_6 = arith.constant dense<0.000000e+00> : vector<16xf32>
    %11 = vector.multi_reduction <add>, %10, %cst_6 [1] : vector<16x64xf32> to vector<16xf32>
    %12 = vector.shape_cast %11 : vector<16xf32> to vector<16x1xf32>
    %cst_7 = arith.constant 1.562500e-02 : f32
    %13 = vector.broadcast %cst_7 : f32 to vector<16x1xf32>
    %14 = arith.mulf %12, %13 : vector<16x1xf32>
    %cst_8 = arith.constant 9.99999974E-6 : f32
    %15 = vector.broadcast %cst_8 : f32 to vector<16x1xf32>
    %16 = arith.addf %14, %15 : vector<16x1xf32>
    %17 = math.rsqrt %16 : vector<16x1xf32>
    %c0_9 = arith.constant 0 : index
    %c0_10 = arith.constant 0 : index
    %18 = vector.load %arg3[%c0_9, %c0_10] : memref<16x1xf32, #tpu.memory_space<vmem>>, vector<16x1xf32>
    %19 = arith.mulf %17, %18 : vector<16x1xf32>
    %c0_11 = arith.constant 0 : index
    %c0_12 = arith.constant 0 : index
    %20 = vector.load %arg4[%c0_11, %c0_12] : memref<16x1xf32, #tpu.memory_space<vmem>>, vector<16x1xf32>
    %21 = vector.broadcast %19 : vector<16x1xf32> to vector<16x64xf32>
    %22 = arith.mulf %9, %21 : vector<16x64xf32>
    %23 = vector.broadcast %20 : vector<16x1xf32> to vector<16x64xf32>
    %24 = arith.addf %22, %23 : vector<16x64xf32>
    %cst_13 = arith.constant 0.000000e+00 : f32
    %25 = vector.broadcast %cst_13 : f32 to vector<16x64xf32>
    %26 = arith.maximumf %24, %25 : vector<16x64xf32>
    %c0_14 = arith.constant 0 : index
    %c0_15 = arith.constant 0 : index
    %c0_16 = arith.constant 0 : index
    %27 = vector.load %arg5[%c0_14, %c0_15, %c0_16] : memref<1x16x64xf32, #tpu.memory_space<vmem>>, vector<1x16x64xf32>
    %28 = vector.shape_cast %27 : vector<1x16x64xf32> to vector<16x64xf32>
    %29 = vector.shape_cast %26 : vector<16x64xf32> to vector<1x16x64xf32>
    tpu.vector_store %arg5[%c0_14, %c0_15, %c0_16], %29 {strides = array<i32>} : memref<1x16x64xf32, #tpu.memory_space<vmem>>, vector<1x16x64xf32>,
    return
  }
  func.func @transform_0(%arg0: i32) -> (i32, i32, i32) {
    %c0_i32 = arith.constant 0 : i32
    %c0_i32_0 = arith.constant 0 : i32
    %c0_i32_1 = arith.constant 0 : i32
    return %arg0, %c0_i32, %c0_i32_0 : i32, i32, i32
  }
  func.func @transform_1(%arg0: i32) -> (i32, i32) {
    %c0_i32 = arith.constant 0 : i32
    %c0_i32_0 = arith.constant 0 : i32
    %c0_i32_1 = arith.constant 0 : i32
    return %c0_i32, %c0_i32_0 : i32, i32
  }
  func.func @transform_2(%arg0: i32) -> (i32, i32) {
    %c0_i32 = arith.constant 0 : i32
    %c0_i32_0 = arith.constant 0 : i32
    %c0_i32_1 = arith.constant 0 : i32
    return %c0_i32, %c0_i32_0 : i32, i32
  }
  func.func @transform_3(%arg0: i32) -> (i32, i32) {
    %c0_i32 = arith.constant 0 : i32
    %c0_i32_0 = arith.constant 0 : i32
    %c0_i32_1 = arith.constant 0 : i32
    return %c0_i32, %c0_i32_0 : i32, i32
  }
  func.func @transform_4(%arg0: i32) -> (i32, i32, i32) {
    %c0_i32 = arith.constant 0 : i32
    %c0_i32_0 = arith.constant 0 : i32
    %c0_i32_1 = arith.constant 0 : i32
    return %arg0, %c0_i32, %c0_i32_0 : i32, i32, i32
  }
}

module attributes {stable_mosaic.version = 11 : i64} {
  func.func @_conv_instnorm_kernel(%arg0: i32, %arg1: memref<1x256x16xbf16, #tpu.memory_space<vmem>>, %arg2: memref<32x256xbf16, #tpu.memory_space<vmem>>, %arg3: memref<32x1xf32, #tpu.memory_space<vmem>>, %arg4: memref<32x1xf32, #tpu.memory_space<vmem>>, %arg5: memref<1x32x16xf32, #tpu.memory_space<vmem>>) attributes {dimension_semantics = [#tpu.dimension_semantics<parallel>], iteration_bounds = array<i64: 2>, scalar_prefetch = 0 : i64, scratch_operands = 0 : i64, tpu.core_type = #tpu.core_type<tc>, window_params = [{transform_indices = @transform_0, window_bounds = array<i64: 1, 256, 16>}, {pipeline_mode = #tpu.pipeline_mode<synchronous>, transform_indices = @transform_1, window_bounds = array<i64: 32, 256>}, {pipeline_mode = #tpu.pipeline_mode<synchronous>, transform_indices = @transform_2, window_bounds = array<i64: 32, 1>}, {pipeline_mode = #tpu.pipeline_mode<synchronous>, transform_indices = @transform_3, window_bounds = array<i64: 32, 1>}, {transform_indices = @transform_4, window_bounds = array<i64: 1, 32, 16>}]} {
    %c0 = arith.constant 0 : index
    %c0_0 = arith.constant 0 : index
    %0 = vector.load %arg2[%c0, %c0_0] : memref<32x256xbf16, #tpu.memory_space<vmem>>, vector<32x256xbf16>
    %c0_1 = arith.constant 0 : index
    %c0_2 = arith.constant 0 : index
    %c0_3 = arith.constant 0 : index
    %1 = vector.load %arg1[%c0_1, %c0_2, %c0_3] : memref<1x256x16xbf16, #tpu.memory_space<vmem>>, vector<1x256x16xbf16>
    %2 = vector.shape_cast %1 : vector<1x256x16xbf16> to vector<256x16xbf16>
    %cst = arith.constant dense<0.000000e+00> : vector<32x16xf32>
    %3 = tpu.matmul %0, %2, %cst {dimension_numbers = #tpu.dot_dimension_numbers<[1], [0], [0], [1], [0, 0, 1, 1], [], []>} : vector<32x256xbf16>, vector<256x16xbf16>, vector<32x16xf32> -> vector<32x16xf32>
    %cst_4 = arith.constant dense<0.000000e+00> : vector<32xf32>
    %4 = vector.multi_reduction <add>, %3, %cst_4 [1] : vector<32x16xf32> to vector<32xf32>
    %5 = vector.shape_cast %4 : vector<32xf32> to vector<32x1xf32>
    %cst_5 = arith.constant 6.250000e-02 : f32
    %6 = vector.broadcast %cst_5 : f32 to vector<32x1xf32>
    %7 = arith.mulf %5, %6 : vector<32x1xf32>
    %8 = vector.broadcast %7 : vector<32x1xf32> to vector<32x16xf32>
    %9 = arith.subf %3, %8 : vector<32x16xf32>
    %10 = arith.mulf %9, %9 : vector<32x16xf32>
    %cst_6 = arith.constant dense<0.000000e+00> : vector<32xf32>
    %11 = vector.multi_reduction <add>, %10, %cst_6 [1] : vector<32x16xf32> to vector<32xf32>
    %12 = vector.shape_cast %11 : vector<32xf32> to vector<32x1xf32>
    %cst_7 = arith.constant 6.250000e-02 : f32
    %13 = vector.broadcast %cst_7 : f32 to vector<32x1xf32>
    %14 = arith.mulf %12, %13 : vector<32x1xf32>
    %cst_8 = arith.constant 9.99999974E-6 : f32
    %15 = vector.broadcast %cst_8 : f32 to vector<32x1xf32>
    %16 = arith.addf %14, %15 : vector<32x1xf32>
    %17 = math.rsqrt %16 : vector<32x1xf32>
    %c0_9 = arith.constant 0 : index
    %c0_10 = arith.constant 0 : index
    %18 = vector.load %arg3[%c0_9, %c0_10] : memref<32x1xf32, #tpu.memory_space<vmem>>, vector<32x1xf32>
    %19 = arith.mulf %17, %18 : vector<32x1xf32>
    %c0_11 = arith.constant 0 : index
    %c0_12 = arith.constant 0 : index
    %20 = vector.load %arg4[%c0_11, %c0_12] : memref<32x1xf32, #tpu.memory_space<vmem>>, vector<32x1xf32>
    %21 = vector.broadcast %19 : vector<32x1xf32> to vector<32x16xf32>
    %22 = arith.mulf %9, %21 : vector<32x16xf32>
    %23 = vector.broadcast %20 : vector<32x1xf32> to vector<32x16xf32>
    %24 = arith.addf %22, %23 : vector<32x16xf32>
    %cst_13 = arith.constant 0.000000e+00 : f32
    %25 = vector.broadcast %cst_13 : f32 to vector<32x16xf32>
    %26 = arith.maximumf %24, %25 : vector<32x16xf32>
    %c0_14 = arith.constant 0 : index
    %c0_15 = arith.constant 0 : index
    %c0_16 = arith.constant 0 : index
    %27 = vector.load %arg5[%c0_14, %c0_15, %c0_16] : memref<1x32x16xf32, #tpu.memory_space<vmem>>, vector<1x32x16xf32>
    %28 = vector.shape_cast %27 : vector<1x32x16xf32> to vector<32x16xf32>
    %29 = vector.shape_cast %26 : vector<32x16xf32> to vector<1x32x16xf32>
    tpu.vector_store %arg5[%c0_14, %c0_15, %c0_16], %29 {strides = array<i32>} : memref<1x32x16xf32, #tpu.memory_space<vmem>>, vector<1x32x16xf32>,
    return
  }
  func.func @transform_0(%arg0: i32) -> (i32, i32, i32) {
    %c0_i32 = arith.constant 0 : i32
    %c0_i32_0 = arith.constant 0 : i32
    %c0_i32_1 = arith.constant 0 : i32
    return %arg0, %c0_i32, %c0_i32_0 : i32, i32, i32
  }
  func.func @transform_1(%arg0: i32) -> (i32, i32) {
    %c0_i32 = arith.constant 0 : i32
    %c0_i32_0 = arith.constant 0 : i32
    %c0_i32_1 = arith.constant 0 : i32
    return %c0_i32, %c0_i32_0 : i32, i32
  }
  func.func @transform_2(%arg0: i32) -> (i32, i32) {
    %c0_i32 = arith.constant 0 : i32
    %c0_i32_0 = arith.constant 0 : i32
    %c0_i32_1 = arith.constant 0 : i32
    return %c0_i32, %c0_i32_0 : i32, i32
  }
  func.func @transform_3(%arg0: i32) -> (i32, i32) {
    %c0_i32 = arith.constant 0 : i32
    %c0_i32_0 = arith.constant 0 : i32
    %c0_i32_1 = arith.constant 0 : i32
    return %c0_i32, %c0_i32_0 : i32, i32
  }
  func.func @transform_4(%arg0: i32) -> (i32, i32, i32) {
    %c0_i32 = arith.constant 0 : i32
    %c0_i32_0 = arith.constant 0 : i32
    %c0_i32_1 = arith.constant 0 : i32
    return %arg0, %c0_i32, %c0_i32_0 : i32, i32, i32
  }
}

module attributes {stable_mosaic.version = 11 : i64} {
  func.func @_conv_instnorm_kernel(%arg0: i32, %arg1: memref<1x288x16xbf16, #tpu.memory_space<vmem>>, %arg2: memref<32x288xbf16, #tpu.memory_space<vmem>>, %arg3: memref<32x1xf32, #tpu.memory_space<vmem>>, %arg4: memref<32x1xf32, #tpu.memory_space<vmem>>, %arg5: memref<1x32x16xf32, #tpu.memory_space<vmem>>) attributes {dimension_semantics = [#tpu.dimension_semantics<parallel>], iteration_bounds = array<i64: 2>, scalar_prefetch = 0 : i64, scratch_operands = 0 : i64, tpu.core_type = #tpu.core_type<tc>, window_params = [{transform_indices = @transform_0, window_bounds = array<i64: 1, 288, 16>}, {pipeline_mode = #tpu.pipeline_mode<synchronous>, transform_indices = @transform_1, window_bounds = array<i64: 32, 288>}, {pipeline_mode = #tpu.pipeline_mode<synchronous>, transform_indices = @transform_2, window_bounds = array<i64: 32, 1>}, {pipeline_mode = #tpu.pipeline_mode<synchronous>, transform_indices = @transform_3, window_bounds = array<i64: 32, 1>}, {transform_indices = @transform_4, window_bounds = array<i64: 1, 32, 16>}]} {
    %c0 = arith.constant 0 : index
    %c0_0 = arith.constant 0 : index
    %0 = vector.load %arg2[%c0, %c0_0] : memref<32x288xbf16, #tpu.memory_space<vmem>>, vector<32x288xbf16>
    %c0_1 = arith.constant 0 : index
    %c0_2 = arith.constant 0 : index
    %c0_3 = arith.constant 0 : index
    %1 = vector.load %arg1[%c0_1, %c0_2, %c0_3] : memref<1x288x16xbf16, #tpu.memory_space<vmem>>, vector<1x288x16xbf16>
    %2 = vector.shape_cast %1 : vector<1x288x16xbf16> to vector<288x16xbf16>
    %cst = arith.constant dense<0.000000e+00> : vector<32x16xf32>
    %3 = tpu.matmul %0, %2, %cst {dimension_numbers = #tpu.dot_dimension_numbers<[1], [0], [0], [1], [0, 0, 1, 1], [], []>} : vector<32x288xbf16>, vector<288x16xbf16>, vector<32x16xf32> -> vector<32x16xf32>
    %cst_4 = arith.constant dense<0.000000e+00> : vector<32xf32>
    %4 = vector.multi_reduction <add>, %3, %cst_4 [1] : vector<32x16xf32> to vector<32xf32>
    %5 = vector.shape_cast %4 : vector<32xf32> to vector<32x1xf32>
    %cst_5 = arith.constant 6.250000e-02 : f32
    %6 = vector.broadcast %cst_5 : f32 to vector<32x1xf32>
    %7 = arith.mulf %5, %6 : vector<32x1xf32>
    %8 = vector.broadcast %7 : vector<32x1xf32> to vector<32x16xf32>
    %9 = arith.subf %3, %8 : vector<32x16xf32>
    %10 = arith.mulf %9, %9 : vector<32x16xf32>
    %cst_6 = arith.constant dense<0.000000e+00> : vector<32xf32>
    %11 = vector.multi_reduction <add>, %10, %cst_6 [1] : vector<32x16xf32> to vector<32xf32>
    %12 = vector.shape_cast %11 : vector<32xf32> to vector<32x1xf32>
    %cst_7 = arith.constant 6.250000e-02 : f32
    %13 = vector.broadcast %cst_7 : f32 to vector<32x1xf32>
    %14 = arith.mulf %12, %13 : vector<32x1xf32>
    %cst_8 = arith.constant 9.99999974E-6 : f32
    %15 = vector.broadcast %cst_8 : f32 to vector<32x1xf32>
    %16 = arith.addf %14, %15 : vector<32x1xf32>
    %17 = math.rsqrt %16 : vector<32x1xf32>
    %c0_9 = arith.constant 0 : index
    %c0_10 = arith.constant 0 : index
    %18 = vector.load %arg3[%c0_9, %c0_10] : memref<32x1xf32, #tpu.memory_space<vmem>>, vector<32x1xf32>
    %19 = arith.mulf %17, %18 : vector<32x1xf32>
    %c0_11 = arith.constant 0 : index
    %c0_12 = arith.constant 0 : index
    %20 = vector.load %arg4[%c0_11, %c0_12] : memref<32x1xf32, #tpu.memory_space<vmem>>, vector<32x1xf32>
    %21 = vector.broadcast %19 : vector<32x1xf32> to vector<32x16xf32>
    %22 = arith.mulf %9, %21 : vector<32x16xf32>
    %23 = vector.broadcast %20 : vector<32x1xf32> to vector<32x16xf32>
    %24 = arith.addf %22, %23 : vector<32x16xf32>
    %cst_13 = arith.constant 0.000000e+00 : f32
    %25 = vector.broadcast %cst_13 : f32 to vector<32x16xf32>
    %26 = arith.maximumf %24, %25 : vector<32x16xf32>
    %c0_14 = arith.constant 0 : index
    %c0_15 = arith.constant 0 : index
    %c0_16 = arith.constant 0 : index
    %27 = vector.load %arg5[%c0_14, %c0_15, %c0_16] : memref<1x32x16xf32, #tpu.memory_space<vmem>>, vector<1x32x16xf32>
    %28 = vector.shape_cast %27 : vector<1x32x16xf32> to vector<32x16xf32>
    %29 = vector.shape_cast %26 : vector<32x16xf32> to vector<1x32x16xf32>
    tpu.vector_store %arg5[%c0_14, %c0_15, %c0_16], %29 {strides = array<i32>} : memref<1x32x16xf32, #tpu.memory_space<vmem>>, vector<1x32x16xf32>,
    return
  }
  func.func @transform_0(%arg0: i32) -> (i32, i32, i32) {
    %c0_i32 = arith.constant 0 : i32
    %c0_i32_0 = arith.constant 0 : i32
    %c0_i32_1 = arith.constant 0 : i32
    return %arg0, %c0_i32, %c0_i32_0 : i32, i32, i32
  }
  func.func @transform_1(%arg0: i32) -> (i32, i32) {
    %c0_i32 = arith.constant 0 : i32
    %c0_i32_0 = arith.constant 0 : i32
    %c0_i32_1 = arith.constant 0 : i32
    return %c0_i32, %c0_i32_0 : i32, i32
  }
  func.func @transform_2(%arg0: i32) -> (i32, i32) {
    %c0_i32 = arith.constant 0 : i32
    %c0_i32_0 = arith.constant 0 : i32
    %c0_i32_1 = arith.constant 0 : i32
    return %c0_i32, %c0_i32_0 : i32, i32
  }
  func.func @transform_3(%arg0: i32) -> (i32, i32) {
    %c0_i32 = arith.constant 0 : i32
    %c0_i32_0 = arith.constant 0 : i32
    %c0_i32_1 = arith.constant 0 : i32
    return %c0_i32, %c0_i32_0 : i32, i32
  }
  func.func @transform_4(%arg0: i32) -> (i32, i32, i32) {
    %c0_i32 = arith.constant 0 : i32
    %c0_i32_0 = arith.constant 0 : i32
    %c0_i32_1 = arith.constant 0 : i32
    return %arg0, %c0_i32, %c0_i32_0 : i32, i32, i32
  }
}

module attributes {stable_mosaic.version = 11 : i64} {
  func.func @_conv_instnorm_kernel(%arg0: i32, %arg1: memref<1x288x16xbf16, #tpu.memory_space<vmem>>, %arg2: memref<32x288xbf16, #tpu.memory_space<vmem>>, %arg3: memref<32x1xf32, #tpu.memory_space<vmem>>, %arg4: memref<32x1xf32, #tpu.memory_space<vmem>>, %arg5: memref<1x32x16xf32, #tpu.memory_space<vmem>>, %arg6: memref<1x32x16xf32, #tpu.memory_space<vmem>>) attributes {dimension_semantics = [#tpu.dimension_semantics<parallel>], iteration_bounds = array<i64: 2>, scalar_prefetch = 0 : i64, scratch_operands = 0 : i64, tpu.core_type = #tpu.core_type<tc>, window_params = [{transform_indices = @transform_0, window_bounds = array<i64: 1, 288, 16>}, {pipeline_mode = #tpu.pipeline_mode<synchronous>, transform_indices = @transform_1, window_bounds = array<i64: 32, 288>}, {pipeline_mode = #tpu.pipeline_mode<synchronous>, transform_indices = @transform_2, window_bounds = array<i64: 32, 1>}, {pipeline_mode = #tpu.pipeline_mode<synchronous>, transform_indices = @transform_3, window_bounds = array<i64: 32, 1>}, {transform_indices = @transform_4, window_bounds = array<i64: 1, 32, 16>}, {transform_indices = @transform_5, window_bounds = array<i64: 1, 32, 16>}]} {
    %c0 = arith.constant 0 : index
    %c0_0 = arith.constant 0 : index
    %0 = vector.load %arg2[%c0, %c0_0] : memref<32x288xbf16, #tpu.memory_space<vmem>>, vector<32x288xbf16>
    %c0_1 = arith.constant 0 : index
    %c0_2 = arith.constant 0 : index
    %c0_3 = arith.constant 0 : index
    %1 = vector.load %arg1[%c0_1, %c0_2, %c0_3] : memref<1x288x16xbf16, #tpu.memory_space<vmem>>, vector<1x288x16xbf16>
    %2 = vector.shape_cast %1 : vector<1x288x16xbf16> to vector<288x16xbf16>
    %cst = arith.constant dense<0.000000e+00> : vector<32x16xf32>
    %3 = tpu.matmul %0, %2, %cst {dimension_numbers = #tpu.dot_dimension_numbers<[1], [0], [0], [1], [0, 0, 1, 1], [], []>} : vector<32x288xbf16>, vector<288x16xbf16>, vector<32x16xf32> -> vector<32x16xf32>
    %cst_4 = arith.constant dense<0.000000e+00> : vector<32xf32>
    %4 = vector.multi_reduction <add>, %3, %cst_4 [1] : vector<32x16xf32> to vector<32xf32>
    %5 = vector.shape_cast %4 : vector<32xf32> to vector<32x1xf32>
    %cst_5 = arith.constant 6.250000e-02 : f32
    %6 = vector.broadcast %cst_5 : f32 to vector<32x1xf32>
    %7 = arith.mulf %5, %6 : vector<32x1xf32>
    %8 = vector.broadcast %7 : vector<32x1xf32> to vector<32x16xf32>
    %9 = arith.subf %3, %8 : vector<32x16xf32>
    %10 = arith.mulf %9, %9 : vector<32x16xf32>
    %cst_6 = arith.constant dense<0.000000e+00> : vector<32xf32>
    %11 = vector.multi_reduction <add>, %10, %cst_6 [1] : vector<32x16xf32> to vector<32xf32>
    %12 = vector.shape_cast %11 : vector<32xf32> to vector<32x1xf32>
    %cst_7 = arith.constant 6.250000e-02 : f32
    %13 = vector.broadcast %cst_7 : f32 to vector<32x1xf32>
    %14 = arith.mulf %12, %13 : vector<32x1xf32>
    %cst_8 = arith.constant 9.99999974E-6 : f32
    %15 = vector.broadcast %cst_8 : f32 to vector<32x1xf32>
    %16 = arith.addf %14, %15 : vector<32x1xf32>
    %17 = math.rsqrt %16 : vector<32x1xf32>
    %c0_9 = arith.constant 0 : index
    %c0_10 = arith.constant 0 : index
    %18 = vector.load %arg3[%c0_9, %c0_10] : memref<32x1xf32, #tpu.memory_space<vmem>>, vector<32x1xf32>
    %19 = arith.mulf %17, %18 : vector<32x1xf32>
    %c0_11 = arith.constant 0 : index
    %c0_12 = arith.constant 0 : index
    %20 = vector.load %arg4[%c0_11, %c0_12] : memref<32x1xf32, #tpu.memory_space<vmem>>, vector<32x1xf32>
    %21 = vector.broadcast %19 : vector<32x1xf32> to vector<32x16xf32>
    %22 = arith.mulf %9, %21 : vector<32x16xf32>
    %23 = vector.broadcast %20 : vector<32x1xf32> to vector<32x16xf32>
    %24 = arith.addf %22, %23 : vector<32x16xf32>
    %c0_13 = arith.constant 0 : index
    %c0_14 = arith.constant 0 : index
    %c0_15 = arith.constant 0 : index
    %25 = vector.load %arg5[%c0_13, %c0_14, %c0_15] : memref<1x32x16xf32, #tpu.memory_space<vmem>>, vector<1x32x16xf32>
    %26 = vector.shape_cast %25 : vector<1x32x16xf32> to vector<32x16xf32>
    %27 = arith.addf %24, %26 : vector<32x16xf32>
    %c0_16 = arith.constant 0 : index
    %c0_17 = arith.constant 0 : index
    %c0_18 = arith.constant 0 : index
    %28 = vector.load %arg6[%c0_16, %c0_17, %c0_18] : memref<1x32x16xf32, #tpu.memory_space<vmem>>, vector<1x32x16xf32>
    %29 = vector.shape_cast %28 : vector<1x32x16xf32> to vector<32x16xf32>
    %30 = vector.shape_cast %27 : vector<32x16xf32> to vector<1x32x16xf32>
    tpu.vector_store %arg6[%c0_16, %c0_17, %c0_18], %30 {strides = array<i32>} : memref<1x32x16xf32, #tpu.memory_space<vmem>>, vector<1x32x16xf32>,
    return
  }
  func.func @transform_0(%arg0: i32) -> (i32, i32, i32) {
    %c0_i32 = arith.constant 0 : i32
    %c0_i32_0 = arith.constant 0 : i32
    %c0_i32_1 = arith.constant 0 : i32
    return %arg0, %c0_i32, %c0_i32_0 : i32, i32, i32
  }
  func.func @transform_1(%arg0: i32) -> (i32, i32) {
    %c0_i32 = arith.constant 0 : i32
    %c0_i32_0 = arith.constant 0 : i32
    %c0_i32_1 = arith.constant 0 : i32
    return %c0_i32, %c0_i32_0 : i32, i32
  }
  func.func @transform_2(%arg0: i32) -> (i32, i32) {
    %c0_i32 = arith.constant 0 : i32
    %c0_i32_0 = arith.constant 0 : i32
    %c0_i32_1 = arith.constant 0 : i32
    return %c0_i32, %c0_i32_0 : i32, i32
  }
  func.func @transform_3(%arg0: i32) -> (i32, i32) {
    %c0_i32 = arith.constant 0 : i32
    %c0_i32_0 = arith.constant 0 : i32
    %c0_i32_1 = arith.constant 0 : i32
    return %c0_i32, %c0_i32_0 : i32, i32
  }
  func.func @transform_4(%arg0: i32) -> (i32, i32, i32) {
    %c0_i32 = arith.constant 0 : i32
    %c0_i32_0 = arith.constant 0 : i32
    %c0_i32_1 = arith.constant 0 : i32
    return %arg0, %c0_i32, %c0_i32_0 : i32, i32, i32
  }
  func.func @transform_5(%arg0: i32) -> (i32, i32, i32) {
    %c0_i32 = arith.constant 0 : i32
    %c0_i32_0 = arith.constant 0 : i32
    %c0_i32_1 = arith.constant 0 : i32
    return %arg0, %c0_i32, %c0_i32_0 : i32, i32, i32
  }
}

module attributes {stable_mosaic.version = 11 : i64} {
  func.func @_conv_instnorm_kernel(%arg0: i32, %arg1: memref<1x288x16xbf16, #tpu.memory_space<vmem>>, %arg2: memref<64x288xbf16, #tpu.memory_space<vmem>>, %arg3: memref<16x1xf32, #tpu.memory_space<vmem>>, %arg4: memref<16x1xf32, #tpu.memory_space<vmem>>, %arg5: memref<1x64x16xf32, #tpu.memory_space<vmem>>) attributes {dimension_semantics = [#tpu.dimension_semantics<parallel>], iteration_bounds = array<i64: 2>, scalar_prefetch = 0 : i64, scratch_operands = 0 : i64, tpu.core_type = #tpu.core_type<tc>, window_params = [{transform_indices = @transform_0, window_bounds = array<i64: 1, 288, 16>}, {pipeline_mode = #tpu.pipeline_mode<synchronous>, transform_indices = @transform_1, window_bounds = array<i64: 64, 288>}, {pipeline_mode = #tpu.pipeline_mode<synchronous>, transform_indices = @transform_2, window_bounds = array<i64: 16, 1>}, {pipeline_mode = #tpu.pipeline_mode<synchronous>, transform_indices = @transform_3, window_bounds = array<i64: 16, 1>}, {transform_indices = @transform_4, window_bounds = array<i64: 1, 64, 16>}]} {
    %c0 = arith.constant 0 : index
    %c0_0 = arith.constant 0 : index
    %0 = vector.load %arg2[%c0, %c0_0] : memref<64x288xbf16, #tpu.memory_space<vmem>>, vector<64x288xbf16>
    %c0_1 = arith.constant 0 : index
    %c0_2 = arith.constant 0 : index
    %c0_3 = arith.constant 0 : index
    %1 = vector.load %arg1[%c0_1, %c0_2, %c0_3] : memref<1x288x16xbf16, #tpu.memory_space<vmem>>, vector<1x288x16xbf16>
    %2 = vector.shape_cast %1 : vector<1x288x16xbf16> to vector<288x16xbf16>
    %cst = arith.constant dense<0.000000e+00> : vector<64x16xf32>
    %3 = tpu.matmul %0, %2, %cst {dimension_numbers = #tpu.dot_dimension_numbers<[1], [0], [0], [1], [0, 0, 1, 1], [], []>} : vector<64x288xbf16>, vector<288x16xbf16>, vector<64x16xf32> -> vector<64x16xf32>
    %4 = vector.extract_strided_slice %3 {offsets = [0, 0], sizes = [16, 16], strides = [1, 1]} : vector<64x16xf32> to vector<16x16xf32>
    %5 = vector.extract_strided_slice %3 {offsets = [16, 0], sizes = [16, 16], strides = [1, 1]} : vector<64x16xf32> to vector<16x16xf32>
    %6 = vector.extract_strided_slice %3 {offsets = [32, 0], sizes = [16, 16], strides = [1, 1]} : vector<64x16xf32> to vector<16x16xf32>
    %7 = vector.extract_strided_slice %3 {offsets = [48, 0], sizes = [16, 16], strides = [1, 1]} : vector<64x16xf32> to vector<16x16xf32>
    %8 = arith.addf %4, %5 : vector<16x16xf32>
    %9 = arith.addf %8, %6 : vector<16x16xf32>
    %10 = arith.addf %9, %7 : vector<16x16xf32>
    %cst_4 = arith.constant dense<0.000000e+00> : vector<16xf32>
    %11 = vector.multi_reduction <add>, %10, %cst_4 [1] : vector<16x16xf32> to vector<16xf32>
    %12 = vector.shape_cast %11 : vector<16xf32> to vector<16x1xf32>
    %cst_5 = arith.constant 1.562500e-02 : f32
    %13 = vector.broadcast %cst_5 : f32 to vector<16x1xf32>
    %14 = arith.mulf %12, %13 : vector<16x1xf32>
    %15 = vector.broadcast %14 : vector<16x1xf32> to vector<16x16xf32>
    %16 = arith.subf %4, %15 : vector<16x16xf32>
    %17 = vector.broadcast %14 : vector<16x1xf32> to vector<16x16xf32>
    %18 = arith.subf %5, %17 : vector<16x16xf32>
    %19 = vector.broadcast %14 : vector<16x1xf32> to vector<16x16xf32>
    %20 = arith.subf %6, %19 : vector<16x16xf32>
    %21 = vector.broadcast %14 : vector<16x1xf32> to vector<16x16xf32>
    %22 = arith.subf %7, %21 : vector<16x16xf32>
    %23 = arith.mulf %16, %16 : vector<16x16xf32>
    %24 = arith.mulf %18, %18 : vector<16x16xf32>
    %25 = arith.addf %23, %24 : vector<16x16xf32>
    %26 = arith.mulf %20, %20 : vector<16x16xf32>
    %27 = arith.addf %25, %26 : vector<16x16xf32>
    %28 = arith.mulf %22, %22 : vector<16x16xf32>
    %29 = arith.addf %27, %28 : vector<16x16xf32>
    %cst_6 = arith.constant dense<0.000000e+00> : vector<16xf32>
    %30 = vector.multi_reduction <add>, %29, %cst_6 [1] : vector<16x16xf32> to vector<16xf32>
    %31 = vector.shape_cast %30 : vector<16xf32> to vector<16x1xf32>
    %cst_7 = arith.constant 1.562500e-02 : f32
    %32 = vector.broadcast %cst_7 : f32 to vector<16x1xf32>
    %33 = arith.mulf %31, %32 : vector<16x1xf32>
    %cst_8 = arith.constant 9.99999974E-6 : f32
    %34 = vector.broadcast %cst_8 : f32 to vector<16x1xf32>
    %35 = arith.addf %33, %34 : vector<16x1xf32>
    %36 = math.rsqrt %35 : vector<16x1xf32>
    %c0_9 = arith.constant 0 : index
    %c0_10 = arith.constant 0 : index
    %37 = vector.load %arg3[%c0_9, %c0_10] : memref<16x1xf32, #tpu.memory_space<vmem>>, vector<16x1xf32>
    %38 = arith.mulf %36, %37 : vector<16x1xf32>
    %c0_11 = arith.constant 0 : index
    %c0_12 = arith.constant 0 : index
    %39 = vector.load %arg4[%c0_11, %c0_12] : memref<16x1xf32, #tpu.memory_space<vmem>>, vector<16x1xf32>
    %40 = vector.broadcast %38 : vector<16x1xf32> to vector<16x16xf32>
    %41 = arith.mulf %16, %40 : vector<16x16xf32>
    %42 = vector.broadcast %39 : vector<16x1xf32> to vector<16x16xf32>
    %43 = arith.addf %41, %42 : vector<16x16xf32>
    %cst_13 = arith.constant 0.000000e+00 : f32
    %44 = vector.broadcast %cst_13 : f32 to vector<16x16xf32>
    %45 = arith.maximumf %43, %44 : vector<16x16xf32>
    %c0_14 = arith.constant 0 : index
    %c0_15 = arith.constant 0 : index
    %c0_16 = arith.constant 0 : index
    %46 = vector.load %arg5[%c0_14, %c0_15, %c0_16] : memref<1x64x16xf32, #tpu.memory_space<vmem>>, vector<1x16x16xf32>
    %47 = vector.shape_cast %46 : vector<1x16x16xf32> to vector<16x16xf32>
    %48 = vector.shape_cast %45 : vector<16x16xf32> to vector<1x16x16xf32>
    tpu.vector_store %arg5[%c0_14, %c0_15, %c0_16], %48 {strides = array<i32>} : memref<1x64x16xf32, #tpu.memory_space<vmem>>, vector<1x16x16xf32>,
    %49 = vector.broadcast %38 : vector<16x1xf32> to vector<16x16xf32>
    %50 = arith.mulf %18, %49 : vector<16x16xf32>
    %51 = vector.broadcast %39 : vector<16x1xf32> to vector<16x16xf32>
    %52 = arith.addf %50, %51 : vector<16x16xf32>
    %cst_17 = arith.constant 0.000000e+00 : f32
    %53 = vector.broadcast %cst_17 : f32 to vector<16x16xf32>
    %54 = arith.maximumf %52, %53 : vector<16x16xf32>
    %c0_18 = arith.constant 0 : index
    %c16 = arith.constant 16 : index
    %c0_19 = arith.constant 0 : index
    %55 = vector.load %arg5[%c0_18, %c16, %c0_19] : memref<1x64x16xf32, #tpu.memory_space<vmem>>, vector<1x16x16xf32>
    %56 = vector.shape_cast %55 : vector<1x16x16xf32> to vector<16x16xf32>
    %57 = vector.shape_cast %54 : vector<16x16xf32> to vector<1x16x16xf32>
    tpu.vector_store %arg5[%c0_18, %c16, %c0_19], %57 {strides = array<i32>} : memref<1x64x16xf32, #tpu.memory_space<vmem>>, vector<1x16x16xf32>,
    %58 = vector.broadcast %38 : vector<16x1xf32> to vector<16x16xf32>
    %59 = arith.mulf %20, %58 : vector<16x16xf32>
    %60 = vector.broadcast %39 : vector<16x1xf32> to vector<16x16xf32>
    %61 = arith.addf %59, %60 : vector<16x16xf32>
    %cst_20 = arith.constant 0.000000e+00 : f32
    %62 = vector.broadcast %cst_20 : f32 to vector<16x16xf32>
    %63 = arith.maximumf %61, %62 : vector<16x16xf32>
    %c0_21 = arith.constant 0 : index
    %c32 = arith.constant 32 : index
    %c0_22 = arith.constant 0 : index
    %64 = vector.load %arg5[%c0_21, %c32, %c0_22] : memref<1x64x16xf32, #tpu.memory_space<vmem>>, vector<1x16x16xf32>
    %65 = vector.shape_cast %64 : vector<1x16x16xf32> to vector<16x16xf32>
    %66 = vector.shape_cast %63 : vector<16x16xf32> to vector<1x16x16xf32>
    tpu.vector_store %arg5[%c0_21, %c32, %c0_22], %66 {strides = array<i32>} : memref<1x64x16xf32, #tpu.memory_space<vmem>>, vector<1x16x16xf32>,
    %67 = vector.broadcast %38 : vector<16x1xf32> to vector<16x16xf32>
    %68 = arith.mulf %22, %67 : vector<16x16xf32>
    %69 = vector.broadcast %39 : vector<16x1xf32> to vector<16x16xf32>
    %70 = arith.addf %68, %69 : vector<16x16xf32>
    %cst_23 = arith.constant 0.000000e+00 : f32
    %71 = vector.broadcast %cst_23 : f32 to vector<16x16xf32>
    %72 = arith.maximumf %70, %71 : vector<16x16xf32>
    %c0_24 = arith.constant 0 : index
    %c48 = arith.constant 48 : index
    %c0_25 = arith.constant 0 : index
    %73 = vector.load %arg5[%c0_24, %c48, %c0_25] : memref<1x64x16xf32, #tpu.memory_space<vmem>>, vector<1x16x16xf32>
    %74 = vector.shape_cast %73 : vector<1x16x16xf32> to vector<16x16xf32>
    %75 = vector.shape_cast %72 : vector<16x16xf32> to vector<1x16x16xf32>
    tpu.vector_store %arg5[%c0_24, %c48, %c0_25], %75 {strides = array<i32>} : memref<1x64x16xf32, #tpu.memory_space<vmem>>, vector<1x16x16xf32>,
    return
  }
  func.func @transform_0(%arg0: i32) -> (i32, i32, i32) {
    %c0_i32 = arith.constant 0 : i32
    %c0_i32_0 = arith.constant 0 : i32
    %c0_i32_1 = arith.constant 0 : i32
    return %arg0, %c0_i32, %c0_i32_0 : i32, i32, i32
  }
  func.func @transform_1(%arg0: i32) -> (i32, i32) {
    %c0_i32 = arith.constant 0 : i32
    %c0_i32_0 = arith.constant 0 : i32
    %c0_i32_1 = arith.constant 0 : i32
    return %c0_i32, %c0_i32_0 : i32, i32
  }
  func.func @transform_2(%arg0: i32) -> (i32, i32) {
    %c0_i32 = arith.constant 0 : i32
    %c0_i32_0 = arith.constant 0 : i32
    %c0_i32_1 = arith.constant 0 : i32
    return %c0_i32, %c0_i32_0 : i32, i32
  }
  func.func @transform_3(%arg0: i32) -> (i32, i32) {
    %c0_i32 = arith.constant 0 : i32
    %c0_i32_0 = arith.constant 0 : i32
    %c0_i32_1 = arith.constant 0 : i32
    return %c0_i32, %c0_i32_0 : i32, i32
  }
  func.func @transform_4(%arg0: i32) -> (i32, i32, i32) {
    %c0_i32 = arith.constant 0 : i32
    %c0_i32_0 = arith.constant 0 : i32
    %c0_i32_1 = arith.constant 0 : i32
    return %arg0, %c0_i32, %c0_i32_0 : i32, i32, i32
  }
}

module attributes {stable_mosaic.version = 11 : i64} {
  func.func @_conv_instnorm_kernel(%arg0: i32, %arg1: memref<1x144x64xbf16, #tpu.memory_space<vmem>>, %arg2: memref<32x144xbf16, #tpu.memory_space<vmem>>, %arg3: memref<8x1xf32, #tpu.memory_space<vmem>>, %arg4: memref<8x1xf32, #tpu.memory_space<vmem>>, %arg5: memref<1x32x64xf32, #tpu.memory_space<vmem>>) attributes {dimension_semantics = [#tpu.dimension_semantics<parallel>], iteration_bounds = array<i64: 2>, scalar_prefetch = 0 : i64, scratch_operands = 0 : i64, tpu.core_type = #tpu.core_type<tc>, window_params = [{transform_indices = @transform_0, window_bounds = array<i64: 1, 144, 64>}, {pipeline_mode = #tpu.pipeline_mode<synchronous>, transform_indices = @transform_1, window_bounds = array<i64: 32, 144>}, {pipeline_mode = #tpu.pipeline_mode<synchronous>, transform_indices = @transform_2, window_bounds = array<i64: 8, 1>}, {pipeline_mode = #tpu.pipeline_mode<synchronous>, transform_indices = @transform_3, window_bounds = array<i64: 8, 1>}, {transform_indices = @transform_4, window_bounds = array<i64: 1, 32, 64>}]} {
    %c0 = arith.constant 0 : index
    %c0_0 = arith.constant 0 : index
    %0 = vector.load %arg2[%c0, %c0_0] : memref<32x144xbf16, #tpu.memory_space<vmem>>, vector<32x144xbf16>
    %c0_1 = arith.constant 0 : index
    %c0_2 = arith.constant 0 : index
    %c0_3 = arith.constant 0 : index
    %1 = vector.load %arg1[%c0_1, %c0_2, %c0_3] : memref<1x144x64xbf16, #tpu.memory_space<vmem>>, vector<1x144x64xbf16>
    %2 = vector.shape_cast %1 : vector<1x144x64xbf16> to vector<144x64xbf16>
    %cst = arith.constant dense<0.000000e+00> : vector<32x64xf32>
    %3 = tpu.matmul %0, %2, %cst {dimension_numbers = #tpu.dot_dimension_numbers<[1], [0], [0], [1], [0, 0, 1, 1], [], []>} : vector<32x144xbf16>, vector<144x64xbf16>, vector<32x64xf32> -> vector<32x64xf32>
    %4 = vector.extract_strided_slice %3 {offsets = [0, 0], sizes = [8, 64], strides = [1, 1]} : vector<32x64xf32> to vector<8x64xf32>
    %5 = vector.extract_strided_slice %3 {offsets = [8, 0], sizes = [8, 64], strides = [1, 1]} : vector<32x64xf32> to vector<8x64xf32>
    %6 = vector.extract_strided_slice %3 {offsets = [16, 0], sizes = [8, 64], strides = [1, 1]} : vector<32x64xf32> to vector<8x64xf32>
    %7 = vector.extract_strided_slice %3 {offsets = [24, 0], sizes = [8, 64], strides = [1, 1]} : vector<32x64xf32> to vector<8x64xf32>
    %8 = arith.addf %4, %5 : vector<8x64xf32>
    %9 = arith.addf %8, %6 : vector<8x64xf32>
    %10 = arith.addf %9, %7 : vector<8x64xf32>
    %cst_4 = arith.constant dense<0.000000e+00> : vector<8xf32>
    %11 = vector.multi_reduction <add>, %10, %cst_4 [1] : vector<8x64xf32> to vector<8xf32>
    %12 = vector.shape_cast %11 : vector<8xf32> to vector<8x1xf32>
    %cst_5 = arith.constant 3.906250e-03 : f32
    %13 = vector.broadcast %cst_5 : f32 to vector<8x1xf32>
    %14 = arith.mulf %12, %13 : vector<8x1xf32>
    %15 = vector.broadcast %14 : vector<8x1xf32> to vector<8x64xf32>
    %16 = arith.subf %4, %15 : vector<8x64xf32>
    %17 = vector.broadcast %14 : vector<8x1xf32> to vector<8x64xf32>
    %18 = arith.subf %5, %17 : vector<8x64xf32>
    %19 = vector.broadcast %14 : vector<8x1xf32> to vector<8x64xf32>
    %20 = arith.subf %6, %19 : vector<8x64xf32>
    %21 = vector.broadcast %14 : vector<8x1xf32> to vector<8x64xf32>
    %22 = arith.subf %7, %21 : vector<8x64xf32>
    %23 = arith.mulf %16, %16 : vector<8x64xf32>
    %24 = arith.mulf %18, %18 : vector<8x64xf32>
    %25 = arith.addf %23, %24 : vector<8x64xf32>
    %26 = arith.mulf %20, %20 : vector<8x64xf32>
    %27 = arith.addf %25, %26 : vector<8x64xf32>
    %28 = arith.mulf %22, %22 : vector<8x64xf32>
    %29 = arith.addf %27, %28 : vector<8x64xf32>
    %cst_6 = arith.constant dense<0.000000e+00> : vector<8xf32>
    %30 = vector.multi_reduction <add>, %29, %cst_6 [1] : vector<8x64xf32> to vector<8xf32>
    %31 = vector.shape_cast %30 : vector<8xf32> to vector<8x1xf32>
    %cst_7 = arith.constant 3.906250e-03 : f32
    %32 = vector.broadcast %cst_7 : f32 to vector<8x1xf32>
    %33 = arith.mulf %31, %32 : vector<8x1xf32>
    %cst_8 = arith.constant 9.99999974E-6 : f32
    %34 = vector.broadcast %cst_8 : f32 to vector<8x1xf32>
    %35 = arith.addf %33, %34 : vector<8x1xf32>
    %36 = math.rsqrt %35 : vector<8x1xf32>
    %c0_9 = arith.constant 0 : index
    %c0_10 = arith.constant 0 : index
    %37 = vector.load %arg3[%c0_9, %c0_10] : memref<8x1xf32, #tpu.memory_space<vmem>>, vector<8x1xf32>
    %38 = arith.mulf %36, %37 : vector<8x1xf32>
    %c0_11 = arith.constant 0 : index
    %c0_12 = arith.constant 0 : index
    %39 = vector.load %arg4[%c0_11, %c0_12] : memref<8x1xf32, #tpu.memory_space<vmem>>, vector<8x1xf32>
    %40 = vector.broadcast %38 : vector<8x1xf32> to vector<8x64xf32>
    %41 = arith.mulf %16, %40 : vector<8x64xf32>
    %42 = vector.broadcast %39 : vector<8x1xf32> to vector<8x64xf32>
    %43 = arith.addf %41, %42 : vector<8x64xf32>
    %cst_13 = arith.constant 0.000000e+00 : f32
    %44 = vector.broadcast %cst_13 : f32 to vector<8x64xf32>
    %45 = arith.maximumf %43, %44 : vector<8x64xf32>
    %c0_14 = arith.constant 0 : index
    %c0_15 = arith.constant 0 : index
    %c0_16 = arith.constant 0 : index
    %46 = vector.load %arg5[%c0_14, %c0_15, %c0_16] : memref<1x32x64xf32, #tpu.memory_space<vmem>>, vector<1x8x64xf32>
    %47 = vector.shape_cast %46 : vector<1x8x64xf32> to vector<8x64xf32>
    %48 = vector.shape_cast %45 : vector<8x64xf32> to vector<1x8x64xf32>
    tpu.vector_store %arg5[%c0_14, %c0_15, %c0_16], %48 {strides = array<i32>} : memref<1x32x64xf32, #tpu.memory_space<vmem>>, vector<1x8x64xf32>,
    %49 = vector.broadcast %38 : vector<8x1xf32> to vector<8x64xf32>
    %50 = arith.mulf %18, %49 : vector<8x64xf32>
    %51 = vector.broadcast %39 : vector<8x1xf32> to vector<8x64xf32>
    %52 = arith.addf %50, %51 : vector<8x64xf32>
    %cst_17 = arith.constant 0.000000e+00 : f32
    %53 = vector.broadcast %cst_17 : f32 to vector<8x64xf32>
    %54 = arith.maximumf %52, %53 : vector<8x64xf32>
    %c0_18 = arith.constant 0 : index
    %c8 = arith.constant 8 : index
    %c0_19 = arith.constant 0 : index
    %55 = vector.load %arg5[%c0_18, %c8, %c0_19] : memref<1x32x64xf32, #tpu.memory_space<vmem>>, vector<1x8x64xf32>
    %56 = vector.shape_cast %55 : vector<1x8x64xf32> to vector<8x64xf32>
    %57 = vector.shape_cast %54 : vector<8x64xf32> to vector<1x8x64xf32>
    tpu.vector_store %arg5[%c0_18, %c8, %c0_19], %57 {strides = array<i32>} : memref<1x32x64xf32, #tpu.memory_space<vmem>>, vector<1x8x64xf32>,
    %58 = vector.broadcast %38 : vector<8x1xf32> to vector<8x64xf32>
    %59 = arith.mulf %20, %58 : vector<8x64xf32>
    %60 = vector.broadcast %39 : vector<8x1xf32> to vector<8x64xf32>
    %61 = arith.addf %59, %60 : vector<8x64xf32>
    %cst_20 = arith.constant 0.000000e+00 : f32
    %62 = vector.broadcast %cst_20 : f32 to vector<8x64xf32>
    %63 = arith.maximumf %61, %62 : vector<8x64xf32>
    %c0_21 = arith.constant 0 : index
    %c16 = arith.constant 16 : index
    %c0_22 = arith.constant 0 : index
    %64 = vector.load %arg5[%c0_21, %c16, %c0_22] : memref<1x32x64xf32, #tpu.memory_space<vmem>>, vector<1x8x64xf32>
    %65 = vector.shape_cast %64 : vector<1x8x64xf32> to vector<8x64xf32>
    %66 = vector.shape_cast %63 : vector<8x64xf32> to vector<1x8x64xf32>
    tpu.vector_store %arg5[%c0_21, %c16, %c0_22], %66 {strides = array<i32>} : memref<1x32x64xf32, #tpu.memory_space<vmem>>, vector<1x8x64xf32>,
    %67 = vector.broadcast %38 : vector<8x1xf32> to vector<8x64xf32>
    %68 = arith.mulf %22, %67 : vector<8x64xf32>
    %69 = vector.broadcast %39 : vector<8x1xf32> to vector<8x64xf32>
    %70 = arith.addf %68, %69 : vector<8x64xf32>
    %cst_23 = arith.constant 0.000000e+00 : f32
    %71 = vector.broadcast %cst_23 : f32 to vector<8x64xf32>
    %72 = arith.maximumf %70, %71 : vector<8x64xf32>
    %c0_24 = arith.constant 0 : index
    %c24 = arith.constant 24 : index
    %c0_25 = arith.constant 0 : index
    %73 = vector.load %arg5[%c0_24, %c24, %c0_25] : memref<1x32x64xf32, #tpu.memory_space<vmem>>, vector<1x8x64xf32>
    %74 = vector.shape_cast %73 : vector<1x8x64xf32> to vector<8x64xf32>
    %75 = vector.shape_cast %72 : vector<8x64xf32> to vector<1x8x64xf32>
    tpu.vector_store %arg5[%c0_24, %c24, %c0_25], %75 {strides = array<i32>} : memref<1x32x64xf32, #tpu.memory_space<vmem>>, vector<1x8x64xf32>,
    return
  }
  func.func @transform_0(%arg0: i32) -> (i32, i32, i32) {
    %c0_i32 = arith.constant 0 : i32
    %c0_i32_0 = arith.constant 0 : i32
    %c0_i32_1 = arith.constant 0 : i32
    return %arg0, %c0_i32, %c0_i32_0 : i32, i32, i32
  }
  func.func @transform_1(%arg0: i32) -> (i32, i32) {
    %c0_i32 = arith.constant 0 : i32
    %c0_i32_0 = arith.constant 0 : i32
    %c0_i32_1 = arith.constant 0 : i32
    return %c0_i32, %c0_i32_0 : i32, i32
  }
  func.func @transform_2(%arg0: i32) -> (i32, i32) {
    %c0_i32 = arith.constant 0 : i32
    %c0_i32_0 = arith.constant 0 : i32
    %c0_i32_1 = arith.constant 0 : i32
    return %c0_i32, %c0_i32_0 : i32, i32
  }
  func.func @transform_3(%arg0: i32) -> (i32, i32) {
    %c0_i32 = arith.constant 0 : i32
    %c0_i32_0 = arith.constant 0 : i32
    %c0_i32_1 = arith.constant 0 : i32
    return %c0_i32, %c0_i32_0 : i32, i32
  }
  func.func @transform_4(%arg0: i32) -> (i32, i32, i32) {
    %c0_i32 = arith.constant 0 : i32
    %c0_i32_0 = arith.constant 0 : i32
    %c0_i32_1 = arith.constant 0 : i32
    return %arg0, %c0_i32, %c0_i32_0 : i32, i32, i32
  }
}

module attributes {stable_mosaic.version = 11 : i64} {
  func.func @_conv_relu6_kernel(%arg0: i32, %arg1: i32, %arg2: memref<1x392x256xbf16, #tpu.memory_space<vmem>>, %arg3: memref<3x392xbf16, #tpu.memory_space<vmem>>, %arg4: memref<1x3x256xf32, #tpu.memory_space<vmem>>) attributes {dimension_semantics = [#tpu.dimension_semantics<parallel>, #tpu.dimension_semantics<parallel>], iteration_bounds = array<i64: 2, 1>, scalar_prefetch = 0 : i64, scratch_operands = 0 : i64, tpu.core_type = #tpu.core_type<tc>, window_params = [{transform_indices = @transform_0, window_bounds = array<i64: 1, 392, 256>}, {pipeline_mode = #tpu.pipeline_mode<synchronous>, transform_indices = @transform_1, window_bounds = array<i64: 3, 392>}, {transform_indices = @transform_2, window_bounds = array<i64: 1, 3, 256>}]} {
    %c0 = arith.constant 0 : index
    %c0_0 = arith.constant 0 : index
    %0 = vector.load %arg3[%c0, %c0_0] : memref<3x392xbf16, #tpu.memory_space<vmem>>, vector<3x392xbf16>
    %c0_1 = arith.constant 0 : index
    %c0_2 = arith.constant 0 : index
    %c0_3 = arith.constant 0 : index
    %1 = vector.load %arg2[%c0_1, %c0_2, %c0_3] : memref<1x392x256xbf16, #tpu.memory_space<vmem>>, vector<1x392x256xbf16>
    %2 = vector.shape_cast %1 : vector<1x392x256xbf16> to vector<392x256xbf16>
    %cst = arith.constant dense<0.000000e+00> : vector<3x256xf32>
    %3 = tpu.matmul %0, %2, %cst {dimension_numbers = #tpu.dot_dimension_numbers<[1], [0], [0], [1], [0, 0, 1, 1], [], []>} : vector<3x392xbf16>, vector<392x256xbf16>, vector<3x256xf32> -> vector<3x256xf32>
    %cst_4 = arith.constant 0.000000e+00 : f32
    %cst_5 = arith.constant 6.000000e+00 : f32
    %4 = vector.broadcast %cst_4 : f32 to vector<3x256xf32>
    %5 = arith.maximumf %4, %3 : vector<3x256xf32>
    %6 = vector.broadcast %cst_5 : f32 to vector<3x256xf32>
    %7 = arith.minimumf %6, %5 : vector<3x256xf32>
    %cst_6 = arith.constant 0.166666672 : f32
    %8 = vector.broadcast %cst_6 : f32 to vector<3x256xf32>
    %9 = arith.mulf %7, %8 : vector<3x256xf32>
    %c0_7 = arith.constant 0 : index
    %c0_8 = arith.constant 0 : index
    %c0_9 = arith.constant 0 : index
    %10 = vector.load %arg4[%c0_7, %c0_8, %c0_9] : memref<1x3x256xf32, #tpu.memory_space<vmem>>, vector<1x3x256xf32>
    %11 = vector.shape_cast %10 : vector<1x3x256xf32> to vector<3x256xf32>
    %12 = vector.shape_cast %9 : vector<3x256xf32> to vector<1x3x256xf32>
    tpu.vector_store %arg4[%c0_7, %c0_8, %c0_9], %12 {strides = array<i32>} : memref<1x3x256xf32, #tpu.memory_space<vmem>>, vector<1x3x256xf32>,
    return
  }
  func.func @transform_0(%arg0: i32, %arg1: i32) -> (i32, i32, i32) {
    %c0_i32 = arith.constant 0 : i32
    %c0_i32_0 = arith.constant 0 : i32
    return %arg0, %c0_i32, %arg1 : i32, i32, i32
  }
  func.func @transform_1(%arg0: i32, %arg1: i32) -> (i32, i32) {
    %c0_i32 = arith.constant 0 : i32
    %c0_i32_0 = arith.constant 0 : i32
    %c0_i32_1 = arith.constant 0 : i32
    return %c0_i32, %c0_i32_0 : i32, i32
  }
  func.func @transform_2(%arg0: i32, %arg1: i32) -> (i32, i32, i32) {
    %c0_i32 = arith.constant 0 : i32
    %c0_i32_0 = arith.constant 0 : i32
    return %arg0, %c0_i32, %arg1 : i32, i32, i32
  }
}

</mosaic_0001>

<llo_original>
// kernel: hnet_forward.10
$region0: #{hnet_forward.10}
  #allocation0 [shape = 'u32[]', space=smem, size = 0x4, offset = 0x4, fixed_abs, tag = 'smem constant byte address 0x4 - core index']
  #allocation1 [shape = 'u32[144,128]{1,0:T(1,128)}', space=vmem, size = 0x12000, scoped, tag = 'internal scratch']
  %s0 = inlined_call_operand.vmem [shape: bf16[2,196,256], index: 0, kind: input, shape index: {}]
  %s1 = inlined_call_operand.vmem [shape: bf16[8,196], index: 1, kind: input, shape index: {}]
  %s2 = inlined_call_operand.vmem [shape: f32[8,1], index: 2, kind: input, shape index: {}]
  %s3 = inlined_call_operand.vmem [shape: f32[8,1], index: 3, kind: input, shape index: {}]
  %s4 = inlined_call_operand.vmem [shape: f32[2,8,256], index: 4, kind: output, shape index: {}]
  %s5 = sld [smem:[#allocation0]]
  $region49: #{hnet_forward.10} parent=0
    _
  %s7 = ssub.s32 1, %s5
  %s8 = scalar_select 0, %s7, %s5
  loop: start=0, step=1, limit=4
  $region2: #{hnet_forward.10} parent=0 // loop_pre_header
    _
  $region3: #{hnet_forward.10} parent=0 // loop_header
    %s10 = sphi 0, %s14
    %p11 = scmp.ge.s32.totalorder %s10, 4
    %s20 = sphi 0, %s22
    %s23 = sphi 0, %s20
    %s24 = sphi 0, %s23
    %s40 = sphi 0, %s24
    %s44 = sphi 0, %s44
    %s46 = sphi 0, %s44
    %s47 = sphi 0, %s46
    %s61 = sphi 0, %s47
    %s65 = sphi 0, %s65
    %s67 = sphi 0, %s65
    %s68 = sphi 0, %s67
    %s82 = sphi 0, %s68
    %s86 = sphi 0, %s86
    %s88 = sphi 0, %s86
    %s89 = sphi 0, %s88
    %s103 = sphi 0, %s89
    %s109 = sphi 0, %s111
    %s112 = sphi 0, %s109
    %s113 = sphi 0, %s112
    %s129 = sphi 0, %s113
  $region4: #{hnet_forward.10} parent=0 // loop_header_branch
    %13 = sbr.rel (%p11) target = $region8
  $region5: #{hnet_forward.10} parent=0 // loop_body
    %s15 = ssub.s32 %s10, 1
    %s16 = ssub.s32 %s10, 2
    %s17 = sadd.s32 %s10, 1
    %s18 = ssub.s32 %s10, %s17
    %p19 = scmp.eq.s32.totalorder %s18, 0
    %s21 = sadd.s32 %s20, 1
    %s22 = scalar_select %p19, %s20, %s21
    %p25 = pneg %p19
    %p26 = scmp.eq.s32.totalorder %s10, 1
    %p27 = por %p25, %p26
    %p28 = scmp.ne.s32.totalorder %s20, %s23
    %p29 = scmp.eq.s32.totalorder %s10, 0
    %p30 = por %p28, %p29
    %p31 = scmp.ne.s32.totalorder %s20, %s23
    %p32 = scmp.eq.s32.totalorder %s15, 1
    %p33 = por %p31, %p32
    %p34 = scmp.ne.s32.totalorder %s23, %s24
    %p35 = scmp.eq.s32.totalorder %s15, 0
    %p36 = por %p34, %p35
    %p37 = scmp.ne.s32.totalorder %s23, %s24
    %p38 = scmp.eq.s32.totalorder %s16, 1
    %p39 = por %p37, %p38
    %p41 = scmp.ne.s32.totalorder %s24, %s40
    %p42 = scmp.eq.s32.totalorder %s16, 0
    %p43 = por %p41, %p42
    %s45 = sadd.s32 %s44, 1
    %p48 = scmp.eq.s32.totalorder %s10, 1
    %p49 = scmp.ne.s32.totalorder %s44, %s46
    %p50 = scmp.eq.s32.totalorder %s10, 0
    %p51 = por %p49, %p50
    %p52 = scmp.ne.s32.totalorder %s44, %s46
    %p53 = scmp.eq.s32.totalorder %s15, 1
    %p54 = por %p52, %p53
    %p55 = scmp.ne.s32.totalorder %s46, %s47
    %p56 = scmp.eq.s32.totalorder %s15, 0
    %p57 = por %p55, %p56
    %p58 = scmp.ne.s32.totalorder %s46, %s47
    %p59 = scmp.eq.s32.totalorder %s16, 1
    %p60 = por %p58, %p59
    %p62 = scmp.ne.s32.totalorder %s47, %s61
    %p63 = scmp.eq.s32.totalorder %s16, 0
    %p64 = por %p62, %p63
    %s66 = sadd.s32 %s65, 1
    %p69 = scmp.eq.s32.totalorder %s10, 1
    %p70 = scmp.ne.s32.totalorder %s65, %s67
    %p71 = scmp.eq.s32.totalorder %s10, 0
    %p72 = por %p70, %p71
    %p73 = scmp.ne.s32.totalorder %s65, %s67
    %p74 = scmp.eq.s32.totalorder %s15, 1
    %p75 = por %p73, %p74
    %p76 = scmp.ne.s32.totalorder %s67, %s68
    %p77 = scmp.eq.s32.totalorder %s15, 0
    %p78 = por %p76, %p77
    %p79 = scmp.ne.s32.totalorder %s67, %s68
    %p80 = scmp.eq.s32.totalorder %s16, 1
    %p81 = por %p79, %p80
    %p83 = scmp.ne.s32.totalorder %s68, %s82
    %p84 = scmp.eq.s32.totalorder %s16, 0
    %p85 = por %p83, %p84
    %s87 = sadd.s32 %s86, 1
    %p90 = scmp.eq.s32.totalorder %s10, 1
    %p91 = scmp.ne.s32.totalorder %s86, %s88
    %p92 = scmp.eq.s32.totalorder %s10, 0
    %p93 = por %p91, %p92
    %p94 = scmp.ne.s32.totalorder %s86, %s88
    %p95 = scmp.eq.s32.totalorder %s15, 1
    %p96 = por %p94, %p95
    %p97 = scmp.ne.s32.totalorder %s88, %s89
    %p98 = scmp.eq.s32.totalorder %s15, 0
    %p99 = por %p97, %p98
    %p100 = scmp.ne.s32.totalorder %s88, %s89
    %p101 = scmp.eq.s32.totalorder %s16, 1
    %p102 = por %p100, %p101
    %p104 = scmp.ne.s32.totalorder %s89, %s103
    %p105 = scmp.eq.s32.totalorder %s16, 0
    %p106 = por %p104, %p105
    %s107 = ssub.s32 %s10, %s17
    %p108 = scmp.eq.s32.totalorder %s107, 0
    %s110 = sadd.s32 %s109, 1
    %s111 = scalar_select %p108, %s109, %s110
    %p114 = pneg %p108
    %p115 = scmp.eq.s32.totalorder %s10, 1
    %p116 = por %p114, %p115
    %p117 = scmp.ne.s32.totalorder %s109, %s112
    %p118 = scmp.eq.s32.totalorder %s10, 0
    %p119 = por %p117, %p118
    %p120 = scmp.ne.s32.totalorder %s109, %s112
    %p121 = scmp.eq.s32.totalorder %s15, 1
    %p122 = por %p120, %p121
    %p123 = scmp.ne.s32.totalorder %s112, %s113
    %p124 = scmp.eq.s32.totalorder %s15, 0
    %p125 = por %p123, %p124
    %p126 = scmp.ne.s32.totalorder %s112, %s113
    %p127 = scmp.eq.s32.totalorder %s16, 1
    %p128 = por %p126, %p127
    %p130 = scmp.ne.s32.totalorder %s113, %s129
    %p131 = scmp.eq.s32.totalorder %s16, 0
    %p132 = por %p130, %p131
    %p133 = scmp.le.s32.totalorder 1, %s10
    %p134 = scmp.lt.s32.totalorder %s10, 3
    %p135 = pnand %p133, %p134
    %p136 = pneg %p135
    // Predicated region
    $region9: #{hnet_forward.10} parent=5 // pred_check
      _
    $region10: #{hnet_forward.10} parent=5 // pred_check_branch
      %138 = sbr.rel (%p135) target = $region12
    $region11: #{hnet_forward.10} parent=5 // pred_region
      %s139 = ssub.s32 %s10, 1
      // Predicated region
      $region13: #{hnet_forward.10} parent=11 // pred_check
        %p140 = pneg %p57
      $region14: #{hnet_forward.10} parent=11 // pred_check_branch
        %142 = sbr.rel (%p140) target = $region16
      $region15: #{hnet_forward.10} parent=11 // pred_region
        _
      $region16: #{hnet_forward.10} parent=11 // pred_fallthru
        _
      // Predicated region
      $region17: #{hnet_forward.10} parent=11 // pred_check
        %p143 = pneg %p78
      $region18: #{hnet_forward.10} parent=11 // pred_check_branch
        %145 = sbr.rel (%p143) target = $region20
      $region19: #{hnet_forward.10} parent=11 // pred_region
        _
      $region20: #{hnet_forward.10} parent=11 // pred_fallthru
        _
      // Predicated region
      $region21: #{hnet_forward.10} parent=11 // pred_check
        %p146 = pneg %p99
      $region22: #{hnet_forward.10} parent=11 // pred_check_branch
        %148 = sbr.rel (%p146) target = $region24
      $region23: #{hnet_forward.10} parent=11 // pred_region
        _
      $region24: #{hnet_forward.10} parent=11 // pred_fallthru
        _
    $region12: #{hnet_forward.10} parent=5 // pred_fallthru
      _
    %p149 = scmp.lt.s32.totalorder %s10, 2
    // Predicated region
    $region25: #{hnet_forward.10} parent=5 // pred_check
      %p150 = pneg %p149
    $region26: #{hnet_forward.10} parent=5 // pred_check_branch
      %152 = sbr.rel (%p150) target = $region28
    $region27: #{hnet_forward.10} parent=5 // pred_region
      // Predicated region
      $region29: #{hnet_forward.10} parent=27 // pred_check
        %p153 = pneg %p30
      $region30: #{hnet_forward.10} parent=27 // pred_check_branch
        %155 = sbr.rel (%p153) target = $region32
      $region31: #{hnet_forward.10} parent=27 // pred_region
        %p156 = scmp.lt.s32.totalorder %s10, 1
        %s157 = scalar_select %p156, %s10, 1
        %s158 = smul.addr %s157, 50
        %s159 = smul.addr %s158, 4
        %s160 = scalar_lea.vmem %s0, %s159
      $region32: #{hnet_forward.10} parent=27 // pred_fallthru
        _
    $region28: #{hnet_forward.10} parent=5 // pred_fallthru
      _
    %p161 = scmp.le.s32.totalorder 1, %s10
    %p162 = scmp.lt.s32.totalorder %s10, 3
    %p163 = pnand %p161, %p162
    %p164 = pneg %p163
    // Predicated region
    $region33: #{hnet_forward.10} parent=5 // pred_check
      _
    $region34: #{hnet_forward.10} parent=5 // pred_check_branch
      %166 = sbr.rel (%p163) target = $region36
    $region35: #{hnet_forward.10} parent=5 // pred_region
      %s167 = ssub.s32 %s10, 1
      %p168 = scmp.lt.s32.totalorder %s15, 1
      %s169 = scalar_select %p168, %s15, 1
      %s170 = smul.addr %s169, 50
      %s171 = smul.addr %s170, 4
      %s172 = scalar_lea.vmem %s0, %s171
      %p173 = pneg %p36
      %p174 = pneg %p33
      %p175 = pneg %p57
      %p176 = pneg %p54
      %p177 = pneg %p78
      %p178 = pneg %p75
      %p179 = pneg %p99
      %p180 = pneg %p96
      %p181 = pneg %p125
      %p182 = pneg %p122
      %p183 = scmp.lt.s32.totalorder %s15, 1
      %s184 = scalar_select %p183, %s15, 1
      %s185 = smul.addr %s184, 2
      %s186 = smul.addr %s185, 8
      %s187 = scalar_lea.vmem %s4, %s186
      %p188 = scmp.lt.s32.totalorder %s15, 1
      %s189 = scalar_select %p188, %s15, 1
      %s190 = smul.addr %s189, 50
      %s191 = smul.addr %s190, 4
      %s192 = scalar_lea.vmem %s0, %s191
      %p193 = scmp.lt.s32.totalorder %s15, 1
      %s194 = scalar_select %p193, %s15, 1
      %s195 = smul.addr %s194, 2
      %s196 = smul.addr %s195, 8
      %s197 = scalar_lea.vmem %s4, %s196
      %v199 = vld [vmem:[%s1] sm:$0xff]
      %v200 = vld [vmem:[%s192] sm:$0xff]
      %v201 = vld [vmem:[%s192 + $0x8] sm:$0xff]
      %v202 = vld [vmem:[%s192 + $0x10] sm:$0xff]
      %v203 = vld [vmem:[%s192 + $0x18] sm:$0xff]
      %v204 = vld [vmem:[%s192 + $0x20] sm:$0xff]
      %v205 = vld [vmem:[%s192 + $0x28] sm:$0xff]
      %v206 = vld [vmem:[%s192 + $0x30] sm:$0xff]
      %v207 = vld [vmem:[%s192 + $0x38] sm:$0xff]
      %v208 = vld [vmem:[%s192 + $0x40] sm:$0xff]
      %v209 = vld [vmem:[%s192 + $0x48] sm:$0xff]
      %v210 = vld [vmem:[%s192 + $0x50] sm:$0xff]
      %v211 = vld [vmem:[%s192 + $0x58] sm:$0xff]
      %v212 = vld [vmem:[%s192 + $0x60] sm:$0xff]
      %v213 = vld [vmem:[%s192 + $0x68] sm:$0xff]
      %v214 = vld [vmem:[%s192 + $0x70] sm:$0xff]
      %v215 = vld [vmem:[%s192 + $0x78] sm:$0xff]
      %v216 = vld [vmem:[%s192 + $0x80] sm:$0xff]
      %v217 = vld [vmem:[%s192 + $0x88] sm:$0xff]
      %v218 = vld [vmem:[%s192 + $0x90] sm:$0xff]
      %v219 = vld [vmem:[%s192 + $0x98] sm:$0xff]
      %v220 = vld [vmem:[%s192 + $0xa0] sm:$0xff]
      %v221 = vld [vmem:[%s192 + $0xa8] sm:$0xff]
      %v222 = vld [vmem:[%s192 + $0xb0] sm:$0xff]
      %v223 = vld [vmem:[%s192 + $0xb8] sm:$0xff]
      %v224 = vld [vmem:[%s192 + $0xc0] sm:$0x33]
      %v226 = vunpack.c.l.b16 %v199
      %v227 = vunpack.c.h.b16 %v199
      %v228 = vpack.c.b16 %v226, %v226
      %v229 = vpack.c.b16 %v227, %v227
      %v256 = vunpack.c.l.b16 %v200
      %v257 = vunpack.c.h.b16 %v200
      %v258 = vunpack.c.l.b16 %v201
      %v259 = vunpack.c.h.b16 %v201
      %v260 = vunpack.c.l.b16 %v202
      %v261 = vunpack.c.h.b16 %v202
      %v262 = vunpack.c.l.b16 %v203
      %v263 = vunpack.c.h.b16 %v203
      %v264 = vunpack.c.l.b16 %v204
      %v265 = vunpack.c.h.b16 %v204
      %v266 = vunpack.c.l.b16 %v205
      %v267 = vunpack.c.h.b16 %v205
      %v268 = vunpack.c.l.b16 %v206
      %v269 = vunpack.c.h.b16 %v206
      %v270 = vunpack.c.l.b16 %v207
      %v271 = vunpack.c.h.b16 %v207
      %v272 = vunpack.c.l.b16 %v208
      %v273 = vunpack.c.h.b16 %v208
      %v274 = vunpack.c.l.b16 %v209
      %v275 = vunpack.c.h.b16 %v209
      %v276 = vunpack.c.l.b16 %v210
      %v277 = vunpack.c.h.b16 %v210
      %v278 = vunpack.c.l.b16 %v211
      %v279 = vunpack.c.h.b16 %v211
      %v280 = vunpack.c.l.b16 %v212
      %v281 = vunpack.c.h.b16 %v212
      %v282 = vunpack.c.l.b16 %v213
      %v283 = vunpack.c.h.b16 %v213
      %v284 = vunpack.c.l.b16 %v214
      %v285 = vunpack.c.h.b16 %v214
      %v286 = vunpack.c.l.b16 %v215
      %v287 = vunpack.c.h.b16 %v215
      %v288 = vunpack.c.l.b16 %v216
      %v289 = vunpack.c.h.b16 %v216
      %v290 = vunpack.c.l.b16 %v217
      %v291 = vunpack.c.h.b16 %v217
      %v292 = vunpack.c.l.b16 %v218
      %v293 = vunpack.c.h.b16 %v218
      %v294 = vunpack.c.l.b16 %v219
      %v295 = vunpack.c.h.b16 %v219
      %v296 = vunpack.c.l.b16 %v220
      %v297 = vunpack.c.h.b16 %v220
      %v298 = vunpack.c.l.b16 %v221
      %v299 = vunpack.c.h.b16 %v221
      %v300 = vunpack.c.l.b16 %v222
      %v301 = vunpack.c.h.b16 %v222
      %v302 = vunpack.c.l.b16 %v223
      %v303 = vunpack.c.h.b16 %v223
      %v304 = vunpack.c.l.b16 %v224
      %v305 = vunpack.c.h.b16 %v224
      %v306 = vpack.c.b16 %v258, %v256
      %v307 = vpack.c.b16 %v259, %v257
      %v308 = vpack.c.b16 %v262, %v260
      %v309 = vpack.c.b16 %v263, %v261
      %v310 = vpack.c.b16 %v266, %v264
      %v311 = vpack.c.b16 %v267, %v265
      %v312 = vpack.c.b16 %v270, %v268
      %v313 = vpack.c.b16 %v271, %v269
      %v314 = vpack.c.b16 %v274, %v272
      %v315 = vpack.c.b16 %v275, %v273
      %v316 = vpack.c.b16 %v278, %v276
      %v317 = vpack.c.b16 %v279, %v277
      %v318 = vpack.c.b16 %v282, %v280
      %v319 = vpack.c.b16 %v283, %v281
      %v320 = vpack.c.b16 %v286, %v284
      %v321 = vpack.c.b16 %v287, %v285
      %v322 = vpack.c.b16 %v290, %v288
      %v323 = vpack.c.b16 %v291, %v289
      %v324 = vpack.c.b16 %v294, %v292
      %v325 = vpack.c.b16 %v295, %v293
      %v326 = vpack.c.b16 %v298, %v296
      %v327 = vpack.c.b16 %v299, %v297
      %v328 = vpack.c.b16 %v302, %v300
      %v329 = vpack.c.b16 %v303, %v301
      %v330 = vpack.c.b16 %v304, %v304
      %v331 = vpack.c.b16 %v305, %v305
      %vm356 = vcmask 556032
      %v358 = vsel %vm356, %v229, 0
      %vm360 = vcmask 1041408
      %v362 = vsel %vm360, %v330, 0
      %v365 = vsel %vm360, %v331, 0
      %367 = vmatprep.subr.bf16.mxu0 %v307
      %368 = vmatpush1.bf16.msra.mxu0 %v306
      %369 = vmatprep.subr.bf16.mxu0 %v309
      %370 = vmatpush1.bf16.msra.mxu0 %v308
      %371 = vmatprep.subr.bf16.mxu0 %v311
      %372 = vmatpush1.bf16.msra.mxu0 %v310
      %373 = vmatprep.subr.bf16.mxu0 %v313
      %374 = vmatpush1.bf16.msra.mxu0 %v312
      %375 = vmatprep.subr.bf16.mxu0 %v315
      %376 = vmatpush1.bf16.msra.mxu0 %v314
      %377 = vmatprep.subr.bf16.mxu0 %v317
      %378 = vmatpush1.bf16.msra.mxu0 %v316
      %379 = vmatprep.subr.bf16.mxu0 %v319
      %380 = vmatpush1.bf16.msra.mxu0 %v318
      %381 = vmatprep.subr.bf16.mxu0 %v321
      %382 = vmatpush1.bf16.msra.mxu0 %v320
      %383 = vmatprep.subr.bf16.mxu0 %v323
      %384 = vmatpush1.bf16.msra.mxu0 %v322
      %385 = vmatprep.subr.bf16.mxu0 %v325
      %386 = vmatpush1.bf16.msra.mxu0 %v324
      %387 = vmatprep.subr.bf16.mxu0 %v327
      %388 = vmatpush1.bf16.msra.mxu0 %v326
      %389 = vmatprep.subr.bf16.mxu0 %v329
      %390 = vmatpush1.bf16.msra.mxu0 %v328
      %391 = vmatprep.subr.bf16.mxu0 %v365
      %392 = vmatpush1.bf16.msra.mxu0 %v362
      %393 = vmatprep.subr.bf16.mxu0 0
      %394 = vmatpush1.bf16.msra.mxu0 0
      %395 = vmatprep.subr.bf16.mxu0 0
      %396 = vmatpush1.bf16.msra.mxu0 0
      %397 = vmatprep.subr.bf16.mxu0 0
      %398 = vmatpush1.bf16.msra.mxu0 0
      %399 = vmatprep.mubr.bf16.mxu0 %v358
      %400 = vmatmul.mubr.bf16.gmra.mrb[0].mxu0 %v228
      %v401 = vpop.f32.mrb[0].mxu0
      %v402 = vadd.f32 0.0, %v401
      %v403 = vpop.f32.mrb[0].mxu0
      %v404 = vadd.f32 0.0, %v403
      %v405 = vpop.f32.mrb[0].mxu0
      %v406 = vpop.f32.mrb[0].mxu0
      %407 = vdwg.mxu0
      %v408 = vadd.f32 %v402, %v404
      %409 = vadd.xlane.f32.xlu0 %v408
      %v410 = vpop.xlane.xlu0 %409
      %v411 = vmul.f32 %v410, 0.00390625
      %v412 = vsub.f32 %v402, %v411
      %v413 = vsub.f32 %v404, %v411
      %v414 = vmul.f32 %v412, %v412
      %v415 = vmul.f32 %v413, %v413
      %v416 = vadd.f32 %v414, %v415
      %417 = vadd.xlane.f32.xlu0 %v416
      %v418 = vpop.xlane.xlu0 %417
      %v419 = vmul.f32 %v418, 0.00390625
      %v420 = vadd.f32 %v419, 1e-05
      %v421 = vrsqrt.pop %v420
      %v422 = vld [vmem:[%s2] sm:$0xff]
      %v423 = vmul.f32 %v421, %v422
      %v424 = vld [vmem:[%s3] sm:$0xff]
      %426 = vset.pattern.permute.xlu0 0
      %427 = vperm.xlu0 %426, %v423
      %v428 = vpop.permute.xlu0 %427
      %v430 = vmul.f32 %v412, %v428
      %v431 = vmul.f32 %v413, %v428
      %433 = vset.pattern.permute.xlu0 0
      %434 = vperm.xlu0 %433, %v424
      %v435 = vpop.permute.xlu0 %434
      %v437 = vadd.f32 %v430, %v435
      %v438 = vadd.f32 %v431, %v435
      %v439 = vmax.f32 %v437, 0.0
      %v440 = vmax.f32 %v438, 0.0
      %441 = vst [vmem:[%s197] sm:$0xff] %v439
      %442 = vst [vmem:[%s197 + $0x8] sm:$0xff] %v440
      %p443 = scmp.lt.s32.totalorder %s15, 1
      %s444 = scalar_select %p443, %s15, 1
      %s445 = smul.addr %s444, 2
      %s446 = smul.addr %s445, 8
      %s447 = scalar_lea.vmem %s4, %s446
      // Predicated region
      $region37: #{hnet_forward.10} parent=35 // pred_check
        %p448 = pneg %p122
      $region38: #{hnet_forward.10} parent=35 // pred_check_branch
        %450 = sbr.rel (%p448) target = $region40
      $region39: #{hnet_forward.10} parent=35 // pred_region
        _
      $region40: #{hnet_forward.10} parent=35 // pred_fallthru
        _
    $region36: #{hnet_forward.10} parent=5 // pred_fallthru
      _
    %p451 = scmp.le.s32.totalorder 2, %s10
    // Predicated region
    $region41: #{hnet_forward.10} parent=5 // pred_check
      %p452 = pneg %p451
    $region42: #{hnet_forward.10} parent=5 // pred_check_branch
      %454 = sbr.rel (%p452) target = $region44
    $region43: #{hnet_forward.10} parent=5 // pred_region
      %s455 = ssub.s32 %s10, 2
      // Predicated region
      $region45: #{hnet_forward.10} parent=43 // pred_check
        %p456 = pneg %p128
      $region46: #{hnet_forward.10} parent=43 // pred_check_branch
        %458 = sbr.rel (%p456) target = $region48
      $region47: #{hnet_forward.10} parent=43 // pred_region
        %p459 = scmp.lt.s32.totalorder %s16, 1
        %s460 = scalar_select %p459, %s16, 1
        %s461 = smul.addr %s460, 2
        %s462 = smul.addr %s461, 8
        %s463 = scalar_lea.vmem %s4, %s462
      $region48: #{hnet_forward.10} parent=43 // pred_fallthru
        _
    $region44: #{hnet_forward.10} parent=5 // pred_fallthru
      _
  $region6: #{hnet_forward.10} parent=0 // loop_footer
    %s14 = sadd.s32 1, %s10
  $region7: #{hnet_forward.10} parent=0 // loop_footer_branch
    %9 = sbr.rel target = $region3
  $region8: #{hnet_forward.10} parent=0 // loop_exit
    _

// kernel: hnet_forward.11
$region0: #{hnet_forward.11}
  #allocation0 [shape = 'u32[]', space=smem, size = 0x4, offset = 0x4, fixed_abs, tag = 'smem constant byte address 0x4 - core index']
  #allocation1 [shape = 'u32[144,128]{1,0:T(1,128)}', space=vmem, size = 0x12000, scoped, tag = 'internal scratch']
  %s0 = inlined_call_operand.vmem [shape: bf16[2,128,64], index: 0, kind: input, shape index: {}]
  %s1 = inlined_call_operand.vmem [shape: bf16[16,128], index: 1, kind: input, shape index: {}]
  %s2 = inlined_call_operand.vmem [shape: f32[16,1], index: 2, kind: input, shape index: {}]
  %s3 = inlined_call_operand.vmem [shape: f32[16,1], index: 3, kind: input, shape index: {}]
  %s4 = inlined_call_operand.vmem [shape: f32[2,16,64], index: 4, kind: output, shape index: {}]
  %s5 = sld [smem:[#allocation0]]
  $region49: #{hnet_forward.11} parent=0
    _
  %s7 = ssub.s32 1, %s5
  %s8 = scalar_select 0, %s7, %s5
  loop: start=0, step=1, limit=4
  $region2: #{hnet_forward.11} parent=0 // loop_pre_header
    _
  $region3: #{hnet_forward.11} parent=0 // loop_header
    %s10 = sphi 0, %s14
    %p11 = scmp.ge.s32.totalorder %s10, 4
    %s20 = sphi 0, %s22
    %s23 = sphi 0, %s20
    %s24 = sphi 0, %s23
    %s40 = sphi 0, %s24
    %s44 = sphi 0, %s44
    %s46 = sphi 0, %s44
    %s47 = sphi 0, %s46
    %s61 = sphi 0, %s47
    %s65 = sphi 0, %s65
    %s67 = sphi 0, %s65
    %s68 = sphi 0, %s67
    %s82 = sphi 0, %s68
    %s86 = sphi 0, %s86
    %s88 = sphi 0, %s86
    %s89 = sphi 0, %s88
    %s103 = sphi 0, %s89
    %s109 = sphi 0, %s111
    %s112 = sphi 0, %s109
    %s113 = sphi 0, %s112
    %s129 = sphi 0, %s113
  $region4: #{hnet_forward.11} parent=0 // loop_header_branch
    %13 = sbr.rel (%p11) target = $region8
  $region5: #{hnet_forward.11} parent=0 // loop_body
    %s15 = ssub.s32 %s10, 1
    %s16 = ssub.s32 %s10, 2
    %s17 = sadd.s32 %s10, 1
    %s18 = ssub.s32 %s10, %s17
    %p19 = scmp.eq.s32.totalorder %s18, 0
    %s21 = sadd.s32 %s20, 1
    %s22 = scalar_select %p19, %s20, %s21
    %p25 = pneg %p19
    %p26 = scmp.eq.s32.totalorder %s10, 1
    %p27 = por %p25, %p26
    %p28 = scmp.ne.s32.totalorder %s20, %s23
    %p29 = scmp.eq.s32.totalorder %s10, 0
    %p30 = por %p28, %p29
    %p31 = scmp.ne.s32.totalorder %s20, %s23
    %p32 = scmp.eq.s32.totalorder %s15, 1
    %p33 = por %p31, %p32
    %p34 = scmp.ne.s32.totalorder %s23, %s24
    %p35 = scmp.eq.s32.totalorder %s15, 0
    %p36 = por %p34, %p35
    %p37 = scmp.ne.s32.totalorder %s23, %s24
    %p38 = scmp.eq.s32.totalorder %s16, 1
    %p39 = por %p37, %p38
    %p41 = scmp.ne.s32.totalorder %s24, %s40
    %p42 = scmp.eq.s32.totalorder %s16, 0
    %p43 = por %p41, %p42
    %s45 = sadd.s32 %s44, 1
    %p48 = scmp.eq.s32.totalorder %s10, 1
    %p49 = scmp.ne.s32.totalorder %s44, %s46
    %p50 = scmp.eq.s32.totalorder %s10, 0
    %p51 = por %p49, %p50
    %p52 = scmp.ne.s32.totalorder %s44, %s46
    %p53 = scmp.eq.s32.totalorder %s15, 1
    %p54 = por %p52, %p53
    %p55 = scmp.ne.s32.totalorder %s46, %s47
    %p56 = scmp.eq.s32.totalorder %s15, 0
    %p57 = por %p55, %p56
    %p58 = scmp.ne.s32.totalorder %s46, %s47
    %p59 = scmp.eq.s32.totalorder %s16, 1
    %p60 = por %p58, %p59
    %p62 = scmp.ne.s32.totalorder %s47, %s61
    %p63 = scmp.eq.s32.totalorder %s16, 0
    %p64 = por %p62, %p63
    %s66 = sadd.s32 %s65, 1
    %p69 = scmp.eq.s32.totalorder %s10, 1
    %p70 = scmp.ne.s32.totalorder %s65, %s67
    %p71 = scmp.eq.s32.totalorder %s10, 0
    %p72 = por %p70, %p71
    %p73 = scmp.ne.s32.totalorder %s65, %s67
    %p74 = scmp.eq.s32.totalorder %s15, 1
    %p75 = por %p73, %p74
    %p76 = scmp.ne.s32.totalorder %s67, %s68
    %p77 = scmp.eq.s32.totalorder %s15, 0
    %p78 = por %p76, %p77
    %p79 = scmp.ne.s32.totalorder %s67, %s68
    %p80 = scmp.eq.s32.totalorder %s16, 1
    %p81 = por %p79, %p80
    %p83 = scmp.ne.s32.totalorder %s68, %s82
    %p84 = scmp.eq.s32.totalorder %s16, 0
    %p85 = por %p83, %p84
    %s87 = sadd.s32 %s86, 1
    %p90 = scmp.eq.s32.totalorder %s10, 1
    %p91 = scmp.ne.s32.totalorder %s86, %s88
    %p92 = scmp.eq.s32.totalorder %s10, 0
    %p93 = por %p91, %p92
    %p94 = scmp.ne.s32.totalorder %s86, %s88
    %p95 = scmp.eq.s32.totalorder %s15, 1
    %p96 = por %p94, %p95
    %p97 = scmp.ne.s32.totalorder %s88, %s89
    %p98 = scmp.eq.s32.totalorder %s15, 0
    %p99 = por %p97, %p98
    %p100 = scmp.ne.s32.totalorder %s88, %s89
    %p101 = scmp.eq.s32.totalorder %s16, 1
    %p102 = por %p100, %p101
    %p104 = scmp.ne.s32.totalorder %s89, %s103
    %p105 = scmp.eq.s32.totalorder %s16, 0
    %p106 = por %p104, %p105
    %s107 = ssub.s32 %s10, %s17
    %p108 = scmp.eq.s32.totalorder %s107, 0
    %s110 = sadd.s32 %s109, 1
    %s111 = scalar_select %p108, %s109, %s110
    %p114 = pneg %p108
    %p115 = scmp.eq.s32.totalorder %s10, 1
    %p116 = por %p114, %p115
    %p117 = scmp.ne.s32.totalorder %s109, %s112
    %p118 = scmp.eq.s32.totalorder %s10, 0
    %p119 = por %p117, %p118
    %p120 = scmp.ne.s32.totalorder %s109, %s112
    %p121 = scmp.eq.s32.totalorder %s15, 1
    %p122 = por %p120, %p121
    %p123 = scmp.ne.s32.totalorder %s112, %s113
    %p124 = scmp.eq.s32.totalorder %s15, 0
    %p125 = por %p123, %p124
    %p126 = scmp.ne.s32.totalorder %s112, %s113
    %p127 = scmp.eq.s32.totalorder %s16, 1
    %p128 = por %p126, %p127
    %p130 = scmp.ne.s32.totalorder %s113, %s129
    %p131 = scmp.eq.s32.totalorder %s16, 0
    %p132 = por %p130, %p131
    %p133 = scmp.le.s32.totalorder 1, %s10
    %p134 = scmp.lt.s32.totalorder %s10, 3
    %p135 = pnand %p133, %p134
    %p136 = pneg %p135
    // Predicated region
    $region9: #{hnet_forward.11} parent=5 // pred_check
      _
    $region10: #{hnet_forward.11} parent=5 // pred_check_branch
      %138 = sbr.rel (%p135) target = $region12
    $region11: #{hnet_forward.11} parent=5 // pred_region
      %s139 = ssub.s32 %s10, 1
      // Predicated region
      $region13: #{hnet_forward.11} parent=11 // pred_check
        %p140 = pneg %p57
      $region14: #{hnet_forward.11} parent=11 // pred_check_branch
        %142 = sbr.rel (%p140) target = $region16
      $region15: #{hnet_forward.11} parent=11 // pred_region
        _
      $region16: #{hnet_forward.11} parent=11 // pred_fallthru
        _
      // Predicated region
      $region17: #{hnet_forward.11} parent=11 // pred_check
        %p143 = pneg %p78
      $region18: #{hnet_forward.11} parent=11 // pred_check_branch
        %145 = sbr.rel (%p143) target = $region20
      $region19: #{hnet_forward.11} parent=11 // pred_region
        _
      $region20: #{hnet_forward.11} parent=11 // pred_fallthru
        _
      // Predicated region
      $region21: #{hnet_forward.11} parent=11 // pred_check
        %p146 = pneg %p99
      $region22: #{hnet_forward.11} parent=11 // pred_check_branch
        %148 = sbr.rel (%p146) target = $region24
      $region23: #{hnet_forward.11} parent=11 // pred_region
        _
      $region24: #{hnet_forward.11} parent=11 // pred_fallthru
        _
    $region12: #{hnet_forward.11} parent=5 // pred_fallthru
      _
    %p149 = scmp.lt.s32.totalorder %s10, 2
    // Predicated region
    $region25: #{hnet_forward.11} parent=5 // pred_check
      %p150 = pneg %p149
    $region26: #{hnet_forward.11} parent=5 // pred_check_branch
      %152 = sbr.rel (%p150) target = $region28
    $region27: #{hnet_forward.11} parent=5 // pred_region
      // Predicated region
      $region29: #{hnet_forward.11} parent=27 // pred_check
        %p153 = pneg %p30
      $region30: #{hnet_forward.11} parent=27 // pred_check_branch
        %155 = sbr.rel (%p153) target = $region32
      $region31: #{hnet_forward.11} parent=27 // pred_region
        %p156 = scmp.lt.s32.totalorder %s10, 1
        %s157 = scalar_select %p156, %s10, 1
        %s158 = smul.addr %s157, 16
        %s159 = smul.addr %s158, 4
        %s160 = scalar_lea.vmem %s0, %s159
      $region32: #{hnet_forward.11} parent=27 // pred_fallthru
        _
    $region28: #{hnet_forward.11} parent=5 // pred_fallthru
      _
    %p161 = scmp.le.s32.totalorder 1, %s10
    %p162 = scmp.lt.s32.totalorder %s10, 3
    %p163 = pnand %p161, %p162
    %p164 = pneg %p163
    // Predicated region
    $region33: #{hnet_forward.11} parent=5 // pred_check
      _
    $region34: #{hnet_forward.11} parent=5 // pred_check_branch
      %166 = sbr.rel (%p163) target = $region36
    $region35: #{hnet_forward.11} parent=5 // pred_region
      %s167 = ssub.s32 %s10, 1
      %p168 = scmp.lt.s32.totalorder %s15, 1
      %s169 = scalar_select %p168, %s15, 1
      %s170 = smul.addr %s169, 16
      %s171 = smul.addr %s170, 4
      %s172 = scalar_lea.vmem %s0, %s171
      %p173 = pneg %p36
      %p174 = pneg %p33
      %p175 = pneg %p57
      %p176 = pneg %p54
      %p177 = pneg %p78
      %p178 = pneg %p75
      %p179 = pneg %p99
      %p180 = pneg %p96
      %p181 = pneg %p125
      %p182 = pneg %p122
      %p183 = scmp.lt.s32.totalorder %s15, 1
      %s184 = scalar_select %p183, %s15, 1
      %s185 = smul.addr %s184, 2
      %s186 = smul.addr %s185, 8
      %s187 = scalar_lea.vmem %s4, %s186
      %p188 = scmp.lt.s32.totalorder %s15, 1
      %s189 = scalar_select %p188, %s15, 1
      %s190 = smul.addr %s189, 16
      %s191 = smul.addr %s190, 4
      %s192 = scalar_lea.vmem %s0, %s191
      %p193 = scmp.lt.s32.totalorder %s15, 1
      %s194 = scalar_select %p193, %s15, 1
      %s195 = smul.addr %s194, 2
      %s196 = smul.addr %s195, 8
      %s197 = scalar_lea.vmem %s4, %s196
      %v199 = vld [vmem:[%s1] sm:$0xf]
      %v200 = vld [vmem:[%s1 + $0x4] sm:$0xf]
      %v201 = vld [vmem:[%s192] sm:$0xf]
      %v202 = vld [vmem:[%s192 + $0x4] sm:$0xf]
      %v203 = vld [vmem:[%s192 + $0x8] sm:$0xf]
      %v204 = vld [vmem:[%s192 + $0xc] sm:$0xf]
      %v205 = vld [vmem:[%s192 + $0x10] sm:$0xf]
      %v206 = vld [vmem:[%s192 + $0x14] sm:$0xf]
      %v207 = vld [vmem:[%s192 + $0x18] sm:$0xf]
      %v208 = vld [vmem:[%s192 + $0x1c] sm:$0xf]
      %v209 = vld [vmem:[%s192 + $0x20] sm:$0xf]
      %v210 = vld [vmem:[%s192 + $0x24] sm:$0xf]
      %v211 = vld [vmem:[%s192 + $0x28] sm:$0xf]
      %v212 = vld [vmem:[%s192 + $0x2c] sm:$0xf]
      %v213 = vld [vmem:[%s192 + $0x30] sm:$0xf]
      %v214 = vld [vmem:[%s192 + $0x34] sm:$0xf]
      %v215 = vld [vmem:[%s192 + $0x38] sm:$0xf]
      %v216 = vld [vmem:[%s192 + $0x3c] sm:$0xf]
      %v219 = vunpack.c.l.b16 %v199
      %v220 = vunpack.c.l.b16 %v200
      %v221 = vpack.c.b16 %v220, %v219
      %v239 = vunpack.c.l.b16 %v201
      %v240 = vunpack.c.l.b16 %v202
      %v241 = vunpack.c.l.b16 %v203
      %v242 = vunpack.c.l.b16 %v204
      %v243 = vunpack.c.l.b16 %v205
      %v244 = vunpack.c.l.b16 %v206
      %v245 = vunpack.c.l.b16 %v207
      %v246 = vunpack.c.l.b16 %v208
      %v247 = vunpack.c.l.b16 %v209
      %v248 = vunpack.c.l.b16 %v210
      %v249 = vunpack.c.l.b16 %v211
      %v250 = vunpack.c.l.b16 %v212
      %v251 = vunpack.c.l.b16 %v213
      %v252 = vunpack.c.l.b16 %v214
      %v253 = vunpack.c.l.b16 %v215
      %v254 = vunpack.c.l.b16 %v216
      %v255 = vpack.c.b16 %v240, %v239
      %v256 = vpack.c.b16 %v242, %v241
      %v257 = vpack.c.b16 %v244, %v243
      %v258 = vpack.c.b16 %v246, %v245
      %v259 = vpack.c.b16 %v248, %v247
      %v260 = vpack.c.b16 %v250, %v249
      %v261 = vpack.c.b16 %v252, %v251
      %v262 = vpack.c.b16 %v254, %v253
      %271 = vmatprep.subr.bf16.mxu0 0
      %272 = vmatpush1.bf16.msra.mxu0 %v255
      %273 = vmatprep.subr.bf16.mxu0 0
      %274 = vmatpush1.bf16.msra.mxu0 %v256
      %275 = vmatprep.subr.bf16.mxu0 0
      %276 = vmatpush1.bf16.msra.mxu0 %v257
      %277 = vmatprep.subr.bf16.mxu0 0
      %278 = vmatpush1.bf16.msra.mxu0 %v258
      %279 = vmatprep.subr.bf16.mxu0 0
      %280 = vmatpush1.bf16.msra.mxu0 %v259
      %281 = vmatprep.subr.bf16.mxu0 0
      %282 = vmatpush1.bf16.msra.mxu0 %v260
      %283 = vmatprep.subr.bf16.mxu0 0
      %284 = vmatpush1.bf16.msra.mxu0 %v261
      %285 = vmatprep.subr.bf16.mxu0 0
      %286 = vmatpush1.bf16.msra.mxu0 %v262
      %287 = vmatprep.subr.bf16.mxu0 0
      %288 = vmatpush1.bf16.msra.mxu0 0
      %289 = vmatprep.subr.bf16.mxu0 0
      %290 = vmatpush1.bf16.msra.mxu0 0
      %291 = vmatprep.subr.bf16.mxu0 0
      %292 = vmatpush1.bf16.msra.mxu0 0
      %293 = vmatprep.subr.bf16.mxu0 0
      %294 = vmatpush1.bf16.msra.mxu0 0
      %295 = vmatprep.subr.bf16.mxu0 0
      %296 = vmatpush1.bf16.msra.mxu0 0
      %297 = vmatprep.subr.bf16.mxu0 0
      %298 = vmatpush1.bf16.msra.mxu0 0
      %299 = vmatprep.subr.bf16.mxu0 0
      %300 = vmatpush1.bf16.msra.mxu0 0
      %301 = vmatprep.subr.bf16.mxu0 0
      %302 = vmatpush1.bf16.msra.mxu0 0
      %303 = vmatprep.mubr.bf16.mxu0 0
      %304 = vmatmul.mubr.bf16.gmra.mrb[0].mxu0 %v221
      %v305 = vpop.f32.mrb[0].mxu0
      %v306 = vadd.f32 0.0, %v305
      %v307 = vpop.f32.mrb[0].mxu0
      %v308 = vpop.f32.mrb[0].mxu0
      %v309 = vadd.f32 0.0, %v308
      %v310 = vpop.f32.mrb[0].mxu0
      %311 = vdwg.mxu0
      %vm312 = vcmask 523264
      %v313 = vsel %vm312, %v306, 0.0
      %314 = vadd.xlane.f32.xlu0 %v313
      %v315 = vpop.xlane.xlu0 %314
      %v316 = vsel %vm312, %v309, 0.0
      %317 = vadd.xlane.f32.xlu0 %v316
      %v318 = vpop.xlane.xlu0 %317
      %v319 = vmul.f32 %v315, 0.015625
      %v320 = vmul.f32 %v318, 0.015625
      %v321 = vsub.f32 %v306, %v319
      %v322 = vsub.f32 %v309, %v320
      %v323 = vmul.f32 %v321, %v321
      %v324 = vmul.f32 %v322, %v322
      %v325 = vsel %vm312, %v323, 0.0
      %326 = vadd.xlane.f32.xlu0 %v325
      %v327 = vpop.xlane.xlu0 %326
      %v328 = vsel %vm312, %v324, 0.0
      %329 = vadd.xlane.f32.xlu0 %v328
      %v330 = vpop.xlane.xlu0 %329
      %v331 = vmul.f32 %v327, 0.015625
      %v332 = vmul.f32 %v330, 0.015625
      %v333 = vadd.f32 %v331, 1e-05
      %v334 = vadd.f32 %v332, 1e-05
      %v335 = vrsqrt.pop %v333
      %v336 = vrsqrt.pop %v334
      %v337 = vld [vmem:[%s2] sm:$0xff]
      %v338 = vld [vmem:[%s2 + $0x8] sm:$0xff]
      %v339 = vmul.f32 %v335, %v337
      %v340 = vmul.f32 %v336, %v338
      %v341 = vld [vmem:[%s3] sm:$0xff]
      %v342 = vld [vmem:[%s3 + $0x8] sm:$0xff]
      %344 = vset.pattern.permute.xlu0 0
      %345 = vperm.xlu0 %344, %v339
      %v346 = vpop.permute.xlu0 %345
      %349 = vset.pattern.permute.xlu0 0
      %350 = vperm.xlu0 %349, %v340
      %v351 = vpop.permute.xlu0 %350
      %v353 = vmul.f32 %v321, %v346
      %v354 = vmul.f32 %v322, %v351
      %356 = vset.pattern.permute.xlu0 0
      %357 = vperm.xlu0 %356, %v341
      %v358 = vpop.permute.xlu0 %357
      %361 = vset.pattern.permute.xlu0 0
      %362 = vperm.xlu0 %361, %v342
      %v363 = vpop.permute.xlu0 %362
      %v365 = vadd.f32 %v353, %v358
      %v366 = vadd.f32 %v354, %v363
      %v367 = vmax.f32 %v365, 0.0
      %v368 = vmax.f32 %v366, 0.0
      %369 = vst.msk [vmem:[%s197] sm:$0xff] %vm312, %v367
      %370 = vst.msk [vmem:[%s197 + $0x8] sm:$0xff] %vm312, %v368
      %p371 = scmp.lt.s32.totalorder %s15, 1
      %s372 = scalar_select %p371, %s15, 1
      %s373 = smul.addr %s372, 2
      %s374 = smul.addr %s373, 8
      %s375 = scalar_lea.vmem %s4, %s374
      // Predicated region
      $region37: #{hnet_forward.11} parent=35 // pred_check
        %p376 = pneg %p122
      $region38: #{hnet_forward.11} parent=35 // pred_check_branch
        %378 = sbr.rel (%p376) target = $region40
      $region39: #{hnet_forward.11} parent=35 // pred_region
        _
      $region40: #{hnet_forward.11} parent=35 // pred_fallthru
        _
    $region36: #{hnet_forward.11} parent=5 // pred_fallthru
      _
    %p379 = scmp.le.s32.totalorder 2, %s10
    // Predicated region
    $region41: #{hnet_forward.11} parent=5 // pred_check
      %p380 = pneg %p379
    $region42: #{hnet_forward.11} parent=5 // pred_check_branch
      %382 = sbr.rel (%p380) target = $region44
    $region43: #{hnet_forward.11} parent=5 // pred_region
      %s383 = ssub.s32 %s10, 2
      // Predicated region
      $region45: #{hnet_forward.11} parent=43 // pred_check
        %p384 = pneg %p128
      $region46: #{hnet_forward.11} parent=43 // pred_check_branch
        %386 = sbr.rel (%p384) target = $region48
      $region47: #{hnet_forward.11} parent=43 // pred_region
        %p387 = scmp.lt.s32.totalorder %s16, 1
        %s388 = scalar_select %p387, %s16, 1
        %s389 = smul.addr %s388, 2
        %s390 = smul.addr %s389, 8
        %s391 = scalar_lea.vmem %s4, %s390
      $region48: #{hnet_forward.11} parent=43 // pred_fallthru
        _
    $region44: #{hnet_forward.11} parent=5 // pred_fallthru
      _
  $region6: #{hnet_forward.11} parent=0 // loop_footer
    %s14 = sadd.s32 1, %s10
  $region7: #{hnet_forward.11} parent=0 // loop_footer_branch
    %9 = sbr.rel target = $region3
  $region8: #{hnet_forward.11} parent=0 // loop_exit
    _

// kernel: hnet_forward.12
$region0: #{hnet_forward.12}
  #allocation0 [shape = 'u32[]', space=smem, size = 0x4, offset = 0x4, fixed_abs, tag = 'smem constant byte address 0x4 - core index']
  #allocation1 [shape = 'u32[144,128]{1,0:T(1,128)}', space=vmem, size = 0x12000, scoped, tag = 'internal scratch']
  %s0 = inlined_call_operand.vmem [shape: bf16[2,256,16], index: 0, kind: input, shape index: {}]
  %s1 = inlined_call_operand.vmem [shape: bf16[32,256], index: 1, kind: input, shape index: {}]
  %s2 = inlined_call_operand.vmem [shape: f32[32,1], index: 2, kind: input, shape index: {}]
  %s3 = inlined_call_operand.vmem [shape: f32[32,1], index: 3, kind: input, shape index: {}]
  %s4 = inlined_call_operand.vmem [shape: f32[2,32,16], index: 4, kind: output, shape index: {}]
  %s5 = sld [smem:[#allocation0]]
  $region49: #{hnet_forward.12} parent=0
    _
  %s7 = ssub.s32 1, %s5
  %s8 = scalar_select 0, %s7, %s5
  loop: start=0, step=1, limit=4
  $region2: #{hnet_forward.12} parent=0 // loop_pre_header
    _
  $region3: #{hnet_forward.12} parent=0 // loop_header
    %s10 = sphi 0, %s14
    %p11 = scmp.ge.s32.totalorder %s10, 4
    %s20 = sphi 0, %s22
    %s23 = sphi 0, %s20
    %s24 = sphi 0, %s23
    %s40 = sphi 0, %s24
    %s44 = sphi 0, %s44
    %s46 = sphi 0, %s44
    %s47 = sphi 0, %s46
    %s61 = sphi 0, %s47
    %s65 = sphi 0, %s65
    %s67 = sphi 0, %s65
    %s68 = sphi 0, %s67
    %s82 = sphi 0, %s68
    %s86 = sphi 0, %s86
    %s88 = sphi 0, %s86
    %s89 = sphi 0, %s88
    %s103 = sphi 0, %s89
    %s109 = sphi 0, %s111
    %s112 = sphi 0, %s109
    %s113 = sphi 0, %s112
    %s129 = sphi 0, %s113
  $region4: #{hnet_forward.12} parent=0 // loop_header_branch
    %13 = sbr.rel (%p11) target = $region8
  $region5: #{hnet_forward.12} parent=0 // loop_body
    %s15 = ssub.s32 %s10, 1
    %s16 = ssub.s32 %s10, 2
    %s17 = sadd.s32 %s10, 1
    %s18 = ssub.s32 %s10, %s17
    %p19 = scmp.eq.s32.totalorder %s18, 0
    %s21 = sadd.s32 %s20, 1
    %s22 = scalar_select %p19, %s20, %s21
    %p25 = pneg %p19
    %p26 = scmp.eq.s32.totalorder %s10, 1
    %p27 = por %p25, %p26
    %p28 = scmp.ne.s32.totalorder %s20, %s23
    %p29 = scmp.eq.s32.totalorder %s10, 0
    %p30 = por %p28, %p29
    %p31 = scmp.ne.s32.totalorder %s20, %s23
    %p32 = scmp.eq.s32.totalorder %s15, 1
    %p33 = por %p31, %p32
    %p34 = scmp.ne.s32.totalorder %s23, %s24
    %p35 = scmp.eq.s32.totalorder %s15, 0
    %p36 = por %p34, %p35
    %p37 = scmp.ne.s32.totalorder %s23, %s24
    %p38 = scmp.eq.s32.totalorder %s16, 1
    %p39 = por %p37, %p38
    %p41 = scmp.ne.s32.totalorder %s24, %s40
    %p42 = scmp.eq.s32.totalorder %s16, 0
    %p43 = por %p41, %p42
    %s45 = sadd.s32 %s44, 1
    %p48 = scmp.eq.s32.totalorder %s10, 1
    %p49 = scmp.ne.s32.totalorder %s44, %s46
    %p50 = scmp.eq.s32.totalorder %s10, 0
    %p51 = por %p49, %p50
    %p52 = scmp.ne.s32.totalorder %s44, %s46
    %p53 = scmp.eq.s32.totalorder %s15, 1
    %p54 = por %p52, %p53
    %p55 = scmp.ne.s32.totalorder %s46, %s47
    %p56 = scmp.eq.s32.totalorder %s15, 0
    %p57 = por %p55, %p56
    %p58 = scmp.ne.s32.totalorder %s46, %s47
    %p59 = scmp.eq.s32.totalorder %s16, 1
    %p60 = por %p58, %p59
    %p62 = scmp.ne.s32.totalorder %s47, %s61
    %p63 = scmp.eq.s32.totalorder %s16, 0
    %p64 = por %p62, %p63
    %s66 = sadd.s32 %s65, 1
    %p69 = scmp.eq.s32.totalorder %s10, 1
    %p70 = scmp.ne.s32.totalorder %s65, %s67
    %p71 = scmp.eq.s32.totalorder %s10, 0
    %p72 = por %p70, %p71
    %p73 = scmp.ne.s32.totalorder %s65, %s67
    %p74 = scmp.eq.s32.totalorder %s15, 1
    %p75 = por %p73, %p74
    %p76 = scmp.ne.s32.totalorder %s67, %s68
    %p77 = scmp.eq.s32.totalorder %s15, 0
    %p78 = por %p76, %p77
    %p79 = scmp.ne.s32.totalorder %s67, %s68
    %p80 = scmp.eq.s32.totalorder %s16, 1
    %p81 = por %p79, %p80
    %p83 = scmp.ne.s32.totalorder %s68, %s82
    %p84 = scmp.eq.s32.totalorder %s16, 0
    %p85 = por %p83, %p84
    %s87 = sadd.s32 %s86, 1
    %p90 = scmp.eq.s32.totalorder %s10, 1
    %p91 = scmp.ne.s32.totalorder %s86, %s88
    %p92 = scmp.eq.s32.totalorder %s10, 0
    %p93 = por %p91, %p92
    %p94 = scmp.ne.s32.totalorder %s86, %s88
    %p95 = scmp.eq.s32.totalorder %s15, 1
    %p96 = por %p94, %p95
    %p97 = scmp.ne.s32.totalorder %s88, %s89
    %p98 = scmp.eq.s32.totalorder %s15, 0
    %p99 = por %p97, %p98
    %p100 = scmp.ne.s32.totalorder %s88, %s89
    %p101 = scmp.eq.s32.totalorder %s16, 1
    %p102 = por %p100, %p101
    %p104 = scmp.ne.s32.totalorder %s89, %s103
    %p105 = scmp.eq.s32.totalorder %s16, 0
    %p106 = por %p104, %p105
    %s107 = ssub.s32 %s10, %s17
    %p108 = scmp.eq.s32.totalorder %s107, 0
    %s110 = sadd.s32 %s109, 1
    %s111 = scalar_select %p108, %s109, %s110
    %p114 = pneg %p108
    %p115 = scmp.eq.s32.totalorder %s10, 1
    %p116 = por %p114, %p115
    %p117 = scmp.ne.s32.totalorder %s109, %s112
    %p118 = scmp.eq.s32.totalorder %s10, 0
    %p119 = por %p117, %p118
    %p120 = scmp.ne.s32.totalorder %s109, %s112
    %p121 = scmp.eq.s32.totalorder %s15, 1
    %p122 = por %p120, %p121
    %p123 = scmp.ne.s32.totalorder %s112, %s113
    %p124 = scmp.eq.s32.totalorder %s15, 0
    %p125 = por %p123, %p124
    %p126 = scmp.ne.s32.totalorder %s112, %s113
    %p127 = scmp.eq.s32.totalorder %s16, 1
    %p128 = por %p126, %p127
    %p130 = scmp.ne.s32.totalorder %s113, %s129
    %p131 = scmp.eq.s32.totalorder %s16, 0
    %p132 = por %p130, %p131
    %p133 = scmp.le.s32.totalorder 1, %s10
    %p134 = scmp.lt.s32.totalorder %s10, 3
    %p135 = pnand %p133, %p134
    %p136 = pneg %p135
    // Predicated region
    $region9: #{hnet_forward.12} parent=5 // pred_check
      _
    $region10: #{hnet_forward.12} parent=5 // pred_check_branch
      %138 = sbr.rel (%p135) target = $region12
    $region11: #{hnet_forward.12} parent=5 // pred_region
      %s139 = ssub.s32 %s10, 1
      // Predicated region
      $region13: #{hnet_forward.12} parent=11 // pred_check
        %p140 = pneg %p57
      $region14: #{hnet_forward.12} parent=11 // pred_check_branch
        %142 = sbr.rel (%p140) target = $region16
      $region15: #{hnet_forward.12} parent=11 // pred_region
        _
      $region16: #{hnet_forward.12} parent=11 // pred_fallthru
        _
      // Predicated region
      $region17: #{hnet_forward.12} parent=11 // pred_check
        %p143 = pneg %p78
      $region18: #{hnet_forward.12} parent=11 // pred_check_branch
        %145 = sbr.rel (%p143) target = $region20
      $region19: #{hnet_forward.12} parent=11 // pred_region
        _
      $region20: #{hnet_forward.12} parent=11 // pred_fallthru
        _
      // Predicated region
      $region21: #{hnet_forward.12} parent=11 // pred_check
        %p146 = pneg %p99
      $region22: #{hnet_forward.12} parent=11 // pred_check_branch
        %148 = sbr.rel (%p146) target = $region24
      $region23: #{hnet_forward.12} parent=11 // pred_region
        _
      $region24: #{hnet_forward.12} parent=11 // pred_fallthru
        _
    $region12: #{hnet_forward.12} parent=5 // pred_fallthru
      _
    %p149 = scmp.lt.s32.totalorder %s10, 2
    // Predicated region
    $region25: #{hnet_forward.12} parent=5 // pred_check
      %p150 = pneg %p149
    $region26: #{hnet_forward.12} parent=5 // pred_check_branch
      %152 = sbr.rel (%p150) target = $region28
    $region27: #{hnet_forward.12} parent=5 // pred_region
      // Predicated region
      $region29: #{hnet_forward.12} parent=27 // pred_check
        %p153 = pneg %p30
      $region30: #{hnet_forward.12} parent=27 // pred_check_branch
        %155 = sbr.rel (%p153) target = $region32
      $region31: #{hnet_forward.12} parent=27 // pred_region
        %p156 = scmp.lt.s32.totalorder %s10, 1
        %s157 = scalar_select %p156, %s10, 1
        %s158 = smul.addr %s157, 32
        %s159 = smul.addr %s158, 4
        %s160 = scalar_lea.vmem %s0, %s159
      $region32: #{hnet_forward.12} parent=27 // pred_fallthru
        _
    $region28: #{hnet_forward.12} parent=5 // pred_fallthru
      _
    %p161 = scmp.le.s32.totalorder 1, %s10
    %p162 = scmp.lt.s32.totalorder %s10, 3
    %p163 = pnand %p161, %p162
    %p164 = pneg %p163
    // Predicated region
    $region33: #{hnet_forward.12} parent=5 // pred_check
      _
    $region34: #{hnet_forward.12} parent=5 // pred_check_branch
      %166 = sbr.rel (%p163) target = $region36
    $region35: #{hnet_forward.12} parent=5 // pred_region
      %s167 = ssub.s32 %s10, 1
      %p168 = scmp.lt.s32.totalorder %s15, 1
      %s169 = scalar_select %p168, %s15, 1
      %s170 = smul.addr %s169, 32
      %s171 = smul.addr %s170, 4
      %s172 = scalar_lea.vmem %s0, %s171
      %p173 = pneg %p36
      %p174 = pneg %p33
      %p175 = pneg %p57
      %p176 = pneg %p54
      %p177 = pneg %p78
      %p178 = pneg %p75
      %p179 = pneg %p99
      %p180 = pneg %p96
      %p181 = pneg %p125
      %p182 = pneg %p122
      %p183 = scmp.lt.s32.totalorder %s15, 1
      %s184 = scalar_select %p183, %s15, 1
      %s185 = smul.addr %s184, 4
      %s186 = smul.addr %s185, 8
      %s187 = scalar_lea.vmem %s4, %s186
      %p188 = scmp.lt.s32.totalorder %s15, 1
      %s189 = scalar_select %p188, %s15, 1
      %s190 = smul.addr %s189, 32
      %s191 = smul.addr %s190, 4
      %s192 = scalar_lea.vmem %s0, %s191
      %p193 = scmp.lt.s32.totalorder %s15, 1
      %s194 = scalar_select %p193, %s15, 1
      %s195 = smul.addr %s194, 4
      %s196 = smul.addr %s195, 8
      %s197 = scalar_lea.vmem %s4, %s196
      %v199 = vld [vmem:[%s1] sm:$0xff]
      %v200 = vld [vmem:[%s1 + $0x8] sm:$0xff]
      %v201 = vld [vmem:[%s1 + $0x10] sm:$0xff]
      %v202 = vld [vmem:[%s1 + $0x18] sm:$0xff]
      %v203 = vld [vmem:[%s192] sm:$0xf]
      %v204 = vld [vmem:[%s192 + $0x4] sm:$0xf]
      %v205 = vld [vmem:[%s192 + $0x8] sm:$0xf]
      %v206 = vld [vmem:[%s192 + $0xc] sm:$0xf]
      %v207 = vld [vmem:[%s192 + $0x10] sm:$0xf]
      %v208 = vld [vmem:[%s192 + $0x14] sm:$0xf]
      %v209 = vld [vmem:[%s192 + $0x18] sm:$0xf]
      %v210 = vld [vmem:[%s192 + $0x1c] sm:$0xf]
      %v211 = vld [vmem:[%s192 + $0x20] sm:$0xf]
      %v212 = vld [vmem:[%s192 + $0x24] sm:$0xf]
      %v213 = vld [vmem:[%s192 + $0x28] sm:$0xf]
      %v214 = vld [vmem:[%s192 + $0x2c] sm:$0xf]
      %v215 = vld [vmem:[%s192 + $0x30] sm:$0xf]
      %v216 = vld [vmem:[%s192 + $0x34] sm:$0xf]
      %v217 = vld [vmem:[%s192 + $0x38] sm:$0xf]
      %v218 = vld [vmem:[%s192 + $0x3c] sm:$0xf]
      %v219 = vld [vmem:[%s192 + $0x40] sm:$0xf]
      %v220 = vld [vmem:[%s192 + $0x44] sm:$0xf]
      %v221 = vld [vmem:[%s192 + $0x48] sm:$0xf]
      %v222 = vld [vmem:[%s192 + $0x4c] sm:$0xf]
      %v223 = vld [vmem:[%s192 + $0x50] sm:$0xf]
      %v224 = vld [vmem:[%s192 + $0x54] sm:$0xf]
      %v225 = vld [vmem:[%s192 + $0x58] sm:$0xf]
      %v226 = vld [vmem:[%s192 + $0x5c] sm:$0xf]
      %v227 = vld [vmem:[%s192 + $0x60] sm:$0xf]
      %v228 = vld [vmem:[%s192 + $0x64] sm:$0xf]
      %v229 = vld [vmem:[%s192 + $0x68] sm:$0xf]
      %v230 = vld [vmem:[%s192 + $0x6c] sm:$0xf]
      %v231 = vld [vmem:[%s192 + $0x70] sm:$0xf]
      %v232 = vld [vmem:[%s192 + $0x74] sm:$0xf]
      %v233 = vld [vmem:[%s192 + $0x78] sm:$0xf]
      %v234 = vld [vmem:[%s192 + $0x7c] sm:$0xf]
      %v239 = vunpack.c.l.b16 %v199
      %v240 = vunpack.c.h.b16 %v199
      %v241 = vunpack.c.l.b16 %v200
      %v242 = vunpack.c.h.b16 %v200
      %v243 = vunpack.c.l.b16 %v201
      %v244 = vunpack.c.h.b16 %v201
      %v245 = vunpack.c.l.b16 %v202
      %v246 = vunpack.c.h.b16 %v202
      %v247 = vpack.c.b16 %v241, %v239
      %v248 = vpack.c.b16 %v242, %v240
      %v249 = vpack.c.b16 %v245, %v243
      %v250 = vpack.c.b16 %v246, %v244
      %v287 = vunpack.c.l.b16 %v203
      %v288 = vunpack.c.l.b16 %v204
      %v289 = vunpack.c.l.b16 %v205
      %v290 = vunpack.c.l.b16 %v206
      %v291 = vunpack.c.l.b16 %v207
      %v292 = vunpack.c.l.b16 %v208
      %v293 = vunpack.c.l.b16 %v209
      %v294 = vunpack.c.l.b16 %v210
      %v295 = vunpack.c.l.b16 %v211
      %v296 = vunpack.c.l.b16 %v212
      %v297 = vunpack.c.l.b16 %v213
      %v298 = vunpack.c.l.b16 %v214
      %v299 = vunpack.c.l.b16 %v215
      %v300 = vunpack.c.l.b16 %v216
      %v301 = vunpack.c.l.b16 %v217
      %v302 = vunpack.c.l.b16 %v218
      %v303 = vunpack.c.l.b16 %v219
      %v304 = vunpack.c.l.b16 %v220
      %v305 = vunpack.c.l.b16 %v221
      %v306 = vunpack.c.l.b16 %v222
      %v307 = vunpack.c.l.b16 %v223
      %v308 = vunpack.c.l.b16 %v224
      %v309 = vunpack.c.l.b16 %v225
      %v310 = vunpack.c.l.b16 %v226
      %v311 = vunpack.c.l.b16 %v227
      %v312 = vunpack.c.l.b16 %v228
      %v313 = vunpack.c.l.b16 %v229
      %v314 = vunpack.c.l.b16 %v230
      %v315 = vunpack.c.l.b16 %v231
      %v316 = vunpack.c.l.b16 %v232
      %v317 = vunpack.c.l.b16 %v233
      %v318 = vunpack.c.l.b16 %v234
      %v319 = vpack.c.b16 %v288, %v287
      %v320 = vpack.c.b16 %v290, %v289
      %v321 = vpack.c.b16 %v292, %v291
      %v322 = vpack.c.b16 %v294, %v293
      %v323 = vpack.c.b16 %v296, %v295
      %v324 = vpack.c.b16 %v298, %v297
      %v325 = vpack.c.b16 %v300, %v299
      %v326 = vpack.c.b16 %v302, %v301
      %v327 = vpack.c.b16 %v304, %v303
      %v328 = vpack.c.b16 %v306, %v305
      %v329 = vpack.c.b16 %v308, %v307
      %v330 = vpack.c.b16 %v310, %v309
      %v331 = vpack.c.b16 %v312, %v311
      %v332 = vpack.c.b16 %v314, %v313
      %v333 = vpack.c.b16 %v316, %v315
      %v334 = vpack.c.b16 %v318, %v317
      %351 = vmatprep.subr.bf16.mxu0 0
      %352 = vmatpush1.bf16.msra.mxu0 %v319
      %353 = vmatprep.subr.bf16.mxu0 0
      %354 = vmatpush1.bf16.msra.mxu0 %v320
      %355 = vmatprep.subr.bf16.mxu0 0
      %356 = vmatpush1.bf16.msra.mxu0 %v321
      %357 = vmatprep.subr.bf16.mxu0 0
      %358 = vmatpush1.bf16.msra.mxu0 %v322
      %359 = vmatprep.subr.bf16.mxu0 0
      %360 = vmatpush1.bf16.msra.mxu0 %v323
      %361 = vmatprep.subr.bf16.mxu0 0
      %362 = vmatpush1.bf16.msra.mxu0 %v324
      %363 = vmatprep.subr.bf16.mxu0 0
      %364 = vmatpush1.bf16.msra.mxu0 %v325
      %365 = vmatprep.subr.bf16.mxu0 0
      %366 = vmatpush1.bf16.msra.mxu0 %v326
      %367 = vmatprep.subr.bf16.mxu0 0
      %368 = vmatpush1.bf16.msra.mxu0 %v327
      %369 = vmatprep.subr.bf16.mxu0 0
      %370 = vmatpush1.bf16.msra.mxu0 %v328
      %371 = vmatprep.subr.bf16.mxu0 0
      %372 = vmatpush1.bf16.msra.mxu0 %v329
      %373 = vmatprep.subr.bf16.mxu0 0
      %374 = vmatpush1.bf16.msra.mxu0 %v330
      %375 = vmatprep.subr.bf16.mxu0 0
      %376 = vmatpush1.bf16.msra.mxu0 %v331
      %377 = vmatprep.subr.bf16.mxu0 0
      %378 = vmatpush1.bf16.msra.mxu0 %v332
      %379 = vmatprep.subr.bf16.mxu0 0
      %380 = vmatpush1.bf16.msra.mxu0 %v333
      %381 = vmatprep.subr.bf16.mxu0 0
      %382 = vmatpush1.bf16.msra.mxu0 %v334
      %383 = vmatprep.mubr.bf16.mxu0 %v248
      %384 = vmatmul.mubr.bf16.gmra.mrb[0].mxu0 %v247
      %v385 = vpop.f32.mrb[0].mxu0
      %v386 = vadd.f32 0.0, %v385
      %v387 = vpop.f32.mrb[0].mxu0
      %v388 = vpop.f32.mrb[0].mxu0
      %v389 = vadd.f32 0.0, %v388
      %v390 = vpop.f32.mrb[0].mxu0
      %391 = vmatprep.mubr.bf16.mxu0 %v250
      %392 = vmatmul.mubr.bf16.gmra.mrb[0].mxu0 %v249
      %v393 = vpop.f32.mrb[0].mxu0
      %v394 = vadd.f32 0.0, %v393
      %v395 = vpop.f32.mrb[0].mxu0
      %v396 = vpop.f32.mrb[0].mxu0
      %v397 = vadd.f32 0.0, %v396
      %v398 = vpop.f32.mrb[0].mxu0
      %399 = vdwg.mxu0
      %vm400 = vcmask 130048
      %v401 = vsel %vm400, %v386, 0.0
      %402 = vadd.xlane.f32.xlu0 %v401
      %v403 = vpop.xlane.xlu0 %402
      %v404 = vsel %vm400, %v389, 0.0
      %405 = vadd.xlane.f32.xlu0 %v404
      %v406 = vpop.xlane.xlu0 %405
      %v407 = vsel %vm400, %v394, 0.0
      %408 = vadd.xlane.f32.xlu0 %v407
      %v409 = vpop.xlane.xlu0 %408
      %v410 = vsel %vm400, %v397, 0.0
      %411 = vadd.xlane.f32.xlu0 %v410
      %v412 = vpop.xlane.xlu0 %411
      %v413 = vmul.f32 %v403, 0.0625
      %v414 = vmul.f32 %v406, 0.0625
      %v415 = vmul.f32 %v409, 0.0625
      %v416 = vmul.f32 %v412, 0.0625
      %v417 = vsub.f32 %v386, %v413
      %v418 = vsub.f32 %v389, %v414
      %v419 = vsub.f32 %v394, %v415
      %v420 = vsub.f32 %v397, %v416
      %v421 = vmul.f32 %v417, %v417
      %v422 = vmul.f32 %v418, %v418
      %v423 = vmul.f32 %v419, %v419
      %v424 = vmul.f32 %v420, %v420
      %v425 = vsel %vm400, %v421, 0.0
      %426 = vadd.xlane.f32.xlu0 %v425
      %v427 = vpop.xlane.xlu0 %426
      %v428 = vsel %vm400, %v422, 0.0
      %429 = vadd.xlane.f32.xlu0 %v428
      %v430 = vpop.xlane.xlu0 %429
      %v431 = vsel %vm400, %v423, 0.0
      %432 = vadd.xlane.f32.xlu0 %v431
      %v433 = vpop.xlane.xlu0 %432
      %v434 = vsel %vm400, %v424, 0.0
      %435 = vadd.xlane.f32.xlu0 %v434
      %v436 = vpop.xlane.xlu0 %435
      %v437 = vmul.f32 %v427, 0.0625
      %v438 = vmul.f32 %v430, 0.0625
      %v439 = vmul.f32 %v433, 0.0625
      %v440 = vmul.f32 %v436, 0.0625
      %v441 = vadd.f32 %v437, 1e-05
      %v442 = vadd.f32 %v438, 1e-05
      %v443 = vadd.f32 %v439, 1e-05
      %v444 = vadd.f32 %v440, 1e-05
      %v445 = vrsqrt.pop %v441
      %v446 = vrsqrt.pop %v442
      %v447 = vrsqrt.pop %v443
      %v448 = vrsqrt.pop %v444
      %v449 = vld [vmem:[%s2] sm:$0xff]
      %v450 = vld [vmem:[%s2 + $0x8] sm:$0xff]
      %v451 = vld [vmem:[%s2 + $0x10] sm:$0xff]
      %v452 = vld [vmem:[%s2 + $0x18] sm:$0xff]
      %v453 = vmul.f32 %v445, %v449
      %v454 = vmul.f32 %v446, %v450
      %v455 = vmul.f32 %v447, %v451
      %v456 = vmul.f32 %v448, %v452
      %v457 = vld [vmem:[%s3] sm:$0xff]
      %v458 = vld [vmem:[%s3 + $0x8] sm:$0xff]
      %v459 = vld [vmem:[%s3 + $0x10] sm:$0xff]
      %v460 = vld [vmem:[%s3 + $0x18] sm:$0xff]
      %462 = vset.pattern.permute.xlu0 0
      %463 = vperm.xlu0 %462, %v453
      %v464 = vpop.permute.xlu0 %463
      %467 = vset.pattern.permute.xlu0 0
      %468 = vperm.xlu0 %467, %v454
      %v469 = vpop.permute.xlu0 %468
      %472 = vset.pattern.permute.xlu0 0
      %473 = vperm.xlu0 %472, %v455
      %v474 = vpop.permute.xlu0 %473
      %477 = vset.pattern.permute.xlu0 0
      %478 = vperm.xlu0 %477, %v456
      %v479 = vpop.permute.xlu0 %478
      %v481 = vmul.f32 %v417, %v464
      %v482 = vmul.f32 %v418, %v469
      %v483 = vmul.f32 %v419, %v474
      %v484 = vmul.f32 %v420, %v479
      %486 = vset.pattern.permute.xlu0 0
      %487 = vperm.xlu0 %486, %v457
      %v488 = vpop.permute.xlu0 %487
      %491 = vset.pattern.permute.xlu0 0
      %492 = vperm.xlu0 %491, %v458
      %v493 = vpop.permute.xlu0 %492
      %496 = vset.pattern.permute.xlu0 0
      %497 = vperm.xlu0 %496, %v459
      %v498 = vpop.permute.xlu0 %497
      %501 = vset.pattern.permute.xlu0 0
      %502 = vperm.xlu0 %501, %v460
      %v503 = vpop.permute.xlu0 %502
      %v505 = vadd.f32 %v481, %v488
      %v506 = vadd.f32 %v482, %v493
      %v507 = vadd.f32 %v483, %v498
      %v508 = vadd.f32 %v484, %v503
      %v509 = vmax.f32 %v505, 0.0
      %v510 = vmax.f32 %v506, 0.0
      %v511 = vmax.f32 %v507, 0.0
      %v512 = vmax.f32 %v508, 0.0
      %513 = vst.msk [vmem:[%s197] sm:$0xff] %vm400, %v509
      %514 = vst.msk [vmem:[%s197 + $0x8] sm:$0xff] %vm400, %v510
      %515 = vst.msk [vmem:[%s197 + $0x10] sm:$0xff] %vm400, %v511
      %516 = vst.msk [vmem:[%s197 + $0x18] sm:$0xff] %vm400, %v512
      %p517 = scmp.lt.s32.totalorder %s15, 1
      %s518 = scalar_select %p517, %s15, 1
      %s519 = smul.addr %s518, 4
      %s520 = smul.addr %s519, 8
      %s521 = scalar_lea.vmem %s4, %s520
      // Predicated region
      $region37: #{hnet_forward.12} parent=35 // pred_check
        %p522 = pneg %p122
      $region38: #{hnet_forward.12} parent=35 // pred_check_branch
        %524 = sbr.rel (%p522) target = $region40
      $region39: #{hnet_forward.12} parent=35 // pred_region
        _
      $region40: #{hnet_forward.12} parent=35 // pred_fallthru
        _
    $region36: #{hnet_forward.12} parent=5 // pred_fallthru
      _
    %p525 = scmp.le.s32.totalorder 2, %s10
    // Predicated region
    $region41: #{hnet_forward.12} parent=5 // pred_check
      %p526 = pneg %p525
    $region42: #{hnet_forward.12} parent=5 // pred_check_branch
      %528 = sbr.rel (%p526) target = $region44
    $region43: #{hnet_forward.12} parent=5 // pred_region
      %s529 = ssub.s32 %s10, 2
      // Predicated region
      $region45: #{hnet_forward.12} parent=43 // pred_check
        %p530 = pneg %p128
      $region46: #{hnet_forward.12} parent=43 // pred_check_branch
        %532 = sbr.rel (%p530) target = $region48
      $region47: #{hnet_forward.12} parent=43 // pred_region
        %p533 = scmp.lt.s32.totalorder %s16, 1
        %s534 = scalar_select %p533, %s16, 1
        %s535 = smul.addr %s534, 4
        %s536 = smul.addr %s535, 8
        %s537 = scalar_lea.vmem %s4, %s536
      $region48: #{hnet_forward.12} parent=43 // pred_fallthru
        _
    $region44: #{hnet_forward.12} parent=5 // pred_fallthru
      _
  $region6: #{hnet_forward.12} parent=0 // loop_footer
    %s14 = sadd.s32 1, %s10
  $region7: #{hnet_forward.12} parent=0 // loop_footer_branch
    %9 = sbr.rel target = $region3
  $region8: #{hnet_forward.12} parent=0 // loop_exit
    _

// kernel: hnet_forward.13
$region0: #{hnet_forward.13}
  #allocation0 [shape = 'u32[]', space=smem, size = 0x4, offset = 0x4, fixed_abs, tag = 'smem constant byte address 0x4 - core index']
  #allocation1 [shape = 'u32[144,128]{1,0:T(1,128)}', space=vmem, size = 0x12000, scoped, tag = 'internal scratch']
  %s0 = inlined_call_operand.vmem [shape: bf16[2,288,16], index: 0, kind: input, shape index: {}]
  %s1 = inlined_call_operand.vmem [shape: bf16[32,288], index: 1, kind: input, shape index: {}]
  %s2 = inlined_call_operand.vmem [shape: f32[32,1], index: 2, kind: input, shape index: {}]
  %s3 = inlined_call_operand.vmem [shape: f32[32,1], index: 3, kind: input, shape index: {}]
  %s4 = inlined_call_operand.vmem [shape: f32[2,32,16], index: 4, kind: output, shape index: {}]
  %s5 = sld [smem:[#allocation0]]
  $region49: #{hnet_forward.13} parent=0
    _
  %s7 = ssub.s32 1, %s5
  %s8 = scalar_select 0, %s7, %s5
  loop: start=0, step=1, limit=4
  $region2: #{hnet_forward.13} parent=0 // loop_pre_header
    _
  $region3: #{hnet_forward.13} parent=0 // loop_header
    %s10 = sphi 0, %s14
    %p11 = scmp.ge.s32.totalorder %s10, 4
    %s20 = sphi 0, %s22
    %s23 = sphi 0, %s20
    %s24 = sphi 0, %s23
    %s40 = sphi 0, %s24
    %s44 = sphi 0, %s44
    %s46 = sphi 0, %s44
    %s47 = sphi 0, %s46
    %s61 = sphi 0, %s47
    %s65 = sphi 0, %s65
    %s67 = sphi 0, %s65
    %s68 = sphi 0, %s67
    %s82 = sphi 0, %s68
    %s86 = sphi 0, %s86
    %s88 = sphi 0, %s86
    %s89 = sphi 0, %s88
    %s103 = sphi 0, %s89
    %s109 = sphi 0, %s111
    %s112 = sphi 0, %s109
    %s113 = sphi 0, %s112
    %s129 = sphi 0, %s113
  $region4: #{hnet_forward.13} parent=0 // loop_header_branch
    %13 = sbr.rel (%p11) target = $region8
  $region5: #{hnet_forward.13} parent=0 // loop_body
    %s15 = ssub.s32 %s10, 1
    %s16 = ssub.s32 %s10, 2
    %s17 = sadd.s32 %s10, 1
    %s18 = ssub.s32 %s10, %s17
    %p19 = scmp.eq.s32.totalorder %s18, 0
    %s21 = sadd.s32 %s20, 1
    %s22 = scalar_select %p19, %s20, %s21
    %p25 = pneg %p19
    %p26 = scmp.eq.s32.totalorder %s10, 1
    %p27 = por %p25, %p26
    %p28 = scmp.ne.s32.totalorder %s20, %s23
    %p29 = scmp.eq.s32.totalorder %s10, 0
    %p30 = por %p28, %p29
    %p31 = scmp.ne.s32.totalorder %s20, %s23
    %p32 = scmp.eq.s32.totalorder %s15, 1
    %p33 = por %p31, %p32
    %p34 = scmp.ne.s32.totalorder %s23, %s24
    %p35 = scmp.eq.s32.totalorder %s15, 0
    %p36 = por %p34, %p35
    %p37 = scmp.ne.s32.totalorder %s23, %s24
    %p38 = scmp.eq.s32.totalorder %s16, 1
    %p39 = por %p37, %p38
    %p41 = scmp.ne.s32.totalorder %s24, %s40
    %p42 = scmp.eq.s32.totalorder %s16, 0
    %p43 = por %p41, %p42
    %s45 = sadd.s32 %s44, 1
    %p48 = scmp.eq.s32.totalorder %s10, 1
    %p49 = scmp.ne.s32.totalorder %s44, %s46
    %p50 = scmp.eq.s32.totalorder %s10, 0
    %p51 = por %p49, %p50
    %p52 = scmp.ne.s32.totalorder %s44, %s46
    %p53 = scmp.eq.s32.totalorder %s15, 1
    %p54 = por %p52, %p53
    %p55 = scmp.ne.s32.totalorder %s46, %s47
    %p56 = scmp.eq.s32.totalorder %s15, 0
    %p57 = por %p55, %p56
    %p58 = scmp.ne.s32.totalorder %s46, %s47
    %p59 = scmp.eq.s32.totalorder %s16, 1
    %p60 = por %p58, %p59
    %p62 = scmp.ne.s32.totalorder %s47, %s61
    %p63 = scmp.eq.s32.totalorder %s16, 0
    %p64 = por %p62, %p63
    %s66 = sadd.s32 %s65, 1
    %p69 = scmp.eq.s32.totalorder %s10, 1
    %p70 = scmp.ne.s32.totalorder %s65, %s67
    %p71 = scmp.eq.s32.totalorder %s10, 0
    %p72 = por %p70, %p71
    %p73 = scmp.ne.s32.totalorder %s65, %s67
    %p74 = scmp.eq.s32.totalorder %s15, 1
    %p75 = por %p73, %p74
    %p76 = scmp.ne.s32.totalorder %s67, %s68
    %p77 = scmp.eq.s32.totalorder %s15, 0
    %p78 = por %p76, %p77
    %p79 = scmp.ne.s32.totalorder %s67, %s68
    %p80 = scmp.eq.s32.totalorder %s16, 1
    %p81 = por %p79, %p80
    %p83 = scmp.ne.s32.totalorder %s68, %s82
    %p84 = scmp.eq.s32.totalorder %s16, 0
    %p85 = por %p83, %p84
    %s87 = sadd.s32 %s86, 1
    %p90 = scmp.eq.s32.totalorder %s10, 1
    %p91 = scmp.ne.s32.totalorder %s86, %s88
    %p92 = scmp.eq.s32.totalorder %s10, 0
    %p93 = por %p91, %p92
    %p94 = scmp.ne.s32.totalorder %s86, %s88
    %p95 = scmp.eq.s32.totalorder %s15, 1
    %p96 = por %p94, %p95
    %p97 = scmp.ne.s32.totalorder %s88, %s89
    %p98 = scmp.eq.s32.totalorder %s15, 0
    %p99 = por %p97, %p98
    %p100 = scmp.ne.s32.totalorder %s88, %s89
    %p101 = scmp.eq.s32.totalorder %s16, 1
    %p102 = por %p100, %p101
    %p104 = scmp.ne.s32.totalorder %s89, %s103
    %p105 = scmp.eq.s32.totalorder %s16, 0
    %p106 = por %p104, %p105
    %s107 = ssub.s32 %s10, %s17
    %p108 = scmp.eq.s32.totalorder %s107, 0
    %s110 = sadd.s32 %s109, 1
    %s111 = scalar_select %p108, %s109, %s110
    %p114 = pneg %p108
    %p115 = scmp.eq.s32.totalorder %s10, 1
    %p116 = por %p114, %p115
    %p117 = scmp.ne.s32.totalorder %s109, %s112
    %p118 = scmp.eq.s32.totalorder %s10, 0
    %p119 = por %p117, %p118
    %p120 = scmp.ne.s32.totalorder %s109, %s112
    %p121 = scmp.eq.s32.totalorder %s15, 1
    %p122 = por %p120, %p121
    %p123 = scmp.ne.s32.totalorder %s112, %s113
    %p124 = scmp.eq.s32.totalorder %s15, 0
    %p125 = por %p123, %p124
    %p126 = scmp.ne.s32.totalorder %s112, %s113
    %p127 = scmp.eq.s32.totalorder %s16, 1
    %p128 = por %p126, %p127
    %p130 = scmp.ne.s32.totalorder %s113, %s129
    %p131 = scmp.eq.s32.totalorder %s16, 0
    %p132 = por %p130, %p131
    %p133 = scmp.le.s32.totalorder 1, %s10
    %p134 = scmp.lt.s32.totalorder %s10, 3
    %p135 = pnand %p133, %p134
    %p136 = pneg %p135
    // Predicated region
    $region9: #{hnet_forward.13} parent=5 // pred_check
      _
    $region10: #{hnet_forward.13} parent=5 // pred_check_branch
      %138 = sbr.rel (%p135) target = $region12
    $region11: #{hnet_forward.13} parent=5 // pred_region
      %s139 = ssub.s32 %s10, 1
      // Predicated region
      $region13: #{hnet_forward.13} parent=11 // pred_check
        %p140 = pneg %p57
      $region14: #{hnet_forward.13} parent=11 // pred_check_branch
        %142 = sbr.rel (%p140) target = $region16
      $region15: #{hnet_forward.13} parent=11 // pred_region
        _
      $region16: #{hnet_forward.13} parent=11 // pred_fallthru
        _
      // Predicated region
      $region17: #{hnet_forward.13} parent=11 // pred_check
        %p143 = pneg %p78
      $region18: #{hnet_forward.13} parent=11 // pred_check_branch
        %145 = sbr.rel (%p143) target = $region20
      $region19: #{hnet_forward.13} parent=11 // pred_region
        _
      $region20: #{hnet_forward.13} parent=11 // pred_fallthru
        _
      // Predicated region
      $region21: #{hnet_forward.13} parent=11 // pred_check
        %p146 = pneg %p99
      $region22: #{hnet_forward.13} parent=11 // pred_check_branch
        %148 = sbr.rel (%p146) target = $region24
      $region23: #{hnet_forward.13} parent=11 // pred_region
        _
      $region24: #{hnet_forward.13} parent=11 // pred_fallthru
        _
    $region12: #{hnet_forward.13} parent=5 // pred_fallthru
      _
    %p149 = scmp.lt.s32.totalorder %s10, 2
    // Predicated region
    $region25: #{hnet_forward.13} parent=5 // pred_check
      %p150 = pneg %p149
    $region26: #{hnet_forward.13} parent=5 // pred_check_branch
      %152 = sbr.rel (%p150) target = $region28
    $region27: #{hnet_forward.13} parent=5 // pred_region
      // Predicated region
      $region29: #{hnet_forward.13} parent=27 // pred_check
        %p153 = pneg %p30
      $region30: #{hnet_forward.13} parent=27 // pred_check_branch
        %155 = sbr.rel (%p153) target = $region32
      $region31: #{hnet_forward.13} parent=27 // pred_region
        %p156 = scmp.lt.s32.totalorder %s10, 1
        %s157 = scalar_select %p156, %s10, 1
        %s158 = smul.addr %s157, 36
        %s159 = smul.addr %s158, 4
        %s160 = scalar_lea.vmem %s0, %s159
      $region32: #{hnet_forward.13} parent=27 // pred_fallthru
        _
    $region28: #{hnet_forward.13} parent=5 // pred_fallthru
      _
    %p161 = scmp.le.s32.totalorder 1, %s10
    %p162 = scmp.lt.s32.totalorder %s10, 3
    %p163 = pnand %p161, %p162
    %p164 = pneg %p163
    // Predicated region
    $region33: #{hnet_forward.13} parent=5 // pred_check
      _
    $region34: #{hnet_forward.13} parent=5 // pred_check_branch
      %166 = sbr.rel (%p163) target = $region36
    $region35: #{hnet_forward.13} parent=5 // pred_region
      %s167 = ssub.s32 %s10, 1
      %p168 = scmp.lt.s32.totalorder %s15, 1
      %s169 = scalar_select %p168, %s15, 1
      %s170 = smul.addr %s169, 36
      %s171 = smul.addr %s170, 4
      %s172 = scalar_lea.vmem %s0, %s171
      %p173 = pneg %p36
      %p174 = pneg %p33
      %p175 = pneg %p57
      %p176 = pneg %p54
      %p177 = pneg %p78
      %p178 = pneg %p75
      %p179 = pneg %p99
      %p180 = pneg %p96
      %p181 = pneg %p125
      %p182 = pneg %p122
      %p183 = scmp.lt.s32.totalorder %s15, 1
      %s184 = scalar_select %p183, %s15, 1
      %s185 = smul.addr %s184, 4
      %s186 = smul.addr %s185, 8
      %s187 = scalar_lea.vmem %s4, %s186
      %p188 = scmp.lt.s32.totalorder %s15, 1
      %s189 = scalar_select %p188, %s15, 1
      %s190 = smul.addr %s189, 36
      %s191 = smul.addr %s190, 4
      %s192 = scalar_lea.vmem %s0, %s191
      %p193 = scmp.lt.s32.totalorder %s15, 1
      %s194 = scalar_select %p193, %s15, 1
      %s195 = smul.addr %s194, 4
      %s196 = smul.addr %s195, 8
      %s197 = scalar_lea.vmem %s4, %s196
      %v199 = vld [vmem:[%s1] sm:$0xff]
      %v200 = vld [vmem:[%s1 + $0x8] sm:$0xf]
      %v201 = vld [vmem:[%s1 + $0xc] sm:$0xff]
      %v202 = vld [vmem:[%s1 + $0x14] sm:$0xf]
      %v203 = vld [vmem:[%s1 + $0x18] sm:$0xff]
      %v204 = vld [vmem:[%s1 + $0x20] sm:$0xf]
      %v205 = vld [vmem:[%s1 + $0x24] sm:$0xff]
      %v206 = vld [vmem:[%s1 + $0x2c] sm:$0xf]
      %v207 = vld [vmem:[%s192] sm:$0xf]
      %v208 = vld [vmem:[%s192 + $0x4] sm:$0xf]
      %v209 = vld [vmem:[%s192 + $0x8] sm:$0xf]
      %v210 = vld [vmem:[%s192 + $0xc] sm:$0xf]
      %v211 = vld [vmem:[%s192 + $0x10] sm:$0xf]
      %v212 = vld [vmem:[%s192 + $0x14] sm:$0xf]
      %v213 = vld [vmem:[%s192 + $0x18] sm:$0xf]
      %v214 = vld [vmem:[%s192 + $0x1c] sm:$0xf]
      %v215 = vld [vmem:[%s192 + $0x20] sm:$0xf]
      %v216 = vld [vmem:[%s192 + $0x24] sm:$0xf]
      %v217 = vld [vmem:[%s192 + $0x28] sm:$0xf]
      %v218 = vld [vmem:[%s192 + $0x2c] sm:$0xf]
      %v219 = vld [vmem:[%s192 + $0x30] sm:$0xf]
      %v220 = vld [vmem:[%s192 + $0x34] sm:$0xf]
      %v221 = vld [vmem:[%s192 + $0x38] sm:$0xf]
      %v222 = vld [vmem:[%s192 + $0x3c] sm:$0xf]
      %v223 = vld [vmem:[%s192 + $0x40] sm:$0xf]
      %v224 = vld [vmem:[%s192 + $0x44] sm:$0xf]
      %v225 = vld [vmem:[%s192 + $0x48] sm:$0xf]
      %v226 = vld [vmem:[%s192 + $0x4c] sm:$0xf]
      %v227 = vld [vmem:[%s192 + $0x50] sm:$0xf]
      %v228 = vld [vmem:[%s192 + $0x54] sm:$0xf]
      %v229 = vld [vmem:[%s192 + $0x58] sm:$0xf]
      %v230 = vld [vmem:[%s192 + $0x5c] sm:$0xf]
      %v231 = vld [vmem:[%s192 + $0x60] sm:$0xf]
      %v232 = vld [vmem:[%s192 + $0x64] sm:$0xf]
      %v233 = vld [vmem:[%s192 + $0x68] sm:$0xf]
      %v234 = vld [vmem:[%s192 + $0x6c] sm:$0xf]
      %v235 = vld [vmem:[%s192 + $0x70] sm:$0xf]
      %v236 = vld [vmem:[%s192 + $0x74] sm:$0xf]
      %v237 = vld [vmem:[%s192 + $0x78] sm:$0xf]
      %v238 = vld [vmem:[%s192 + $0x7c] sm:$0xf]
      %v239 = vld [vmem:[%s192 + $0x80] sm:$0xf]
      %v240 = vld [vmem:[%s192 + $0x84] sm:$0xf]
      %v241 = vld [vmem:[%s192 + $0x88] sm:$0xf]
      %v242 = vld [vmem:[%s192 + $0x8c] sm:$0xf]
      %v251 = vunpack.c.l.b16 %v199
      %v252 = vunpack.c.h.b16 %v199
      %v253 = vunpack.c.l.b16 %v200
      %v254 = vunpack.c.l.b16 %v201
      %v255 = vunpack.c.h.b16 %v201
      %v256 = vunpack.c.l.b16 %v202
      %v257 = vunpack.c.l.b16 %v203
      %v258 = vunpack.c.h.b16 %v203
      %v259 = vunpack.c.l.b16 %v204
      %v260 = vunpack.c.l.b16 %v205
      %v261 = vunpack.c.h.b16 %v205
      %v262 = vunpack.c.l.b16 %v206
      %v263 = vpack.c.b16 %v254, %v251
      %v264 = vpack.c.b16 %v255, %v252
      %v265 = vpack.c.b16 %v256, %v253
      %v266 = vpack.c.b16 %v260, %v257
      %v267 = vpack.c.b16 %v261, %v258
      %v268 = vpack.c.b16 %v262, %v259
      %v309 = vunpack.c.l.b16 %v207
      %v310 = vunpack.c.l.b16 %v208
      %v311 = vunpack.c.l.b16 %v209
      %v312 = vunpack.c.l.b16 %v210
      %v313 = vunpack.c.l.b16 %v211
      %v314 = vunpack.c.l.b16 %v212
      %v315 = vunpack.c.l.b16 %v213
      %v316 = vunpack.c.l.b16 %v214
      %v317 = vunpack.c.l.b16 %v215
      %v318 = vunpack.c.l.b16 %v216
      %v319 = vunpack.c.l.b16 %v217
      %v320 = vunpack.c.l.b16 %v218
      %v321 = vunpack.c.l.b16 %v219
      %v322 = vunpack.c.l.b16 %v220
      %v323 = vunpack.c.l.b16 %v221
      %v324 = vunpack.c.l.b16 %v222
      %v325 = vunpack.c.l.b16 %v223
      %v326 = vunpack.c.l.b16 %v224
      %v327 = vunpack.c.l.b16 %v225
      %v328 = vunpack.c.l.b16 %v226
      %v329 = vunpack.c.l.b16 %v227
      %v330 = vunpack.c.l.b16 %v228
      %v331 = vunpack.c.l.b16 %v229
      %v332 = vunpack.c.l.b16 %v230
      %v333 = vunpack.c.l.b16 %v231
      %v334 = vunpack.c.l.b16 %v232
      %v335 = vunpack.c.l.b16 %v233
      %v336 = vunpack.c.l.b16 %v234
      %v337 = vunpack.c.l.b16 %v235
      %v338 = vunpack.c.l.b16 %v236
      %v339 = vunpack.c.l.b16 %v237
      %v340 = vunpack.c.l.b16 %v238
      %v341 = vunpack.c.l.b16 %v239
      %v342 = vunpack.c.l.b16 %v240
      %v343 = vunpack.c.l.b16 %v241
      %v344 = vunpack.c.l.b16 %v242
      %v345 = vpack.c.b16 %v310, %v309
      %v346 = vpack.c.b16 %v312, %v311
      %v347 = vpack.c.b16 %v314, %v313
      %v348 = vpack.c.b16 %v316, %v315
      %v349 = vpack.c.b16 %v318, %v317
      %v350 = vpack.c.b16 %v320, %v319
      %v351 = vpack.c.b16 %v322, %v321
      %v352 = vpack.c.b16 %v324, %v323
      %v353 = vpack.c.b16 %v326, %v325
      %v354 = vpack.c.b16 %v328, %v327
      %v355 = vpack.c.b16 %v330, %v329
      %v356 = vpack.c.b16 %v332, %v331
      %v357 = vpack.c.b16 %v334, %v333
      %v358 = vpack.c.b16 %v336, %v335
      %v359 = vpack.c.b16 %v338, %v337
      %v360 = vpack.c.b16 %v340, %v339
      %v361 = vpack.c.b16 %v342, %v341
      %v362 = vpack.c.b16 %v344, %v343
      %vm381 = vcmask 261120
      %v383 = vsel %vm381, %v265, 0
      %v386 = vsel %vm381, %v268, 0
      %388 = vmatprep.subr.bf16.mxu0 0
      %389 = vmatpush1.bf16.msra.mxu0 %v345
      %390 = vmatprep.subr.bf16.mxu0 0
      %391 = vmatpush1.bf16.msra.mxu0 %v346
      %392 = vmatprep.subr.bf16.mxu0 0
      %393 = vmatpush1.bf16.msra.mxu0 %v347
      %394 = vmatprep.subr.bf16.mxu0 0
      %395 = vmatpush1.bf16.msra.mxu0 %v348
      %396 = vmatprep.subr.bf16.mxu0 0
      %397 = vmatpush1.bf16.msra.mxu0 %v349
      %398 = vmatprep.subr.bf16.mxu0 0
      %399 = vmatpush1.bf16.msra.mxu0 %v350
      %400 = vmatprep.subr.bf16.mxu0 0
      %401 = vmatpush1.bf16.msra.mxu0 %v351
      %402 = vmatprep.subr.bf16.mxu0 0
      %403 = vmatpush1.bf16.msra.mxu0 %v352
      %404 = vmatprep.subr.bf16.mxu0 0
      %405 = vmatpush1.bf16.msra.mxu0 %v353
      %406 = vmatprep.subr.bf16.mxu0 0
      %407 = vmatpush1.bf16.msra.mxu0 %v354
      %408 = vmatprep.subr.bf16.mxu0 0
      %409 = vmatpush1.bf16.msra.mxu0 %v355
      %410 = vmatprep.subr.bf16.mxu0 0
      %411 = vmatpush1.bf16.msra.mxu0 %v356
      %412 = vmatprep.subr.bf16.mxu0 0
      %413 = vmatpush1.bf16.msra.mxu0 %v357
      %414 = vmatprep.subr.bf16.mxu0 0
      %415 = vmatpush1.bf16.msra.mxu0 %v358
      %416 = vmatprep.subr.bf16.mxu0 0
      %417 = vmatpush1.bf16.msra.mxu0 %v359
      %418 = vmatprep.subr.bf16.mxu0 0
      %419 = vmatpush1.bf16.msra.mxu0 %v360
      %420 = vmatprep.mubr.bf16.mxu0 %v264
      %421 = vmatmul.mubr.bf16.gmra.mrb[0].mxu0 %v263
      %v422 = vpop.f32.mrb[0].mxu0
      %v423 = vadd.f32 0.0, %v422
      %v424 = vpop.f32.mrb[0].mxu0
      %v425 = vpop.f32.mrb[0].mxu0
      %v426 = vadd.f32 0.0, %v425
      %v427 = vpop.f32.mrb[0].mxu0
      %428 = vmatprep.mubr.bf16.mxu0 %v267
      %429 = vmatmul.mubr.bf16.gmra.mrb[0].mxu0 %v266
      %v430 = vpop.f32.mrb[0].mxu0
      %v431 = vadd.f32 0.0, %v430
      %v432 = vpop.f32.mrb[0].mxu0
      %v433 = vpop.f32.mrb[0].mxu0
      %v434 = vadd.f32 0.0, %v433
      %v435 = vpop.f32.mrb[0].mxu0
      %436 = vdwg.mxu0
      %437 = vmatprep.subr.bf16.mxu0 0
      %438 = vmatpush1.bf16.msra.mxu0 %v361
      %439 = vmatprep.subr.bf16.mxu0 0
      %440 = vmatpush1.bf16.msra.mxu0 %v362
      %441 = vmatprep.subr.bf16.mxu0 0
      %442 = vmatpush1.bf16.msra.mxu0 0
      %443 = vmatprep.subr.bf16.mxu0 0
      %444 = vmatpush1.bf16.msra.mxu0 0
      %445 = vmatprep.subr.bf16.mxu0 0
      %446 = vmatpush1.bf16.msra.mxu0 0
      %447 = vmatprep.subr.bf16.mxu0 0
      %448 = vmatpush1.bf16.msra.mxu0 0
      %449 = vmatprep.subr.bf16.mxu0 0
      %450 = vmatpush1.bf16.msra.mxu0 0
      %451 = vmatprep.subr.bf16.mxu0 0
      %452 = vmatpush1.bf16.msra.mxu0 0
      %453 = vmatprep.subr.bf16.mxu0 0
      %454 = vmatpush1.bf16.msra.mxu0 0
      %455 = vmatprep.subr.bf16.mxu0 0
      %456 = vmatpush1.bf16.msra.mxu0 0
      %457 = vmatprep.subr.bf16.mxu0 0
      %458 = vmatpush1.bf16.msra.mxu0 0
      %459 = vmatprep.subr.bf16.mxu0 0
      %460 = vmatpush1.bf16.msra.mxu0 0
      %461 = vmatprep.subr.bf16.mxu0 0
      %462 = vmatpush1.bf16.msra.mxu0 0
      %463 = vmatprep.subr.bf16.mxu0 0
      %464 = vmatpush1.bf16.msra.mxu0 0
      %465 = vmatprep.subr.bf16.mxu0 0
      %466 = vmatpush1.bf16.msra.mxu0 0
      %467 = vmatprep.subr.bf16.mxu0 0
      %468 = vmatpush1.bf16.msra.mxu0 0
      %469 = vmatprep.mubr.bf16.mxu0 0
      %470 = vmatmul.mubr.bf16.gmra.mrb[0].mxu0 %v383
      %v471 = vpop.f32.mrb[0].mxu0
      %v472 = vadd.f32 %v423, %v471
      %v473 = vpop.f32.mrb[0].mxu0
      %v474 = vpop.f32.mrb[0].mxu0
      %v475 = vadd.f32 %v426, %v474
      %v476 = vpop.f32.mrb[0].mxu0
      %477 = vmatprep.mubr.bf16.mxu0 0
      %478 = vmatmul.mubr.bf16.gmra.mrb[0].mxu0 %v386
      %v479 = vpop.f32.mrb[0].mxu0
      %v480 = vadd.f32 %v431, %v479
      %v481 = vpop.f32.mrb[0].mxu0
      %v482 = vpop.f32.mrb[0].mxu0
      %v483 = vadd.f32 %v434, %v482
      %v484 = vpop.f32.mrb[0].mxu0
      %485 = vdwg.mxu0
      %vm486 = vcmask 130048
      %v487 = vsel %vm486, %v472, 0.0
      %488 = vadd.xlane.f32.xlu0 %v487
      %v489 = vpop.xlane.xlu0 %488
      %v490 = vsel %vm486, %v475, 0.0
      %491 = vadd.xlane.f32.xlu0 %v490
      %v492 = vpop.xlane.xlu0 %491
      %v493 = vsel %vm486, %v480, 0.0
      %494 = vadd.xlane.f32.xlu0 %v493
      %v495 = vpop.xlane.xlu0 %494
      %v496 = vsel %vm486, %v483, 0.0
      %497 = vadd.xlane.f32.xlu0 %v496
      %v498 = vpop.xlane.xlu0 %497
      %v499 = vmul.f32 %v489, 0.0625
      %v500 = vmul.f32 %v492, 0.0625
      %v501 = vmul.f32 %v495, 0.0625
      %v502 = vmul.f32 %v498, 0.0625
      %v503 = vsub.f32 %v472, %v499
      %v504 = vsub.f32 %v475, %v500
      %v505 = vsub.f32 %v480, %v501
      %v506 = vsub.f32 %v483, %v502
      %v507 = vmul.f32 %v503, %v503
      %v508 = vmul.f32 %v504, %v504
      %v509 = vmul.f32 %v505, %v505
      %v510 = vmul.f32 %v506, %v506
      %v511 = vsel %vm486, %v507, 0.0
      %512 = vadd.xlane.f32.xlu0 %v511
      %v513 = vpop.xlane.xlu0 %512
      %v514 = vsel %vm486, %v508, 0.0
      %515 = vadd.xlane.f32.xlu0 %v514
      %v516 = vpop.xlane.xlu0 %515
      %v517 = vsel %vm486, %v509, 0.0
      %518 = vadd.xlane.f32.xlu0 %v517
      %v519 = vpop.xlane.xlu0 %518
      %v520 = vsel %vm486, %v510, 0.0
      %521 = vadd.xlane.f32.xlu0 %v520
      %v522 = vpop.xlane.xlu0 %521
      %v523 = vmul.f32 %v513, 0.0625
      %v524 = vmul.f32 %v516, 0.0625
      %v525 = vmul.f32 %v519, 0.0625
      %v526 = vmul.f32 %v522, 0.0625
      %v527 = vadd.f32 %v523, 1e-05
      %v528 = vadd.f32 %v524, 1e-05
      %v529 = vadd.f32 %v525, 1e-05
      %v530 = vadd.f32 %v526, 1e-05
      %v531 = vrsqrt.pop %v527
      %v532 = vrsqrt.pop %v528
      %v533 = vrsqrt.pop %v529
      %v534 = vrsqrt.pop %v530
      %v535 = vld [vmem:[%s2] sm:$0xff]
      %v536 = vld [vmem:[%s2 + $0x8] sm:$0xff]
      %v537 = vld [vmem:[%s2 + $0x10] sm:$0xff]
      %v538 = vld [vmem:[%s2 + $0x18] sm:$0xff]
      %v539 = vmul.f32 %v531, %v535
      %v540 = vmul.f32 %v532, %v536
      %v541 = vmul.f32 %v533, %v537
      %v542 = vmul.f32 %v534, %v538
      %v543 = vld [vmem:[%s3] sm:$0xff]
      %v544 = vld [vmem:[%s3 + $0x8] sm:$0xff]
      %v545 = vld [vmem:[%s3 + $0x10] sm:$0xff]
      %v546 = vld [vmem:[%s3 + $0x18] sm:$0xff]
      %548 = vset.pattern.permute.xlu0 0
      %549 = vperm.xlu0 %548, %v539
      %v550 = vpop.permute.xlu0 %549
      %553 = vset.pattern.permute.xlu0 0
      %554 = vperm.xlu0 %553, %v540
      %v555 = vpop.permute.xlu0 %554
      %558 = vset.pattern.permute.xlu0 0
      %559 = vperm.xlu0 %558, %v541
      %v560 = vpop.permute.xlu0 %559
      %563 = vset.pattern.permute.xlu0 0
      %564 = vperm.xlu0 %563, %v542
      %v565 = vpop.permute.xlu0 %564
      %v567 = vmul.f32 %v503, %v550
      %v568 = vmul.f32 %v504, %v555
      %v569 = vmul.f32 %v505, %v560
      %v570 = vmul.f32 %v506, %v565
      %572 = vset.pattern.permute.xlu0 0
      %573 = vperm.xlu0 %572, %v543
      %v574 = vpop.permute.xlu0 %573
      %577 = vset.pattern.permute.xlu0 0
      %578 = vperm.xlu0 %577, %v544
      %v579 = vpop.permute.xlu0 %578
      %582 = vset.pattern.permute.xlu0 0
      %583 = vperm.xlu0 %582, %v545
      %v584 = vpop.permute.xlu0 %583
      %587 = vset.pattern.permute.xlu0 0
      %588 = vperm.xlu0 %587, %v546
      %v589 = vpop.permute.xlu0 %588
      %v591 = vadd.f32 %v567, %v574
      %v592 = vadd.f32 %v568, %v579
      %v593 = vadd.f32 %v569, %v584
      %v594 = vadd.f32 %v570, %v589
      %v595 = vmax.f32 %v591, 0.0
      %v596 = vmax.f32 %v592, 0.0
      %v597 = vmax.f32 %v593, 0.0
      %v598 = vmax.f32 %v594, 0.0
      %599 = vst.msk [vmem:[%s197] sm:$0xff] %vm486, %v595
      %600 = vst.msk [vmem:[%s197 + $0x8] sm:$0xff] %vm486, %v596
      %601 = vst.msk [vmem:[%s197 + $0x10] sm:$0xff] %vm486, %v597
      %602 = vst.msk [vmem:[%s197 + $0x18] sm:$0xff] %vm486, %v598
      %p603 = scmp.lt.s32.totalorder %s15, 1
      %s604 = scalar_select %p603, %s15, 1
      %s605 = smul.addr %s604, 4
      %s606 = smul.addr %s605, 8
      %s607 = scalar_lea.vmem %s4, %s606
      // Predicated region
      $region37: #{hnet_forward.13} parent=35 // pred_check
        %p608 = pneg %p122
      $region38: #{hnet_forward.13} parent=35 // pred_check_branch
        %610 = sbr.rel (%p608) target = $region40
      $region39: #{hnet_forward.13} parent=35 // pred_region
        _
      $region40: #{hnet_forward.13} parent=35 // pred_fallthru
        _
    $region36: #{hnet_forward.13} parent=5 // pred_fallthru
      _
    %p611 = scmp.le.s32.totalorder 2, %s10
    // Predicated region
    $region41: #{hnet_forward.13} parent=5 // pred_check
      %p612 = pneg %p611
    $region42: #{hnet_forward.13} parent=5 // pred_check_branch
      %614 = sbr.rel (%p612) target = $region44
    $region43: #{hnet_forward.13} parent=5 // pred_region
      %s615 = ssub.s32 %s10, 2
      // Predicated region
      $region45: #{hnet_forward.13} parent=43 // pred_check
        %p616 = pneg %p128
      $region46: #{hnet_forward.13} parent=43 // pred_check_branch
        %618 = sbr.rel (%p616) target = $region48
      $region47: #{hnet_forward.13} parent=43 // pred_region
        %p619 = scmp.lt.s32.totalorder %s16, 1
        %s620 = scalar_select %p619, %s16, 1
        %s621 = smul.addr %s620, 4
        %s622 = smul.addr %s621, 8
        %s623 = scalar_lea.vmem %s4, %s622
      $region48: #{hnet_forward.13} parent=43 // pred_fallthru
        _
    $region44: #{hnet_forward.13} parent=5 // pred_fallthru
      _
  $region6: #{hnet_forward.13} parent=0 // loop_footer
    %s14 = sadd.s32 1, %s10
  $region7: #{hnet_forward.13} parent=0 // loop_footer_branch
    %9 = sbr.rel target = $region3
  $region8: #{hnet_forward.13} parent=0 // loop_exit
    _

// kernel: hnet_forward.14
$region0: #{hnet_forward.14}
  #allocation0 [shape = 'u32[]', space=smem, size = 0x4, offset = 0x4, fixed_abs, tag = 'smem constant byte address 0x4 - core index']
  #allocation1 [shape = 'u32[144,128]{1,0:T(1,128)}', space=vmem, size = 0x12000, scoped, tag = 'internal scratch']
  %s0 = inlined_call_operand.vmem [shape: bf16[2,288,16], index: 0, kind: input, shape index: {}]
  %s1 = inlined_call_operand.vmem [shape: bf16[32,288], index: 1, kind: input, shape index: {}]
  %s2 = inlined_call_operand.vmem [shape: f32[32,1], index: 2, kind: input, shape index: {}]
  %s3 = inlined_call_operand.vmem [shape: f32[32,1], index: 3, kind: input, shape index: {}]
  %s4 = inlined_call_operand.vmem [shape: f32[2,32,16], index: 4, kind: input, shape index: {}]
  %s5 = inlined_call_operand.vmem [shape: f32[2,32,16], index: 5, kind: output, shape index: {}]
  %s6 = sld [smem:[#allocation0]]
  $region53: #{hnet_forward.14} parent=0
    _
  %s8 = ssub.s32 1, %s6
  %s9 = scalar_select 0, %s8, %s6
  loop: start=0, step=1, limit=4
  $region2: #{hnet_forward.14} parent=0 // loop_pre_header
    _
  $region3: #{hnet_forward.14} parent=0 // loop_header
    %s11 = sphi 0, %s15
    %p12 = scmp.ge.s32.totalorder %s11, 4
    %s21 = sphi 0, %s23
    %s24 = sphi 0, %s21
    %s25 = sphi 0, %s24
    %s41 = sphi 0, %s25
    %s45 = sphi 0, %s45
    %s47 = sphi 0, %s45
    %s48 = sphi 0, %s47
    %s62 = sphi 0, %s48
    %s66 = sphi 0, %s66
    %s68 = sphi 0, %s66
    %s69 = sphi 0, %s68
    %s83 = sphi 0, %s69
    %s87 = sphi 0, %s87
    %s89 = sphi 0, %s87
    %s90 = sphi 0, %s89
    %s104 = sphi 0, %s90
    %s110 = sphi 0, %s112
    %s113 = sphi 0, %s110
    %s114 = sphi 0, %s113
    %s130 = sphi 0, %s114
    %s136 = sphi 0, %s138
    %s139 = sphi 0, %s136
    %s140 = sphi 0, %s139
    %s156 = sphi 0, %s140
  $region4: #{hnet_forward.14} parent=0 // loop_header_branch
    %14 = sbr.rel (%p12) target = $region8
  $region5: #{hnet_forward.14} parent=0 // loop_body
    %s16 = ssub.s32 %s11, 1
    %s17 = ssub.s32 %s11, 2
    %s18 = sadd.s32 %s11, 1
    %s19 = ssub.s32 %s11, %s18
    %p20 = scmp.eq.s32.totalorder %s19, 0
    %s22 = sadd.s32 %s21, 1
    %s23 = scalar_select %p20, %s21, %s22
    %p26 = pneg %p20
    %p27 = scmp.eq.s32.totalorder %s11, 1
    %p28 = por %p26, %p27
    %p29 = scmp.ne.s32.totalorder %s21, %s24
    %p30 = scmp.eq.s32.totalorder %s11, 0
    %p31 = por %p29, %p30
    %p32 = scmp.ne.s32.totalorder %s21, %s24
    %p33 = scmp.eq.s32.totalorder %s16, 1
    %p34 = por %p32, %p33
    %p35 = scmp.ne.s32.totalorder %s24, %s25
    %p36 = scmp.eq.s32.totalorder %s16, 0
    %p37 = por %p35, %p36
    %p38 = scmp.ne.s32.totalorder %s24, %s25
    %p39 = scmp.eq.s32.totalorder %s17, 1
    %p40 = por %p38, %p39
    %p42 = scmp.ne.s32.totalorder %s25, %s41
    %p43 = scmp.eq.s32.totalorder %s17, 0
    %p44 = por %p42, %p43
    %s46 = sadd.s32 %s45, 1
    %p49 = scmp.eq.s32.totalorder %s11, 1
    %p50 = scmp.ne.s32.totalorder %s45, %s47
    %p51 = scmp.eq.s32.totalorder %s11, 0
    %p52 = por %p50, %p51
    %p53 = scmp.ne.s32.totalorder %s45, %s47
    %p54 = scmp.eq.s32.totalorder %s16, 1
    %p55 = por %p53, %p54
    %p56 = scmp.ne.s32.totalorder %s47, %s48
    %p57 = scmp.eq.s32.totalorder %s16, 0
    %p58 = por %p56, %p57
    %p59 = scmp.ne.s32.totalorder %s47, %s48
    %p60 = scmp.eq.s32.totalorder %s17, 1
    %p61 = por %p59, %p60
    %p63 = scmp.ne.s32.totalorder %s48, %s62
    %p64 = scmp.eq.s32.totalorder %s17, 0
    %p65 = por %p63, %p64
    %s67 = sadd.s32 %s66, 1
    %p70 = scmp.eq.s32.totalorder %s11, 1
    %p71 = scmp.ne.s32.totalorder %s66, %s68
    %p72 = scmp.eq.s32.totalorder %s11, 0
    %p73 = por %p71, %p72
    %p74 = scmp.ne.s32.totalorder %s66, %s68
    %p75 = scmp.eq.s32.totalorder %s16, 1
    %p76 = por %p74, %p75
    %p77 = scmp.ne.s32.totalorder %s68, %s69
    %p78 = scmp.eq.s32.totalorder %s16, 0
    %p79 = por %p77, %p78
    %p80 = scmp.ne.s32.totalorder %s68, %s69
    %p81 = scmp.eq.s32.totalorder %s17, 1
    %p82 = por %p80, %p81
    %p84 = scmp.ne.s32.totalorder %s69, %s83
    %p85 = scmp.eq.s32.totalorder %s17, 0
    %p86 = por %p84, %p85
    %s88 = sadd.s32 %s87, 1
    %p91 = scmp.eq.s32.totalorder %s11, 1
    %p92 = scmp.ne.s32.totalorder %s87, %s89
    %p93 = scmp.eq.s32.totalorder %s11, 0
    %p94 = por %p92, %p93
    %p95 = scmp.ne.s32.totalorder %s87, %s89
    %p96 = scmp.eq.s32.totalorder %s16, 1
    %p97 = por %p95, %p96
    %p98 = scmp.ne.s32.totalorder %s89, %s90
    %p99 = scmp.eq.s32.totalorder %s16, 0
    %p100 = por %p98, %p99
    %p101 = scmp.ne.s32.totalorder %s89, %s90
    %p102 = scmp.eq.s32.totalorder %s17, 1
    %p103 = por %p101, %p102
    %p105 = scmp.ne.s32.totalorder %s90, %s104
    %p106 = scmp.eq.s32.totalorder %s17, 0
    %p107 = por %p105, %p106
    %s108 = ssub.s32 %s11, %s18
    %p109 = scmp.eq.s32.totalorder %s108, 0
    %s111 = sadd.s32 %s110, 1
    %s112 = scalar_select %p109, %s110, %s111
    %p115 = pneg %p109
    %p116 = scmp.eq.s32.totalorder %s11, 1
    %p117 = por %p115, %p116
    %p118 = scmp.ne.s32.totalorder %s110, %s113
    %p119 = scmp.eq.s32.totalorder %s11, 0
    %p120 = por %p118, %p119
    %p121 = scmp.ne.s32.totalorder %s110, %s113
    %p122 = scmp.eq.s32.totalorder %s16, 1
    %p123 = por %p121, %p122
    %p124 = scmp.ne.s32.totalorder %s113, %s114
    %p125 = scmp.eq.s32.totalorder %s16, 0
    %p126 = por %p124, %p125
    %p127 = scmp.ne.s32.totalorder %s113, %s114
    %p128 = scmp.eq.s32.totalorder %s17, 1
    %p129 = por %p127, %p128
    %p131 = scmp.ne.s32.totalorder %s114, %s130
    %p132 = scmp.eq.s32.totalorder %s17, 0
    %p133 = por %p131, %p132
    %s134 = ssub.s32 %s11, %s18
    %p135 = scmp.eq.s32.totalorder %s134, 0
    %s137 = sadd.s32 %s136, 1
    %s138 = scalar_select %p135, %s136, %s137
    %p141 = pneg %p135
    %p142 = scmp.eq.s32.totalorder %s11, 1
    %p143 = por %p141, %p142
    %p144 = scmp.ne.s32.totalorder %s136, %s139
    %p145 = scmp.eq.s32.totalorder %s11, 0
    %p146 = por %p144, %p145
    %p147 = scmp.ne.s32.totalorder %s136, %s139
    %p148 = scmp.eq.s32.totalorder %s16, 1
    %p149 = por %p147, %p148
    %p150 = scmp.ne.s32.totalorder %s139, %s140
    %p151 = scmp.eq.s32.totalorder %s16, 0
    %p152 = por %p150, %p151
    %p153 = scmp.ne.s32.totalorder %s139, %s140
    %p154 = scmp.eq.s32.totalorder %s17, 1
    %p155 = por %p153, %p154
    %p157 = scmp.ne.s32.totalorder %s140, %s156
    %p158 = scmp.eq.s32.totalorder %s17, 0
    %p159 = por %p157, %p158
    %p160 = scmp.le.s32.totalorder 1, %s11
    %p161 = scmp.lt.s32.totalorder %s11, 3
    %p162 = pnand %p160, %p161
    %p163 = pneg %p162
    // Predicated region
    $region9: #{hnet_forward.14} parent=5 // pred_check
      _
    $region10: #{hnet_forward.14} parent=5 // pred_check_branch
      %165 = sbr.rel (%p162) target = $region12
    $region11: #{hnet_forward.14} parent=5 // pred_region
      %s166 = ssub.s32 %s11, 1
      // Predicated region
      $region13: #{hnet_forward.14} parent=11 // pred_check
        %p167 = pneg %p58
      $region14: #{hnet_forward.14} parent=11 // pred_check_branch
        %169 = sbr.rel (%p167) target = $region16
      $region15: #{hnet_forward.14} parent=11 // pred_region
        _
      $region16: #{hnet_forward.14} parent=11 // pred_fallthru
        _
      // Predicated region
      $region17: #{hnet_forward.14} parent=11 // pred_check
        %p170 = pneg %p79
      $region18: #{hnet_forward.14} parent=11 // pred_check_branch
        %172 = sbr.rel (%p170) target = $region20
      $region19: #{hnet_forward.14} parent=11 // pred_region
        _
      $region20: #{hnet_forward.14} parent=11 // pred_fallthru
        _
      // Predicated region
      $region21: #{hnet_forward.14} parent=11 // pred_check
        %p173 = pneg %p100
      $region22: #{hnet_forward.14} parent=11 // pred_check_branch
        %175 = sbr.rel (%p173) target = $region24
      $region23: #{hnet_forward.14} parent=11 // pred_region
        _
      $region24: #{hnet_forward.14} parent=11 // pred_fallthru
        _
    $region12: #{hnet_forward.14} parent=5 // pred_fallthru
      _
    %p176 = scmp.lt.s32.totalorder %s11, 2
    // Predicated region
    $region25: #{hnet_forward.14} parent=5 // pred_check
      %p177 = pneg %p176
    $region26: #{hnet_forward.14} parent=5 // pred_check_branch
      %179 = sbr.rel (%p177) target = $region28
    $region27: #{hnet_forward.14} parent=5 // pred_region
      // Predicated region
      $region29: #{hnet_forward.14} parent=27 // pred_check
        %p180 = pneg %p31
      $region30: #{hnet_forward.14} parent=27 // pred_check_branch
        %182 = sbr.rel (%p180) target = $region32
      $region31: #{hnet_forward.14} parent=27 // pred_region
        %p183 = scmp.lt.s32.totalorder %s11, 1
        %s184 = scalar_select %p183, %s11, 1
        %s185 = smul.addr %s184, 36
        %s186 = smul.addr %s185, 4
        %s187 = scalar_lea.vmem %s0, %s186
      $region32: #{hnet_forward.14} parent=27 // pred_fallthru
        _
      // Predicated region
      $region33: #{hnet_forward.14} parent=27 // pred_check
        %p188 = pneg %p120
      $region34: #{hnet_forward.14} parent=27 // pred_check_branch
        %190 = sbr.rel (%p188) target = $region36
      $region35: #{hnet_forward.14} parent=27 // pred_region
        %p191 = scmp.lt.s32.totalorder %s11, 1
        %s192 = scalar_select %p191, %s11, 1
        %s193 = smul.addr %s192, 4
        %s194 = smul.addr %s193, 8
        %s195 = scalar_lea.vmem %s4, %s194
      $region36: #{hnet_forward.14} parent=27 // pred_fallthru
        _
    $region28: #{hnet_forward.14} parent=5 // pred_fallthru
      _
    %p196 = scmp.le.s32.totalorder 1, %s11
    %p197 = scmp.lt.s32.totalorder %s11, 3
    %p198 = pnand %p196, %p197
    %p199 = pneg %p198
    // Predicated region
    $region37: #{hnet_forward.14} parent=5 // pred_check
      _
    $region38: #{hnet_forward.14} parent=5 // pred_check_branch
      %201 = sbr.rel (%p198) target = $region40
    $region39: #{hnet_forward.14} parent=5 // pred_region
      %s202 = ssub.s32 %s11, 1
      %p203 = scmp.lt.s32.totalorder %s16, 1
      %s204 = scalar_select %p203, %s16, 1
      %s205 = smul.addr %s204, 36
      %s206 = smul.addr %s205, 4
      %s207 = scalar_lea.vmem %s0, %s206
      %p208 = pneg %p37
      %p209 = pneg %p34
      %p210 = pneg %p58
      %p211 = pneg %p55
      %p212 = pneg %p79
      %p213 = pneg %p76
      %p214 = pneg %p100
      %p215 = pneg %p97
      %p216 = scmp.lt.s32.totalorder %s16, 1
      %s217 = scalar_select %p216, %s16, 1
      %s218 = smul.addr %s217, 4
      %s219 = smul.addr %s218, 8
      %s220 = scalar_lea.vmem %s4, %s219
      %p221 = pneg %p126
      %p222 = pneg %p123
      %p223 = pneg %p152
      %p224 = pneg %p149
      %p225 = scmp.lt.s32.totalorder %s16, 1
      %s226 = scalar_select %p225, %s16, 1
      %s227 = smul.addr %s226, 4
      %s228 = smul.addr %s227, 8
      %s229 = scalar_lea.vmem %s5, %s228
      %p230 = scmp.lt.s32.totalorder %s16, 1
      %s231 = scalar_select %p230, %s16, 1
      %s232 = smul.addr %s231, 36
      %s233 = smul.addr %s232, 4
      %s234 = scalar_lea.vmem %s0, %s233
      %p235 = scmp.lt.s32.totalorder %s16, 1
      %s236 = scalar_select %p235, %s16, 1
      %s237 = smul.addr %s236, 4
      %s238 = smul.addr %s237, 8
      %s239 = scalar_lea.vmem %s4, %s238
      %p240 = scmp.lt.s32.totalorder %s16, 1
      %s241 = scalar_select %p240, %s16, 1
      %s242 = smul.addr %s241, 4
      %s243 = smul.addr %s242, 8
      %s244 = scalar_lea.vmem %s5, %s243
      %v246 = vld [vmem:[%s1] sm:$0xff]
      %v247 = vld [vmem:[%s1 + $0x8] sm:$0xf]
      %v248 = vld [vmem:[%s1 + $0xc] sm:$0xff]
      %v249 = vld [vmem:[%s1 + $0x14] sm:$0xf]
      %v250 = vld [vmem:[%s1 + $0x18] sm:$0xff]
      %v251 = vld [vmem:[%s1 + $0x20] sm:$0xf]
      %v252 = vld [vmem:[%s1 + $0x24] sm:$0xff]
      %v253 = vld [vmem:[%s1 + $0x2c] sm:$0xf]
      %v254 = vld [vmem:[%s234] sm:$0xf]
      %v255 = vld [vmem:[%s234 + $0x4] sm:$0xf]
      %v256 = vld [vmem:[%s234 + $0x8] sm:$0xf]
      %v257 = vld [vmem:[%s234 + $0xc] sm:$0xf]
      %v258 = vld [vmem:[%s234 + $0x10] sm:$0xf]
      %v259 = vld [vmem:[%s234 + $0x14] sm:$0xf]
      %v260 = vld [vmem:[%s234 + $0x18] sm:$0xf]
      %v261 = vld [vmem:[%s234 + $0x1c] sm:$0xf]
      %v262 = vld [vmem:[%s234 + $0x20] sm:$0xf]
      %v263 = vld [vmem:[%s234 + $0x24] sm:$0xf]
      %v264 = vld [vmem:[%s234 + $0x28] sm:$0xf]
      %v265 = vld [vmem:[%s234 + $0x2c] sm:$0xf]
      %v266 = vld [vmem:[%s234 + $0x30] sm:$0xf]
      %v267 = vld [vmem:[%s234 + $0x34] sm:$0xf]
      %v268 = vld [vmem:[%s234 + $0x38] sm:$0xf]
      %v269 = vld [vmem:[%s234 + $0x3c] sm:$0xf]
      %v270 = vld [vmem:[%s234 + $0x40] sm:$0xf]
      %v271 = vld [vmem:[%s234 + $0x44] sm:$0xf]
      %v272 = vld [vmem:[%s234 + $0x48] sm:$0xf]
      %v273 = vld [vmem:[%s234 + $0x4c] sm:$0xf]
      %v274 = vld [vmem:[%s234 + $0x50] sm:$0xf]
      %v275 = vld [vmem:[%s234 + $0x54] sm:$0xf]
      %v276 = vld [vmem:[%s234 + $0x58] sm:$0xf]
      %v277 = vld [vmem:[%s234 + $0x5c] sm:$0xf]
      %v278 = vld [vmem:[%s234 + $0x60] sm:$0xf]
      %v279 = vld [vmem:[%s234 + $0x64] sm:$0xf]
      %v280 = vld [vmem:[%s234 + $0x68] sm:$0xf]
      %v281 = vld [vmem:[%s234 + $0x6c] sm:$0xf]
      %v282 = vld [vmem:[%s234 + $0x70] sm:$0xf]
      %v283 = vld [vmem:[%s234 + $0x74] sm:$0xf]
      %v284 = vld [vmem:[%s234 + $0x78] sm:$0xf]
      %v285 = vld [vmem:[%s234 + $0x7c] sm:$0xf]
      %v286 = vld [vmem:[%s234 + $0x80] sm:$0xf]
      %v287 = vld [vmem:[%s234 + $0x84] sm:$0xf]
      %v288 = vld [vmem:[%s234 + $0x88] sm:$0xf]
      %v289 = vld [vmem:[%s234 + $0x8c] sm:$0xf]
      %v298 = vunpack.c.l.b16 %v246
      %v299 = vunpack.c.h.b16 %v246
      %v300 = vunpack.c.l.b16 %v247
      %v301 = vunpack.c.l.b16 %v248
      %v302 = vunpack.c.h.b16 %v248
      %v303 = vunpack.c.l.b16 %v249
      %v304 = vunpack.c.l.b16 %v250
      %v305 = vunpack.c.h.b16 %v250
      %v306 = vunpack.c.l.b16 %v251
      %v307 = vunpack.c.l.b16 %v252
      %v308 = vunpack.c.h.b16 %v252
      %v309 = vunpack.c.l.b16 %v253
      %v310 = vpack.c.b16 %v301, %v298
      %v311 = vpack.c.b16 %v302, %v299
      %v312 = vpack.c.b16 %v303, %v300
      %v313 = vpack.c.b16 %v307, %v304
      %v314 = vpack.c.b16 %v308, %v305
      %v315 = vpack.c.b16 %v309, %v306
      %v356 = vunpack.c.l.b16 %v254
      %v357 = vunpack.c.l.b16 %v255
      %v358 = vunpack.c.l.b16 %v256
      %v359 = vunpack.c.l.b16 %v257
      %v360 = vunpack.c.l.b16 %v258
      %v361 = vunpack.c.l.b16 %v259
      %v362 = vunpack.c.l.b16 %v260
      %v363 = vunpack.c.l.b16 %v261
      %v364 = vunpack.c.l.b16 %v262
      %v365 = vunpack.c.l.b16 %v263
      %v366 = vunpack.c.l.b16 %v264
      %v367 = vunpack.c.l.b16 %v265
      %v368 = vunpack.c.l.b16 %v266
      %v369 = vunpack.c.l.b16 %v267
      %v370 = vunpack.c.l.b16 %v268
      %v371 = vunpack.c.l.b16 %v269
      %v372 = vunpack.c.l.b16 %v270
      %v373 = vunpack.c.l.b16 %v271
      %v374 = vunpack.c.l.b16 %v272
      %v375 = vunpack.c.l.b16 %v273
      %v376 = vunpack.c.l.b16 %v274
      %v377 = vunpack.c.l.b16 %v275
      %v378 = vunpack.c.l.b16 %v276
      %v379 = vunpack.c.l.b16 %v277
      %v380 = vunpack.c.l.b16 %v278
      %v381 = vunpack.c.l.b16 %v279
      %v382 = vunpack.c.l.b16 %v280
      %v383 = vunpack.c.l.b16 %v281
      %v384 = vunpack.c.l.b16 %v282
      %v385 = vunpack.c.l.b16 %v283
      %v386 = vunpack.c.l.b16 %v284
      %v387 = vunpack.c.l.b16 %v285
      %v388 = vunpack.c.l.b16 %v286
      %v389 = vunpack.c.l.b16 %v287
      %v390 = vunpack.c.l.b16 %v288
      %v391 = vunpack.c.l.b16 %v289
      %v392 = vpack.c.b16 %v357, %v356
      %v393 = vpack.c.b16 %v359, %v358
      %v394 = vpack.c.b16 %v361, %v360
      %v395 = vpack.c.b16 %v363, %v362
      %v396 = vpack.c.b16 %v365, %v364
      %v397 = vpack.c.b16 %v367, %v366
      %v398 = vpack.c.b16 %v369, %v368
      %v399 = vpack.c.b16 %v371, %v370
      %v400 = vpack.c.b16 %v373, %v372
      %v401 = vpack.c.b16 %v375, %v374
      %v402 = vpack.c.b16 %v377, %v376
      %v403 = vpack.c.b16 %v379, %v378
      %v404 = vpack.c.b16 %v381, %v380
      %v405 = vpack.c.b16 %v383, %v382
      %v406 = vpack.c.b16 %v385, %v384
      %v407 = vpack.c.b16 %v387, %v386
      %v408 = vpack.c.b16 %v389, %v388
      %v409 = vpack.c.b16 %v391, %v390
      %vm428 = vcmask 261120
      %v430 = vsel %vm428, %v312, 0
      %v433 = vsel %vm428, %v315, 0
      %435 = vmatprep.subr.bf16.mxu0 0
      %436 = vmatpush1.bf16.msra.mxu0 %v392
      %437 = vmatprep.subr.bf16.mxu0 0
      %438 = vmatpush1.bf16.msra.mxu0 %v393
      %439 = vmatprep.subr.bf16.mxu0 0
      %440 = vmatpush1.bf16.msra.mxu0 %v394
      %441 = vmatprep.subr.bf16.mxu0 0
      %442 = vmatpush1.bf16.msra.mxu0 %v395
      %443 = vmatprep.subr.bf16.mxu0 0
      %444 = vmatpush1.bf16.msra.mxu0 %v396
      %445 = vmatprep.subr.bf16.mxu0 0
      %446 = vmatpush1.bf16.msra.mxu0 %v397
      %447 = vmatprep.subr.bf16.mxu0 0
      %448 = vmatpush1.bf16.msra.mxu0 %v398
      %449 = vmatprep.subr.bf16.mxu0 0
      %450 = vmatpush1.bf16.msra.mxu0 %v399
      %451 = vmatprep.subr.bf16.mxu0 0
      %452 = vmatpush1.bf16.msra.mxu0 %v400
      %453 = vmatprep.subr.bf16.mxu0 0
      %454 = vmatpush1.bf16.msra.mxu0 %v401
      %455 = vmatprep.subr.bf16.mxu0 0
      %456 = vmatpush1.bf16.msra.mxu0 %v402
      %457 = vmatprep.subr.bf16.mxu0 0
      %458 = vmatpush1.bf16.msra.mxu0 %v403
      %459 = vmatprep.subr.bf16.mxu0 0
      %460 = vmatpush1.bf16.msra.mxu0 %v404
      %461 = vmatprep.subr.bf16.mxu0 0
      %462 = vmatpush1.bf16.msra.mxu0 %v405
      %463 = vmatprep.subr.bf16.mxu0 0
      %464 = vmatpush1.bf16.msra.mxu0 %v406
      %465 = vmatprep.subr.bf16.mxu0 0
      %466 = vmatpush1.bf16.msra.mxu0 %v407
      %467 = vmatprep.mubr.bf16.mxu0 %v311
      %468 = vmatmul.mubr.bf16.gmra.mrb[0].mxu0 %v310
      %v469 = vpop.f32.mrb[0].mxu0
      %v470 = vadd.f32 0.0, %v469
      %v471 = vpop.f32.mrb[0].mxu0
      %v472 = vpop.f32.mrb[0].mxu0
      %v473 = vadd.f32 0.0, %v472
      %v474 = vpop.f32.mrb[0].mxu0
      %475 = vmatprep.mubr.bf16.mxu0 %v314
      %476 = vmatmul.mubr.bf16.gmra.mrb[0].mxu0 %v313
      %v477 = vpop.f32.mrb[0].mxu0
      %v478 = vadd.f32 0.0, %v477
      %v479 = vpop.f32.mrb[0].mxu0
      %v480 = vpop.f32.mrb[0].mxu0
      %v481 = vadd.f32 0.0, %v480
      %v482 = vpop.f32.mrb[0].mxu0
      %483 = vdwg.mxu0
      %484 = vmatprep.subr.bf16.mxu0 0
      %485 = vmatpush1.bf16.msra.mxu0 %v408
      %486 = vmatprep.subr.bf16.mxu0 0
      %487 = vmatpush1.bf16.msra.mxu0 %v409
      %488 = vmatprep.subr.bf16.mxu0 0
      %489 = vmatpush1.bf16.msra.mxu0 0
      %490 = vmatprep.subr.bf16.mxu0 0
      %491 = vmatpush1.bf16.msra.mxu0 0
      %492 = vmatprep.subr.bf16.mxu0 0
      %493 = vmatpush1.bf16.msra.mxu0 0
      %494 = vmatprep.subr.bf16.mxu0 0
      %495 = vmatpush1.bf16.msra.mxu0 0
      %496 = vmatprep.subr.bf16.mxu0 0
      %497 = vmatpush1.bf16.msra.mxu0 0
      %498 = vmatprep.subr.bf16.mxu0 0
      %499 = vmatpush1.bf16.msra.mxu0 0
      %500 = vmatprep.subr.bf16.mxu0 0
      %501 = vmatpush1.bf16.msra.mxu0 0
      %502 = vmatprep.subr.bf16.mxu0 0
      %503 = vmatpush1.bf16.msra.mxu0 0
      %504 = vmatprep.subr.bf16.mxu0 0
      %505 = vmatpush1.bf16.msra.mxu0 0
      %506 = vmatprep.subr.bf16.mxu0 0
      %507 = vmatpush1.bf16.msra.mxu0 0
      %508 = vmatprep.subr.bf16.mxu0 0
      %509 = vmatpush1.bf16.msra.mxu0 0
      %510 = vmatprep.subr.bf16.mxu0 0
      %511 = vmatpush1.bf16.msra.mxu0 0
      %512 = vmatprep.subr.bf16.mxu0 0
      %513 = vmatpush1.bf16.msra.mxu0 0
      %514 = vmatprep.subr.bf16.mxu0 0
      %515 = vmatpush1.bf16.msra.mxu0 0
      %516 = vmatprep.mubr.bf16.mxu0 0
      %517 = vmatmul.mubr.bf16.gmra.mrb[0].mxu0 %v430
      %v518 = vpop.f32.mrb[0].mxu0
      %v519 = vadd.f32 %v470, %v518
      %v520 = vpop.f32.mrb[0].mxu0
      %v521 = vpop.f32.mrb[0].mxu0
      %v522 = vadd.f32 %v473, %v521
      %v523 = vpop.f32.mrb[0].mxu0
      %524 = vmatprep.mubr.bf16.mxu0 0
      %525 = vmatmul.mubr.bf16.gmra.mrb[0].mxu0 %v433
      %v526 = vpop.f32.mrb[0].mxu0
      %v527 = vadd.f32 %v478, %v526
      %v528 = vpop.f32.mrb[0].mxu0
      %v529 = vpop.f32.mrb[0].mxu0
      %v530 = vadd.f32 %v481, %v529
      %v531 = vpop.f32.mrb[0].mxu0
      %532 = vdwg.mxu0
      %vm533 = vcmask 130048
      %v534 = vsel %vm533, %v519, 0.0
      %535 = vadd.xlane.f32.xlu0 %v534
      %v536 = vpop.xlane.xlu0 %535
      %v537 = vsel %vm533, %v522, 0.0
      %538 = vadd.xlane.f32.xlu0 %v537
      %v539 = vpop.xlane.xlu0 %538
      %v540 = vsel %vm533, %v527, 0.0
      %541 = vadd.xlane.f32.xlu0 %v540
      %v542 = vpop.xlane.xlu0 %541
      %v543 = vsel %vm533, %v530, 0.0
      %544 = vadd.xlane.f32.xlu0 %v543
      %v545 = vpop.xlane.xlu0 %544
      %v546 = vmul.f32 %v536, 0.0625
      %v547 = vmul.f32 %v539, 0.0625
      %v548 = vmul.f32 %v542, 0.0625
      %v549 = vmul.f32 %v545, 0.0625
      %v550 = vsub.f32 %v519, %v546
      %v551 = vsub.f32 %v522, %v547
      %v552 = vsub.f32 %v527, %v548
      %v553 = vsub.f32 %v530, %v549
      %v554 = vmul.f32 %v550, %v550
      %v555 = vmul.f32 %v551, %v551
      %v556 = vmul.f32 %v552, %v552
      %v557 = vmul.f32 %v553, %v553
      %v558 = vsel %vm533, %v554, 0.0
      %559 = vadd.xlane.f32.xlu0 %v558
      %v560 = vpop.xlane.xlu0 %559
      %v561 = vsel %vm533, %v555, 0.0
      %562 = vadd.xlane.f32.xlu0 %v561
      %v563 = vpop.xlane.xlu0 %562
      %v564 = vsel %vm533, %v556, 0.0
      %565 = vadd.xlane.f32.xlu0 %v564
      %v566 = vpop.xlane.xlu0 %565
      %v567 = vsel %vm533, %v557, 0.0
      %568 = vadd.xlane.f32.xlu0 %v567
      %v569 = vpop.xlane.xlu0 %568
      %v570 = vmul.f32 %v560, 0.0625
      %v571 = vmul.f32 %v563, 0.0625
      %v572 = vmul.f32 %v566, 0.0625
      %v573 = vmul.f32 %v569, 0.0625
      %v574 = vadd.f32 %v570, 1e-05
      %v575 = vadd.f32 %v571, 1e-05
      %v576 = vadd.f32 %v572, 1e-05
      %v577 = vadd.f32 %v573, 1e-05
      %v578 = vrsqrt.pop %v574
      %v579 = vrsqrt.pop %v575
      %v580 = vrsqrt.pop %v576
      %v581 = vrsqrt.pop %v577
      %v582 = vld [vmem:[%s2] sm:$0xff]
      %v583 = vld [vmem:[%s2 + $0x8] sm:$0xff]
      %v584 = vld [vmem:[%s2 + $0x10] sm:$0xff]
      %v585 = vld [vmem:[%s2 + $0x18] sm:$0xff]
      %v586 = vmul.f32 %v578, %v582
      %v587 = vmul.f32 %v579, %v583
      %v588 = vmul.f32 %v580, %v584
      %v589 = vmul.f32 %v581, %v585
      %v590 = vld [vmem:[%s3] sm:$0xff]
      %v591 = vld [vmem:[%s3 + $0x8] sm:$0xff]
      %v592 = vld [vmem:[%s3 + $0x10] sm:$0xff]
      %v593 = vld [vmem:[%s3 + $0x18] sm:$0xff]
      %595 = vset.pattern.permute.xlu0 0
      %596 = vperm.xlu0 %595, %v586
      %v597 = vpop.permute.xlu0 %596
      %600 = vset.pattern.permute.xlu0 0
      %601 = vperm.xlu0 %600, %v587
      %v602 = vpop.permute.xlu0 %601
      %605 = vset.pattern.permute.xlu0 0
      %606 = vperm.xlu0 %605, %v588
      %v607 = vpop.permute.xlu0 %606
      %610 = vset.pattern.permute.xlu0 0
      %611 = vperm.xlu0 %610, %v589
      %v612 = vpop.permute.xlu0 %611
      %v614 = vmul.f32 %v550, %v597
      %v615 = vmul.f32 %v551, %v602
      %v616 = vmul.f32 %v552, %v607
      %v617 = vmul.f32 %v553, %v612
      %619 = vset.pattern.permute.xlu0 0
      %620 = vperm.xlu0 %619, %v590
      %v621 = vpop.permute.xlu0 %620
      %624 = vset.pattern.permute.xlu0 0
      %625 = vperm.xlu0 %624, %v591
      %v626 = vpop.permute.xlu0 %625
      %629 = vset.pattern.permute.xlu0 0
      %630 = vperm.xlu0 %629, %v592
      %v631 = vpop.permute.xlu0 %630
      %634 = vset.pattern.permute.xlu0 0
      %635 = vperm.xlu0 %634, %v593
      %v636 = vpop.permute.xlu0 %635
      %v638 = vadd.f32 %v614, %v621
      %v639 = vadd.f32 %v615, %v626
      %v640 = vadd.f32 %v616, %v631
      %v641 = vadd.f32 %v617, %v636
      %v642 = vld [vmem:[%s239] sm:$0xff]
      %v643 = vld [vmem:[%s239 + $0x8] sm:$0xff]
      %v644 = vld [vmem:[%s239 + $0x10] sm:$0xff]
      %v645 = vld [vmem:[%s239 + $0x18] sm:$0xff]
      %v646 = vadd.f32 %v638, %v642
      %v647 = vadd.f32 %v639, %v643
      %v648 = vadd.f32 %v640, %v644
      %v649 = vadd.f32 %v641, %v645
      %650 = vst.msk [vmem:[%s244] sm:$0xff] %vm533, %v646
      %651 = vst.msk [vmem:[%s244 + $0x8] sm:$0xff] %vm533, %v647
      %652 = vst.msk [vmem:[%s244 + $0x10] sm:$0xff] %vm533, %v648
      %653 = vst.msk [vmem:[%s244 + $0x18] sm:$0xff] %vm533, %v649
      %p654 = scmp.lt.s32.totalorder %s16, 1
      %s655 = scalar_select %p654, %s16, 1
      %s656 = smul.addr %s655, 4
      %s657 = smul.addr %s656, 8
      %s658 = scalar_lea.vmem %s5, %s657
      // Predicated region
      $region41: #{hnet_forward.14} parent=39 // pred_check
        %p659 = pneg %p149
      $region42: #{hnet_forward.14} parent=39 // pred_check_branch
        %661 = sbr.rel (%p659) target = $region44
      $region43: #{hnet_forward.14} parent=39 // pred_region
        _
      $region44: #{hnet_forward.14} parent=39 // pred_fallthru
        _
    $region40: #{hnet_forward.14} parent=5 // pred_fallthru
      _
    %p662 = scmp.le.s32.totalorder 2, %s11
    // Predicated region
    $region45: #{hnet_forward.14} parent=5 // pred_check
      %p663 = pneg %p662
    $region46: #{hnet_forward.14} parent=5 // pred_check_branch
      %665 = sbr.rel (%p663) target = $region48
    $region47: #{hnet_forward.14} parent=5 // pred_region
      %s666 = ssub.s32 %s11, 2
      // Predicated region
      $region49: #{hnet_forward.14} parent=47 // pred_check
        %p667 = pneg %p155
      $region50: #{hnet_forward.14} parent=47 // pred_check_branch
        %669 = sbr.rel (%p667) target = $region52
      $region51: #{hnet_forward.14} parent=47 // pred_region
        %p670 = scmp.lt.s32.totalorder %s17, 1
        %s671 = scalar_select %p670, %s17, 1
        %s672 = smul.addr %s671, 4
        %s673 = smul.addr %s672, 8
        %s674 = scalar_lea.vmem %s5, %s673
      $region52: #{hnet_forward.14} parent=47 // pred_fallthru
        _
    $region48: #{hnet_forward.14} parent=5 // pred_fallthru
      _
  $region6: #{hnet_forward.14} parent=0 // loop_footer
    %s15 = sadd.s32 1, %s11
  $region7: #{hnet_forward.14} parent=0 // loop_footer_branch
    %10 = sbr.rel target = $region3
  $region8: #{hnet_forward.14} parent=0 // loop_exit
    _

// kernel: hnet_forward.17
$region0: #{hnet_forward.17}
  #allocation0 [shape = 'u32[]', space=smem, size = 0x4, offset = 0x4, fixed_abs, tag = 'smem constant byte address 0x4 - core index']
  #allocation1 [shape = 'u32[144,128]{1,0:T(1,128)}', space=vmem, size = 0x12000, scoped, tag = 'internal scratch']
  %s0 = inlined_call_operand.vmem [shape: bf16[2,288,16], index: 0, kind: input, shape index: {}]
  %s1 = inlined_call_operand.vmem [shape: bf16[64,288], index: 1, kind: input, shape index: {}]
  %s2 = inlined_call_operand.vmem [shape: f32[16,1], index: 2, kind: input, shape index: {}]
  %s3 = inlined_call_operand.vmem [shape: f32[16,1], index: 3, kind: input, shape index: {}]
  %s4 = inlined_call_operand.vmem [shape: f32[2,64,16], index: 4, kind: output, shape index: {}]
  %s5 = sld [smem:[#allocation0]]
  $region49: #{hnet_forward.17} parent=0
    _
  %s7 = ssub.s32 1, %s5
  %s8 = scalar_select 0, %s7, %s5
  loop: start=0, step=1, limit=4
  $region2: #{hnet_forward.17} parent=0 // loop_pre_header
    _
  $region3: #{hnet_forward.17} parent=0 // loop_header
    %s10 = sphi 0, %s14
    %p11 = scmp.ge.s32.totalorder %s10, 4
    %s20 = sphi 0, %s22
    %s23 = sphi 0, %s20
    %s24 = sphi 0, %s23
    %s40 = sphi 0, %s24
    %s44 = sphi 0, %s44
    %s46 = sphi 0, %s44
    %s47 = sphi 0, %s46
    %s61 = sphi 0, %s47
    %s65 = sphi 0, %s65
    %s67 = sphi 0, %s65
    %s68 = sphi 0, %s67
    %s82 = sphi 0, %s68
    %s86 = sphi 0, %s86
    %s88 = sphi 0, %s86
    %s89 = sphi 0, %s88
    %s103 = sphi 0, %s89
    %s109 = sphi 0, %s111
    %s112 = sphi 0, %s109
    %s113 = sphi 0, %s112
    %s129 = sphi 0, %s113
  $region4: #{hnet_forward.17} parent=0 // loop_header_branch
    %13 = sbr.rel (%p11) target = $region8
  $region5: #{hnet_forward.17} parent=0 // loop_body
    %s15 = ssub.s32 %s10, 1
    %s16 = ssub.s32 %s10, 2
    %s17 = sadd.s32 %s10, 1
    %s18 = ssub.s32 %s10, %s17
    %p19 = scmp.eq.s32.totalorder %s18, 0
    %s21 = sadd.s32 %s20, 1
    %s22 = scalar_select %p19, %s20, %s21
    %p25 = pneg %p19
    %p26 = scmp.eq.s32.totalorder %s10, 1
    %p27 = por %p25, %p26
    %p28 = scmp.ne.s32.totalorder %s20, %s23
    %p29 = scmp.eq.s32.totalorder %s10, 0
    %p30 = por %p28, %p29
    %p31 = scmp.ne.s32.totalorder %s20, %s23
    %p32 = scmp.eq.s32.totalorder %s15, 1
    %p33 = por %p31, %p32
    %p34 = scmp.ne.s32.totalorder %s23, %s24
    %p35 = scmp.eq.s32.totalorder %s15, 0
    %p36 = por %p34, %p35
    %p37 = scmp.ne.s32.totalorder %s23, %s24
    %p38 = scmp.eq.s32.totalorder %s16, 1
    %p39 = por %p37, %p38
    %p41 = scmp.ne.s32.totalorder %s24, %s40
    %p42 = scmp.eq.s32.totalorder %s16, 0
    %p43 = por %p41, %p42
    %s45 = sadd.s32 %s44, 1
    %p48 = scmp.eq.s32.totalorder %s10, 1
    %p49 = scmp.ne.s32.totalorder %s44, %s46
    %p50 = scmp.eq.s32.totalorder %s10, 0
    %p51 = por %p49, %p50
    %p52 = scmp.ne.s32.totalorder %s44, %s46
    %p53 = scmp.eq.s32.totalorder %s15, 1
    %p54 = por %p52, %p53
    %p55 = scmp.ne.s32.totalorder %s46, %s47
    %p56 = scmp.eq.s32.totalorder %s15, 0
    %p57 = por %p55, %p56
    %p58 = scmp.ne.s32.totalorder %s46, %s47
    %p59 = scmp.eq.s32.totalorder %s16, 1
    %p60 = por %p58, %p59
    %p62 = scmp.ne.s32.totalorder %s47, %s61
    %p63 = scmp.eq.s32.totalorder %s16, 0
    %p64 = por %p62, %p63
    %s66 = sadd.s32 %s65, 1
    %p69 = scmp.eq.s32.totalorder %s10, 1
    %p70 = scmp.ne.s32.totalorder %s65, %s67
    %p71 = scmp.eq.s32.totalorder %s10, 0
    %p72 = por %p70, %p71
    %p73 = scmp.ne.s32.totalorder %s65, %s67
    %p74 = scmp.eq.s32.totalorder %s15, 1
    %p75 = por %p73, %p74
    %p76 = scmp.ne.s32.totalorder %s67, %s68
    %p77 = scmp.eq.s32.totalorder %s15, 0
    %p78 = por %p76, %p77
    %p79 = scmp.ne.s32.totalorder %s67, %s68
    %p80 = scmp.eq.s32.totalorder %s16, 1
    %p81 = por %p79, %p80
    %p83 = scmp.ne.s32.totalorder %s68, %s82
    %p84 = scmp.eq.s32.totalorder %s16, 0
    %p85 = por %p83, %p84
    %s87 = sadd.s32 %s86, 1
    %p90 = scmp.eq.s32.totalorder %s10, 1
    %p91 = scmp.ne.s32.totalorder %s86, %s88
    %p92 = scmp.eq.s32.totalorder %s10, 0
    %p93 = por %p91, %p92
    %p94 = scmp.ne.s32.totalorder %s86, %s88
    %p95 = scmp.eq.s32.totalorder %s15, 1
    %p96 = por %p94, %p95
    %p97 = scmp.ne.s32.totalorder %s88, %s89
    %p98 = scmp.eq.s32.totalorder %s15, 0
    %p99 = por %p97, %p98
    %p100 = scmp.ne.s32.totalorder %s88, %s89
    %p101 = scmp.eq.s32.totalorder %s16, 1
    %p102 = por %p100, %p101
    %p104 = scmp.ne.s32.totalorder %s89, %s103
    %p105 = scmp.eq.s32.totalorder %s16, 0
    %p106 = por %p104, %p105
    %s107 = ssub.s32 %s10, %s17
    %p108 = scmp.eq.s32.totalorder %s107, 0
    %s110 = sadd.s32 %s109, 1
    %s111 = scalar_select %p108, %s109, %s110
    %p114 = pneg %p108
    %p115 = scmp.eq.s32.totalorder %s10, 1
    %p116 = por %p114, %p115
    %p117 = scmp.ne.s32.totalorder %s109, %s112
    %p118 = scmp.eq.s32.totalorder %s10, 0
    %p119 = por %p117, %p118
    %p120 = scmp.ne.s32.totalorder %s109, %s112
    %p121 = scmp.eq.s32.totalorder %s15, 1
    %p122 = por %p120, %p121
    %p123 = scmp.ne.s32.totalorder %s112, %s113
    %p124 = scmp.eq.s32.totalorder %s15, 0
    %p125 = por %p123, %p124
    %p126 = scmp.ne.s32.totalorder %s112, %s113
    %p127 = scmp.eq.s32.totalorder %s16, 1
    %p128 = por %p126, %p127
    %p130 = scmp.ne.s32.totalorder %s113, %s129
    %p131 = scmp.eq.s32.totalorder %s16, 0
    %p132 = por %p130, %p131
    %p133 = scmp.le.s32.totalorder 1, %s10
    %p134 = scmp.lt.s32.totalorder %s10, 3
    %p135 = pnand %p133, %p134
    %p136 = pneg %p135
    // Predicated region
    $region9: #{hnet_forward.17} parent=5 // pred_check
      _
    $region10: #{hnet_forward.17} parent=5 // pred_check_branch
      %138 = sbr.rel (%p135) target = $region12
    $region11: #{hnet_forward.17} parent=5 // pred_region
      %s139 = ssub.s32 %s10, 1
      // Predicated region
      $region13: #{hnet_forward.17} parent=11 // pred_check
        %p140 = pneg %p57
      $region14: #{hnet_forward.17} parent=11 // pred_check_branch
        %142 = sbr.rel (%p140) target = $region16
      $region15: #{hnet_forward.17} parent=11 // pred_region
        _
      $region16: #{hnet_forward.17} parent=11 // pred_fallthru
        _
      // Predicated region
      $region17: #{hnet_forward.17} parent=11 // pred_check
        %p143 = pneg %p78
      $region18: #{hnet_forward.17} parent=11 // pred_check_branch
        %145 = sbr.rel (%p143) target = $region20
      $region19: #{hnet_forward.17} parent=11 // pred_region
        _
      $region20: #{hnet_forward.17} parent=11 // pred_fallthru
        _
      // Predicated region
      $region21: #{hnet_forward.17} parent=11 // pred_check
        %p146 = pneg %p99
      $region22: #{hnet_forward.17} parent=11 // pred_check_branch
        %148 = sbr.rel (%p146) target = $region24
      $region23: #{hnet_forward.17} parent=11 // pred_region
        _
      $region24: #{hnet_forward.17} parent=11 // pred_fallthru
        _
    $region12: #{hnet_forward.17} parent=5 // pred_fallthru
      _
    %p149 = scmp.lt.s32.totalorder %s10, 2
    // Predicated region
    $region25: #{hnet_forward.17} parent=5 // pred_check
      %p150 = pneg %p149
    $region26: #{hnet_forward.17} parent=5 // pred_check_branch
      %152 = sbr.rel (%p150) target = $region28
    $region27: #{hnet_forward.17} parent=5 // pred_region
      // Predicated region
      $region29: #{hnet_forward.17} parent=27 // pred_check
        %p153 = pneg %p30
      $region30: #{hnet_forward.17} parent=27 // pred_check_branch
        %155 = sbr.rel (%p153) target = $region32
      $region31: #{hnet_forward.17} parent=27 // pred_region
        %p156 = scmp.lt.s32.totalorder %s10, 1
        %s157 = scalar_select %p156, %s10, 1
        %s158 = smul.addr %s157, 36
        %s159 = smul.addr %s158, 4
        %s160 = scalar_lea.vmem %s0, %s159
      $region32: #{hnet_forward.17} parent=27 // pred_fallthru
        _
    $region28: #{hnet_forward.17} parent=5 // pred_fallthru
      _
    %p161 = scmp.le.s32.totalorder 1, %s10
    %p162 = scmp.lt.s32.totalorder %s10, 3
    %p163 = pnand %p161, %p162
    %p164 = pneg %p163
    // Predicated region
    $region33: #{hnet_forward.17} parent=5 // pred_check
      _
    $region34: #{hnet_forward.17} parent=5 // pred_check_branch
      %166 = sbr.rel (%p163) target = $region36
    $region35: #{hnet_forward.17} parent=5 // pred_region
      %s167 = ssub.s32 %s10, 1
      %p168 = scmp.lt.s32.totalorder %s15, 1
      %s169 = scalar_select %p168, %s15, 1
      %s170 = smul.addr %s169, 36
      %s171 = smul.addr %s170, 4
      %s172 = scalar_lea.vmem %s0, %s171
      %p173 = pneg %p36
      %p174 = pneg %p33
      %p175 = pneg %p57
      %p176 = pneg %p54
      %p177 = pneg %p78
      %p178 = pneg %p75
      %p179 = pneg %p99
      %p180 = pneg %p96
      %p181 = pneg %p125
      %p182 = pneg %p122
      %p183 = scmp.lt.s32.totalorder %s15, 1
      %s184 = scalar_select %p183, %s15, 1
      %s185 = smul.addr %s184, 8
      %s186 = smul.addr %s185, 8
      %s187 = scalar_lea.vmem %s4, %s186
      %p188 = scmp.lt.s32.totalorder %s15, 1
      %s189 = scalar_select %p188, %s15, 1
      %s190 = smul.addr %s189, 36
      %s191 = smul.addr %s190, 4
      %s192 = scalar_lea.vmem %s0, %s191
      %p193 = scmp.lt.s32.totalorder %s15, 1
      %s194 = scalar_select %p193, %s15, 1
      %s195 = smul.addr %s194, 8
      %s196 = smul.addr %s195, 8
      %s197 = scalar_lea.vmem %s4, %s196
      %v199 = vld [vmem:[%s1] sm:$0xff]
      %v200 = vld [vmem:[%s1 + $0x8] sm:$0xf]
      %v201 = vld [vmem:[%s1 + $0xc] sm:$0xff]
      %v202 = vld [vmem:[%s1 + $0x14] sm:$0xf]
      %v203 = vld [vmem:[%s1 + $0x18] sm:$0xff]
      %v204 = vld [vmem:[%s1 + $0x20] sm:$0xf]
      %v205 = vld [vmem:[%s1 + $0x24] sm:$0xff]
      %v206 = vld [vmem:[%s1 + $0x2c] sm:$0xf]
      %v207 = vld [vmem:[%s1 + $0x30] sm:$0xff]
      %v208 = vld [vmem:[%s1 + $0x38] sm:$0xf]
      %v209 = vld [vmem:[%s1 + $0x3c] sm:$0xff]
      %v210 = vld [vmem:[%s1 + $0x44] sm:$0xf]
      %v211 = vld [vmem:[%s1 + $0x48] sm:$0xff]
      %v212 = vld [vmem:[%s1 + $0x50] sm:$0xf]
      %v213 = vld [vmem:[%s1 + $0x54] sm:$0xff]
      %v214 = vld [vmem:[%s1 + $0x5c] sm:$0xf]
      %v215 = vld [vmem:[%s192] sm:$0xf]
      %v216 = vld [vmem:[%s192 + $0x4] sm:$0xf]
      %v217 = vld [vmem:[%s192 + $0x8] sm:$0xf]
      %v218 = vld [vmem:[%s192 + $0xc] sm:$0xf]
      %v219 = vld [vmem:[%s192 + $0x10] sm:$0xf]
      %v220 = vld [vmem:[%s192 + $0x14] sm:$0xf]
      %v221 = vld [vmem:[%s192 + $0x18] sm:$0xf]
      %v222 = vld [vmem:[%s192 + $0x1c] sm:$0xf]
      %v223 = vld [vmem:[%s192 + $0x20] sm:$0xf]
      %v224 = vld [vmem:[%s192 + $0x24] sm:$0xf]
      %v225 = vld [vmem:[%s192 + $0x28] sm:$0xf]
      %v226 = vld [vmem:[%s192 + $0x2c] sm:$0xf]
      %v227 = vld [vmem:[%s192 + $0x30] sm:$0xf]
      %v228 = vld [vmem:[%s192 + $0x34] sm:$0xf]
      %v229 = vld [vmem:[%s192 + $0x38] sm:$0xf]
      %v230 = vld [vmem:[%s192 + $0x3c] sm:$0xf]
      %v231 = vld [vmem:[%s192 + $0x40] sm:$0xf]
      %v232 = vld [vmem:[%s192 + $0x44] sm:$0xf]
      %v233 = vld [vmem:[%s192 + $0x48] sm:$0xf]
      %v234 = vld [vmem:[%s192 + $0x4c] sm:$0xf]
      %v235 = vld [vmem:[%s192 + $0x50] sm:$0xf]
      %v236 = vld [vmem:[%s192 + $0x54] sm:$0xf]
      %v237 = vld [vmem:[%s192 + $0x58] sm:$0xf]
      %v238 = vld [vmem:[%s192 + $0x5c] sm:$0xf]
      %v239 = vld [vmem:[%s192 + $0x60] sm:$0xf]
      %v240 = vld [vmem:[%s192 + $0x64] sm:$0xf]
      %v241 = vld [vmem:[%s192 + $0x68] sm:$0xf]
      %v242 = vld [vmem:[%s192 + $0x6c] sm:$0xf]
      %v243 = vld [vmem:[%s192 + $0x70] sm:$0xf]
      %v244 = vld [vmem:[%s192 + $0x74] sm:$0xf]
      %v245 = vld [vmem:[%s192 + $0x78] sm:$0xf]
      %v246 = vld [vmem:[%s192 + $0x7c] sm:$0xf]
      %v247 = vld [vmem:[%s192 + $0x80] sm:$0xf]
      %v248 = vld [vmem:[%s192 + $0x84] sm:$0xf]
      %v249 = vld [vmem:[%s192 + $0x88] sm:$0xf]
      %v250 = vld [vmem:[%s192 + $0x8c] sm:$0xf]
      %v267 = vunpack.c.l.b16 %v199
      %v268 = vunpack.c.h.b16 %v199
      %v269 = vunpack.c.l.b16 %v200
      %v270 = vunpack.c.l.b16 %v201
      %v271 = vunpack.c.h.b16 %v201
      %v272 = vunpack.c.l.b16 %v202
      %v273 = vunpack.c.l.b16 %v203
      %v274 = vunpack.c.h.b16 %v203
      %v275 = vunpack.c.l.b16 %v204
      %v276 = vunpack.c.l.b16 %v205
      %v277 = vunpack.c.h.b16 %v205
      %v278 = vunpack.c.l.b16 %v206
      %v279 = vunpack.c.l.b16 %v207
      %v280 = vunpack.c.h.b16 %v207
      %v281 = vunpack.c.l.b16 %v208
      %v282 = vunpack.c.l.b16 %v209
      %v283 = vunpack.c.h.b16 %v209
      %v284 = vunpack.c.l.b16 %v210
      %v285 = vunpack.c.l.b16 %v211
      %v286 = vunpack.c.h.b16 %v211
      %v287 = vunpack.c.l.b16 %v212
      %v288 = vunpack.c.l.b16 %v213
      %v289 = vunpack.c.h.b16 %v213
      %v290 = vunpack.c.l.b16 %v214
      %v291 = vpack.c.b16 %v270, %v267
      %v292 = vpack.c.b16 %v271, %v268
      %v293 = vpack.c.b16 %v272, %v269
      %v294 = vpack.c.b16 %v276, %v273
      %v295 = vpack.c.b16 %v277, %v274
      %v296 = vpack.c.b16 %v278, %v275
      %v297 = vpack.c.b16 %v282, %v279
      %v298 = vpack.c.b16 %v283, %v280
      %v299 = vpack.c.b16 %v284, %v281
      %v300 = vpack.c.b16 %v288, %v285
      %v301 = vpack.c.b16 %v289, %v286
      %v302 = vpack.c.b16 %v290, %v287
      %v347 = vunpack.c.l.b16 %v215
      %v348 = vunpack.c.l.b16 %v216
      %v349 = vunpack.c.l.b16 %v217
      %v350 = vunpack.c.l.b16 %v218
      %v351 = vunpack.c.l.b16 %v219
      %v352 = vunpack.c.l.b16 %v220
      %v353 = vunpack.c.l.b16 %v221
      %v354 = vunpack.c.l.b16 %v222
      %v355 = vunpack.c.l.b16 %v223
      %v356 = vunpack.c.l.b16 %v224
      %v357 = vunpack.c.l.b16 %v225
      %v358 = vunpack.c.l.b16 %v226
      %v359 = vunpack.c.l.b16 %v227
      %v360 = vunpack.c.l.b16 %v228
      %v361 = vunpack.c.l.b16 %v229
      %v362 = vunpack.c.l.b16 %v230
      %v363 = vunpack.c.l.b16 %v231
      %v364 = vunpack.c.l.b16 %v232
      %v365 = vunpack.c.l.b16 %v233
      %v366 = vunpack.c.l.b16 %v234
      %v367 = vunpack.c.l.b16 %v235
      %v368 = vunpack.c.l.b16 %v236
      %v369 = vunpack.c.l.b16 %v237
      %v370 = vunpack.c.l.b16 %v238
      %v371 = vunpack.c.l.b16 %v239
      %v372 = vunpack.c.l.b16 %v240
      %v373 = vunpack.c.l.b16 %v241
      %v374 = vunpack.c.l.b16 %v242
      %v375 = vunpack.c.l.b16 %v243
      %v376 = vunpack.c.l.b16 %v244
      %v377 = vunpack.c.l.b16 %v245
      %v378 = vunpack.c.l.b16 %v246
      %v379 = vunpack.c.l.b16 %v247
      %v380 = vunpack.c.l.b16 %v248
      %v381 = vunpack.c.l.b16 %v249
      %v382 = vunpack.c.l.b16 %v250
      %v383 = vpack.c.b16 %v348, %v347
      %v384 = vpack.c.b16 %v350, %v349
      %v385 = vpack.c.b16 %v352, %v351
      %v386 = vpack.c.b16 %v354, %v353
      %v387 = vpack.c.b16 %v356, %v355
      %v388 = vpack.c.b16 %v358, %v357
      %v389 = vpack.c.b16 %v360, %v359
      %v390 = vpack.c.b16 %v362, %v361
      %v391 = vpack.c.b16 %v364, %v363
      %v392 = vpack.c.b16 %v366, %v365
      %v393 = vpack.c.b16 %v368, %v367
      %v394 = vpack.c.b16 %v370, %v369
      %v395 = vpack.c.b16 %v372, %v371
      %v396 = vpack.c.b16 %v374, %v373
      %v397 = vpack.c.b16 %v376, %v375
      %v398 = vpack.c.b16 %v378, %v377
      %v399 = vpack.c.b16 %v380, %v379
      %v400 = vpack.c.b16 %v382, %v381
      %vm419 = vcmask 261120
      %v421 = vsel %vm419, %v293, 0
      %v424 = vsel %vm419, %v296, 0
      %v427 = vsel %vm419, %v299, 0
      %v430 = vsel %vm419, %v302, 0
      %432 = vmatprep.subr.bf16.mxu0 0
      %433 = vmatpush1.bf16.msra.mxu0 %v383
      %434 = vmatprep.subr.bf16.mxu0 0
      %435 = vmatpush1.bf16.msra.mxu0 %v384
      %436 = vmatprep.subr.bf16.mxu0 0
      %437 = vmatpush1.bf16.msra.mxu0 %v385
      %438 = vmatprep.subr.bf16.mxu0 0
      %439 = vmatpush1.bf16.msra.mxu0 %v386
      %440 = vmatprep.subr.bf16.mxu0 0
      %441 = vmatpush1.bf16.msra.mxu0 %v387
      %442 = vmatprep.subr.bf16.mxu0 0
      %443 = vmatpush1.bf16.msra.mxu0 %v388
      %444 = vmatprep.subr.bf16.mxu0 0
      %445 = vmatpush1.bf16.msra.mxu0 %v389
      %446 = vmatprep.subr.bf16.mxu0 0
      %447 = vmatpush1.bf16.msra.mxu0 %v390
      %448 = vmatprep.subr.bf16.mxu0 0
      %449 = vmatpush1.bf16.msra.mxu0 %v391
      %450 = vmatprep.subr.bf16.mxu0 0
      %451 = vmatpush1.bf16.msra.mxu0 %v392
      %452 = vmatprep.subr.bf16.mxu0 0
      %453 = vmatpush1.bf16.msra.mxu0 %v393
      %454 = vmatprep.subr.bf16.mxu0 0
      %455 = vmatpush1.bf16.msra.mxu0 %v394
      %456 = vmatprep.subr.bf16.mxu0 0
      %457 = vmatpush1.bf16.msra.mxu0 %v395
      %458 = vmatprep.subr.bf16.mxu0 0
      %459 = vmatpush1.bf16.msra.mxu0 %v396
      %460 = vmatprep.subr.bf16.mxu0 0
      %461 = vmatpush1.bf16.msra.mxu0 %v397
      %462 = vmatprep.subr.bf16.mxu0 0
      %463 = vmatpush1.bf16.msra.mxu0 %v398
      %464 = vmatprep.mubr.bf16.mxu0 %v292
      %465 = vmatmul.mubr.bf16.gmra.mrb[0].mxu0 %v291
      %v466 = vpop.f32.mrb[0].mxu0
      %v467 = vadd.f32 0.0, %v466
      %v468 = vpop.f32.mrb[0].mxu0
      %v469 = vpop.f32.mrb[0].mxu0
      %v470 = vadd.f32 0.0, %v469
      %v471 = vpop.f32.mrb[0].mxu0
      %472 = vmatprep.mubr.bf16.mxu0 %v295
      %473 = vmatmul.mubr.bf16.gmra.mrb[0].mxu0 %v294
      %v474 = vpop.f32.mrb[0].mxu0
      %v475 = vadd.f32 0.0, %v474
      %v476 = vpop.f32.mrb[0].mxu0
      %v477 = vpop.f32.mrb[0].mxu0
      %v478 = vadd.f32 0.0, %v477
      %v479 = vpop.f32.mrb[0].mxu0
      %480 = vmatprep.mubr.bf16.mxu0 %v298
      %481 = vmatmul.mubr.bf16.gmra.mrb[0].mxu0 %v297
      %v482 = vpop.f32.mrb[0].mxu0
      %v483 = vadd.f32 0.0, %v482
      %v484 = vpop.f32.mrb[0].mxu0
      %v485 = vpop.f32.mrb[0].mxu0
      %v486 = vadd.f32 0.0, %v485
      %v487 = vpop.f32.mrb[0].mxu0
      %488 = vmatprep.mubr.bf16.mxu0 %v301
      %489 = vmatmul.mubr.bf16.gmra.mrb[0].mxu0 %v300
      %v490 = vpop.f32.mrb[0].mxu0
      %v491 = vadd.f32 0.0, %v490
      %v492 = vpop.f32.mrb[0].mxu0
      %v493 = vpop.f32.mrb[0].mxu0
      %v494 = vadd.f32 0.0, %v493
      %v495 = vpop.f32.mrb[0].mxu0
      %496 = vdwg.mxu0
      %497 = vmatprep.subr.bf16.mxu0 0
      %498 = vmatpush1.bf16.msra.mxu0 %v399
      %499 = vmatprep.subr.bf16.mxu0 0
      %500 = vmatpush1.bf16.msra.mxu0 %v400
      %501 = vmatprep.subr.bf16.mxu0 0
      %502 = vmatpush1.bf16.msra.mxu0 0
      %503 = vmatprep.subr.bf16.mxu0 0
      %504 = vmatpush1.bf16.msra.mxu0 0
      %505 = vmatprep.subr.bf16.mxu0 0
      %506 = vmatpush1.bf16.msra.mxu0 0
      %507 = vmatprep.subr.bf16.mxu0 0
      %508 = vmatpush1.bf16.msra.mxu0 0
      %509 = vmatprep.subr.bf16.mxu0 0
      %510 = vmatpush1.bf16.msra.mxu0 0
      %511 = vmatprep.subr.bf16.mxu0 0
      %512 = vmatpush1.bf16.msra.mxu0 0
      %513 = vmatprep.subr.bf16.mxu0 0
      %514 = vmatpush1.bf16.msra.mxu0 0
      %515 = vmatprep.subr.bf16.mxu0 0
      %516 = vmatpush1.bf16.msra.mxu0 0
      %517 = vmatprep.subr.bf16.mxu0 0
      %518 = vmatpush1.bf16.msra.mxu0 0
      %519 = vmatprep.subr.bf16.mxu0 0
      %520 = vmatpush1.bf16.msra.mxu0 0
      %521 = vmatprep.subr.bf16.mxu0 0
      %522 = vmatpush1.bf16.msra.mxu0 0
      %523 = vmatprep.subr.bf16.mxu0 0
      %524 = vmatpush1.bf16.msra.mxu0 0
      %525 = vmatprep.subr.bf16.mxu0 0
      %526 = vmatpush1.bf16.msra.mxu0 0
      %527 = vmatprep.subr.bf16.mxu0 0
      %528 = vmatpush1.bf16.msra.mxu0 0
      %529 = vmatprep.mubr.bf16.mxu0 0
      %530 = vmatmul.mubr.bf16.gmra.mrb[0].mxu0 %v421
      %v531 = vpop.f32.mrb[0].mxu0
      %v532 = vadd.f32 %v467, %v531
      %v533 = vpop.f32.mrb[0].mxu0
      %v534 = vpop.f32.mrb[0].mxu0
      %v535 = vadd.f32 %v470, %v534
      %v536 = vpop.f32.mrb[0].mxu0
      %537 = vmatprep.mubr.bf16.mxu0 0
      %538 = vmatmul.mubr.bf16.gmra.mrb[0].mxu0 %v424
      %v539 = vpop.f32.mrb[0].mxu0
      %v540 = vadd.f32 %v475, %v539
      %v541 = vpop.f32.mrb[0].mxu0
      %v542 = vpop.f32.mrb[0].mxu0
      %v543 = vadd.f32 %v478, %v542
      %v544 = vpop.f32.mrb[0].mxu0
      %545 = vmatprep.mubr.bf16.mxu0 0
      %546 = vmatmul.mubr.bf16.gmra.mrb[0].mxu0 %v427
      %v547 = vpop.f32.mrb[0].mxu0
      %v548 = vadd.f32 %v483, %v547
      %v549 = vpop.f32.mrb[0].mxu0
      %v550 = vpop.f32.mrb[0].mxu0
      %v551 = vadd.f32 %v486, %v550
      %v552 = vpop.f32.mrb[0].mxu0
      %553 = vmatprep.mubr.bf16.mxu0 0
      %554 = vmatmul.mubr.bf16.gmra.mrb[0].mxu0 %v430
      %v555 = vpop.f32.mrb[0].mxu0
      %v556 = vadd.f32 %v491, %v555
      %v557 = vpop.f32.mrb[0].mxu0
      %v558 = vpop.f32.mrb[0].mxu0
      %v559 = vadd.f32 %v494, %v558
      %v560 = vpop.f32.mrb[0].mxu0
      %561 = vdwg.mxu0
      %v562 = vadd.f32 %v532, %v540
      %v563 = vadd.f32 %v535, %v543
      %v564 = vadd.f32 %v562, %v548
      %v565 = vadd.f32 %v563, %v551
      %v566 = vadd.f32 %v564, %v556
      %v567 = vadd.f32 %v565, %v559
      %vm568 = vcmask 130048
      %v569 = vsel %vm568, %v566, 0.0
      %570 = vadd.xlane.f32.xlu0 %v569
      %v571 = vpop.xlane.xlu0 %570
      %v572 = vsel %vm568, %v567, 0.0
      %573 = vadd.xlane.f32.xlu0 %v572
      %v574 = vpop.xlane.xlu0 %573
      %v575 = vmul.f32 %v571, 0.015625
      %v576 = vmul.f32 %v574, 0.015625
      %v577 = vsub.f32 %v532, %v575
      %v578 = vsub.f32 %v535, %v576
      %v579 = vsub.f32 %v540, %v575
      %v580 = vsub.f32 %v543, %v576
      %v581 = vsub.f32 %v548, %v575
      %v582 = vsub.f32 %v551, %v576
      %v583 = vsub.f32 %v556, %v575
      %v584 = vsub.f32 %v559, %v576
      %v585 = vmul.f32 %v577, %v577
      %v586 = vmul.f32 %v578, %v578
      %v587 = vmul.f32 %v579, %v579
      %v588 = vmul.f32 %v580, %v580
      %v589 = vadd.f32 %v585, %v587
      %v590 = vadd.f32 %v586, %v588
      %v591 = vmul.f32 %v581, %v581
      %v592 = vmul.f32 %v582, %v582
      %v593 = vadd.f32 %v589, %v591
      %v594 = vadd.f32 %v590, %v592
      %v595 = vmul.f32 %v583, %v583
      %v596 = vmul.f32 %v584, %v584
      %v597 = vadd.f32 %v593, %v595
      %v598 = vadd.f32 %v594, %v596
      %v599 = vsel %vm568, %v597, 0.0
      %600 = vadd.xlane.f32.xlu0 %v599
      %v601 = vpop.xlane.xlu0 %600
      %v602 = vsel %vm568, %v598, 0.0
      %603 = vadd.xlane.f32.xlu0 %v602
      %v604 = vpop.xlane.xlu0 %603
      %v605 = vmul.f32 %v601, 0.015625
      %v606 = vmul.f32 %v604, 0.015625
      %v607 = vadd.f32 %v605, 1e-05
      %v608 = vadd.f32 %v606, 1e-05
      %v609 = vrsqrt.pop %v607
      %v610 = vrsqrt.pop %v608
      %v611 = vld [vmem:[%s2] sm:$0xff]
      %v612 = vld [vmem:[%s2 + $0x8] sm:$0xff]
      %v613 = vmul.f32 %v609, %v611
      %v614 = vmul.f32 %v610, %v612
      %v615 = vld [vmem:[%s3] sm:$0xff]
      %v616 = vld [vmem:[%s3 + $0x8] sm:$0xff]
      %618 = vset.pattern.permute.xlu0 0
      %619 = vperm.xlu0 %618, %v613
      %v620 = vpop.permute.xlu0 %619
      %623 = vset.pattern.permute.xlu0 0
      %624 = vperm.xlu0 %623, %v614
      %v625 = vpop.permute.xlu0 %624
      %v627 = vmul.f32 %v577, %v620
      %v628 = vmul.f32 %v578, %v625
      %630 = vset.pattern.permute.xlu0 0
      %631 = vperm.xlu0 %630, %v615
      %v632 = vpop.permute.xlu0 %631
      %635 = vset.pattern.permute.xlu0 0
      %636 = vperm.xlu0 %635, %v616
      %v637 = vpop.permute.xlu0 %636
      %v639 = vadd.f32 %v627, %v632
      %v640 = vadd.f32 %v628, %v637
      %v641 = vmax.f32 %v639, 0.0
      %v642 = vmax.f32 %v640, 0.0
      %643 = vst.msk [vmem:[%s197] sm:$0xff] %vm568, %v641
      %644 = vst.msk [vmem:[%s197 + $0x8] sm:$0xff] %vm568, %v642
      %v645 = vmul.f32 %v579, %v620
      %v646 = vmul.f32 %v580, %v625
      %v647 = vadd.f32 %v645, %v632
      %v648 = vadd.f32 %v646, %v637
      %v649 = vmax.f32 %v647, 0.0
      %v650 = vmax.f32 %v648, 0.0
      %651 = vst.msk [vmem:[%s197 + $0x10] sm:$0xff] %vm568, %v649
      %652 = vst.msk [vmem:[%s197 + $0x18] sm:$0xff] %vm568, %v650
      %v653 = vmul.f32 %v581, %v620
      %v654 = vmul.f32 %v582, %v625
      %v655 = vadd.f32 %v653, %v632
      %v656 = vadd.f32 %v654, %v637
      %v657 = vmax.f32 %v655, 0.0
      %v658 = vmax.f32 %v656, 0.0
      %659 = vst.msk [vmem:[%s197 + $0x20] sm:$0xff] %vm568, %v657
      %660 = vst.msk [vmem:[%s197 + $0x28] sm:$0xff] %vm568, %v658
      %v661 = vmul.f32 %v583, %v620
      %v662 = vmul.f32 %v584, %v625
      %v663 = vadd.f32 %v661, %v632
      %v664 = vadd.f32 %v662, %v637
      %v665 = vmax.f32 %v663, 0.0
      %v666 = vmax.f32 %v664, 0.0
      %667 = vst.msk [vmem:[%s197 + $0x30] sm:$0xff] %vm568, %v665
      %668 = vst.msk [vmem:[%s197 + $0x38] sm:$0xff] %vm568, %v666
      %p669 = scmp.lt.s32.totalorder %s15, 1
      %s670 = scalar_select %p669, %s15, 1
      %s671 = smul.addr %s670, 8
      %s672 = smul.addr %s671, 8
      %s673 = scalar_lea.vmem %s4, %s672
      // Predicated region
      $region37: #{hnet_forward.17} parent=35 // pred_check
        %p674 = pneg %p122
      $region38: #{hnet_forward.17} parent=35 // pred_check_branch
        %676 = sbr.rel (%p674) target = $region40
      $region39: #{hnet_forward.17} parent=35 // pred_region
        _
      $region40: #{hnet_forward.17} parent=35 // pred_fallthru
        _
    $region36: #{hnet_forward.17} parent=5 // pred_fallthru
      _
    %p677 = scmp.le.s32.totalorder 2, %s10
    // Predicated region
    $region41: #{hnet_forward.17} parent=5 // pred_check
      %p678 = pneg %p677
    $region42: #{hnet_forward.17} parent=5 // pred_check_branch
      %680 = sbr.rel (%p678) target = $region44
    $region43: #{hnet_forward.17} parent=5 // pred_region
      %s681 = ssub.s32 %s10, 2
      // Predicated region
      $region45: #{hnet_forward.17} parent=43 // pred_check
        %p682 = pneg %p128
      $region46: #{hnet_forward.17} parent=43 // pred_check_branch
        %684 = sbr.rel (%p682) target = $region48
      $region47: #{hnet_forward.17} parent=43 // pred_region
        %p685 = scmp.lt.s32.totalorder %s16, 1
        %s686 = scalar_select %p685, %s16, 1
        %s687 = smul.addr %s686, 8
        %s688 = smul.addr %s687, 8
        %s689 = scalar_lea.vmem %s4, %s688
      $region48: #{hnet_forward.17} parent=43 // pred_fallthru
        _
    $region44: #{hnet_forward.17} parent=5 // pred_fallthru
      _
  $region6: #{hnet_forward.17} parent=0 // loop_footer
    %s14 = sadd.s32 1, %s10
  $region7: #{hnet_forward.17} parent=0 // loop_footer_branch
    %9 = sbr.rel target = $region3
  $region8: #{hnet_forward.17} parent=0 // loop_exit
    _

// kernel: hnet_forward.18
$region0: #{hnet_forward.18}
  #allocation0 [shape = 'u32[]', space=smem, size = 0x4, offset = 0x4, fixed_abs, tag = 'smem constant byte address 0x4 - core index']
  #allocation1 [shape = 'u32[144,128]{1,0:T(1,128)}', space=vmem, size = 0x12000, scoped, tag = 'internal scratch']
  %s0 = inlined_call_operand.vmem [shape: bf16[2,144,64], index: 0, kind: input, shape index: {}]
  %s1 = inlined_call_operand.vmem [shape: bf16[32,144], index: 1, kind: input, shape index: {}]
  %s2 = inlined_call_operand.vmem [shape: f32[8,1], index: 2, kind: input, shape index: {}]
  %s3 = inlined_call_operand.vmem [shape: f32[8,1], index: 3, kind: input, shape index: {}]
  %s4 = inlined_call_operand.vmem [shape: f32[2,32,64], index: 4, kind: output, shape index: {}]
  %s5 = sld [smem:[#allocation0]]
  $region49: #{hnet_forward.18} parent=0
    _
  %s7 = ssub.s32 1, %s5
  %s8 = scalar_select 0, %s7, %s5
  loop: start=0, step=1, limit=4
  $region2: #{hnet_forward.18} parent=0 // loop_pre_header
    _
  $region3: #{hnet_forward.18} parent=0 // loop_header
    %s10 = sphi 0, %s14
    %p11 = scmp.ge.s32.totalorder %s10, 4
    %s20 = sphi 0, %s22
    %s23 = sphi 0, %s20
    %s24 = sphi 0, %s23
    %s40 = sphi 0, %s24
    %s44 = sphi 0, %s44
    %s46 = sphi 0, %s44
    %s47 = sphi 0, %s46
    %s61 = sphi 0, %s47
    %s65 = sphi 0, %s65
    %s67 = sphi 0, %s65
    %s68 = sphi 0, %s67
    %s82 = sphi 0, %s68
    %s86 = sphi 0, %s86
    %s88 = sphi 0, %s86
    %s89 = sphi 0, %s88
    %s103 = sphi 0, %s89
    %s109 = sphi 0, %s111
    %s112 = sphi 0, %s109
    %s113 = sphi 0, %s112
    %s129 = sphi 0, %s113
  $region4: #{hnet_forward.18} parent=0 // loop_header_branch
    %13 = sbr.rel (%p11) target = $region8
  $region5: #{hnet_forward.18} parent=0 // loop_body
    %s15 = ssub.s32 %s10, 1
    %s16 = ssub.s32 %s10, 2
    %s17 = sadd.s32 %s10, 1
    %s18 = ssub.s32 %s10, %s17
    %p19 = scmp.eq.s32.totalorder %s18, 0
    %s21 = sadd.s32 %s20, 1
    %s22 = scalar_select %p19, %s20, %s21
    %p25 = pneg %p19
    %p26 = scmp.eq.s32.totalorder %s10, 1
    %p27 = por %p25, %p26
    %p28 = scmp.ne.s32.totalorder %s20, %s23
    %p29 = scmp.eq.s32.totalorder %s10, 0
    %p30 = por %p28, %p29
    %p31 = scmp.ne.s32.totalorder %s20, %s23
    %p32 = scmp.eq.s32.totalorder %s15, 1
    %p33 = por %p31, %p32
    %p34 = scmp.ne.s32.totalorder %s23, %s24
    %p35 = scmp.eq.s32.totalorder %s15, 0
    %p36 = por %p34, %p35
    %p37 = scmp.ne.s32.totalorder %s23, %s24
    %p38 = scmp.eq.s32.totalorder %s16, 1
    %p39 = por %p37, %p38
    %p41 = scmp.ne.s32.totalorder %s24, %s40
    %p42 = scmp.eq.s32.totalorder %s16, 0
    %p43 = por %p41, %p42
    %s45 = sadd.s32 %s44, 1
    %p48 = scmp.eq.s32.totalorder %s10, 1
    %p49 = scmp.ne.s32.totalorder %s44, %s46
    %p50 = scmp.eq.s32.totalorder %s10, 0
    %p51 = por %p49, %p50
    %p52 = scmp.ne.s32.totalorder %s44, %s46
    %p53 = scmp.eq.s32.totalorder %s15, 1
    %p54 = por %p52, %p53
    %p55 = scmp.ne.s32.totalorder %s46, %s47
    %p56 = scmp.eq.s32.totalorder %s15, 0
    %p57 = por %p55, %p56
    %p58 = scmp.ne.s32.totalorder %s46, %s47
    %p59 = scmp.eq.s32.totalorder %s16, 1
    %p60 = por %p58, %p59
    %p62 = scmp.ne.s32.totalorder %s47, %s61
    %p63 = scmp.eq.s32.totalorder %s16, 0
    %p64 = por %p62, %p63
    %s66 = sadd.s32 %s65, 1
    %p69 = scmp.eq.s32.totalorder %s10, 1
    %p70 = scmp.ne.s32.totalorder %s65, %s67
    %p71 = scmp.eq.s32.totalorder %s10, 0
    %p72 = por %p70, %p71
    %p73 = scmp.ne.s32.totalorder %s65, %s67
    %p74 = scmp.eq.s32.totalorder %s15, 1
    %p75 = por %p73, %p74
    %p76 = scmp.ne.s32.totalorder %s67, %s68
    %p77 = scmp.eq.s32.totalorder %s15, 0
    %p78 = por %p76, %p77
    %p79 = scmp.ne.s32.totalorder %s67, %s68
    %p80 = scmp.eq.s32.totalorder %s16, 1
    %p81 = por %p79, %p80
    %p83 = scmp.ne.s32.totalorder %s68, %s82
    %p84 = scmp.eq.s32.totalorder %s16, 0
    %p85 = por %p83, %p84
    %s87 = sadd.s32 %s86, 1
    %p90 = scmp.eq.s32.totalorder %s10, 1
    %p91 = scmp.ne.s32.totalorder %s86, %s88
    %p92 = scmp.eq.s32.totalorder %s10, 0
    %p93 = por %p91, %p92
    %p94 = scmp.ne.s32.totalorder %s86, %s88
    %p95 = scmp.eq.s32.totalorder %s15, 1
    %p96 = por %p94, %p95
    %p97 = scmp.ne.s32.totalorder %s88, %s89
    %p98 = scmp.eq.s32.totalorder %s15, 0
    %p99 = por %p97, %p98
    %p100 = scmp.ne.s32.totalorder %s88, %s89
    %p101 = scmp.eq.s32.totalorder %s16, 1
    %p102 = por %p100, %p101
    %p104 = scmp.ne.s32.totalorder %s89, %s103
    %p105 = scmp.eq.s32.totalorder %s16, 0
    %p106 = por %p104, %p105
    %s107 = ssub.s32 %s10, %s17
    %p108 = scmp.eq.s32.totalorder %s107, 0
    %s110 = sadd.s32 %s109, 1
    %s111 = scalar_select %p108, %s109, %s110
    %p114 = pneg %p108
    %p115 = scmp.eq.s32.totalorder %s10, 1
    %p116 = por %p114, %p115
    %p117 = scmp.ne.s32.totalorder %s109, %s112
    %p118 = scmp.eq.s32.totalorder %s10, 0
    %p119 = por %p117, %p118
    %p120 = scmp.ne.s32.totalorder %s109, %s112
    %p121 = scmp.eq.s32.totalorder %s15, 1
    %p122 = por %p120, %p121
    %p123 = scmp.ne.s32.totalorder %s112, %s113
    %p124 = scmp.eq.s32.totalorder %s15, 0
    %p125 = por %p123, %p124
    %p126 = scmp.ne.s32.totalorder %s112, %s113
    %p127 = scmp.eq.s32.totalorder %s16, 1
    %p128 = por %p126, %p127
    %p130 = scmp.ne.s32.totalorder %s113, %s129
    %p131 = scmp.eq.s32.totalorder %s16, 0
    %p132 = por %p130, %p131
    %p133 = scmp.le.s32.totalorder 1, %s10
    %p134 = scmp.lt.s32.totalorder %s10, 3
    %p135 = pnand %p133, %p134
    %p136 = pneg %p135
    // Predicated region
    $region9: #{hnet_forward.18} parent=5 // pred_check
      _
    $region10: #{hnet_forward.18} parent=5 // pred_check_branch
      %138 = sbr.rel (%p135) target = $region12
    $region11: #{hnet_forward.18} parent=5 // pred_region
      %s139 = ssub.s32 %s10, 1
      // Predicated region
      $region13: #{hnet_forward.18} parent=11 // pred_check
        %p140 = pneg %p57
      $region14: #{hnet_forward.18} parent=11 // pred_check_branch
        %142 = sbr.rel (%p140) target = $region16
      $region15: #{hnet_forward.18} parent=11 // pred_region
        _
      $region16: #{hnet_forward.18} parent=11 // pred_fallthru
        _
      // Predicated region
      $region17: #{hnet_forward.18} parent=11 // pred_check
        %p143 = pneg %p78
      $region18: #{hnet_forward.18} parent=11 // pred_check_branch
        %145 = sbr.rel (%p143) target = $region20
      $region19: #{hnet_forward.18} parent=11 // pred_region
        _
      $region20: #{hnet_forward.18} parent=11 // pred_fallthru
        _
      // Predicated region
      $region21: #{hnet_forward.18} parent=11 // pred_check
        %p146 = pneg %p99
      $region22: #{hnet_forward.18} parent=11 // pred_check_branch
        %148 = sbr.rel (%p146) target = $region24
      $region23: #{hnet_forward.18} parent=11 // pred_region
        _
      $region24: #{hnet_forward.18} parent=11 // pred_fallthru
        _
    $region12: #{hnet_forward.18} parent=5 // pred_fallthru
      _
    %p149 = scmp.lt.s32.totalorder %s10, 2
    // Predicated region
    $region25: #{hnet_forward.18} parent=5 // pred_check
      %p150 = pneg %p149
    $region26: #{hnet_forward.18} parent=5 // pred_check_branch
      %152 = sbr.rel (%p150) target = $region28
    $region27: #{hnet_forward.18} parent=5 // pred_region
      // Predicated region
      $region29: #{hnet_forward.18} parent=27 // pred_check
        %p153 = pneg %p30
      $region30: #{hnet_forward.18} parent=27 // pred_check_branch
        %155 = sbr.rel (%p153) target = $region32
      $region31: #{hnet_forward.18} parent=27 // pred_region
        %p156 = scmp.lt.s32.totalorder %s10, 1
        %s157 = scalar_select %p156, %s10, 1
        %s158 = smul.addr %s157, 18
        %s159 = smul.addr %s158, 4
        %s160 = scalar_lea.vmem %s0, %s159
      $region32: #{hnet_forward.18} parent=27 // pred_fallthru
        _
    $region28: #{hnet_forward.18} parent=5 // pred_fallthru
      _
    %p161 = scmp.le.s32.totalorder 1, %s10
    %p162 = scmp.lt.s32.totalorder %s10, 3
    %p163 = pnand %p161, %p162
    %p164 = pneg %p163
    // Predicated region
    $region33: #{hnet_forward.18} parent=5 // pred_check
      _
    $region34: #{hnet_forward.18} parent=5 // pred_check_branch
      %166 = sbr.rel (%p163) target = $region36
    $region35: #{hnet_forward.18} parent=5 // pred_region
      %s167 = ssub.s32 %s10, 1
      %p168 = scmp.lt.s32.totalorder %s15, 1
      %s169 = scalar_select %p168, %s15, 1
      %s170 = smul.addr %s169, 18
      %s171 = smul.addr %s170, 4
      %s172 = scalar_lea.vmem %s0, %s171
      %p173 = pneg %p36
      %p174 = pneg %p33
      %p175 = pneg %p57
      %p176 = pneg %p54
      %p177 = pneg %p78
      %p178 = pneg %p75
      %p179 = pneg %p99
      %p180 = pneg %p96
      %p181 = pneg %p125
      %p182 = pneg %p122
      %p183 = scmp.lt.s32.totalorder %s15, 1
      %s184 = scalar_select %p183, %s15, 1
      %s185 = smul.addr %s184, 4
      %s186 = smul.addr %s185, 8
      %s187 = scalar_lea.vmem %s4, %s186
      %p188 = scmp.lt.s32.totalorder %s15, 1
      %s189 = scalar_select %p188, %s15, 1
      %s190 = smul.addr %s189, 18
      %s191 = smul.addr %s190, 4
      %s192 = scalar_lea.vmem %s0, %s191
      %p193 = scmp.lt.s32.totalorder %s15, 1
      %s194 = scalar_select %p193, %s15, 1
      %s195 = smul.addr %s194, 4
      %s196 = smul.addr %s195, 8
      %s197 = scalar_lea.vmem %s4, %s196
      %v199 = vld [vmem:[%s1] sm:$0xff]
      %v200 = vld [vmem:[%s1 + $0x8] sm:$0xff]
      %v201 = vld [vmem:[%s1 + $0x10] sm:$0xff]
      %v202 = vld [vmem:[%s1 + $0x18] sm:$0xff]
      %v203 = vld [vmem:[%s192] sm:$0xf]
      %v204 = vld [vmem:[%s192 + $0x4] sm:$0xf]
      %v205 = vld [vmem:[%s192 + $0x8] sm:$0xf]
      %v206 = vld [vmem:[%s192 + $0xc] sm:$0xf]
      %v207 = vld [vmem:[%s192 + $0x10] sm:$0xf]
      %v208 = vld [vmem:[%s192 + $0x14] sm:$0xf]
      %v209 = vld [vmem:[%s192 + $0x18] sm:$0xf]
      %v210 = vld [vmem:[%s192 + $0x1c] sm:$0xf]
      %v211 = vld [vmem:[%s192 + $0x20] sm:$0xf]
      %v212 = vld [vmem:[%s192 + $0x24] sm:$0xf]
      %v213 = vld [vmem:[%s192 + $0x28] sm:$0xf]
      %v214 = vld [vmem:[%s192 + $0x2c] sm:$0xf]
      %v215 = vld [vmem:[%s192 + $0x30] sm:$0xf]
      %v216 = vld [vmem:[%s192 + $0x34] sm:$0xf]
      %v217 = vld [vmem:[%s192 + $0x38] sm:$0xf]
      %v218 = vld [vmem:[%s192 + $0x3c] sm:$0xf]
      %v219 = vld [vmem:[%s192 + $0x40] sm:$0xf]
      %v220 = vld [vmem:[%s192 + $0x44] sm:$0xf]
      %v225 = vunpack.c.l.b16 %v199
      %v226 = vunpack.c.h.b16 %v199
      %v227 = vunpack.c.l.b16 %v200
      %v228 = vunpack.c.h.b16 %v200
      %v229 = vunpack.c.l.b16 %v201
      %v230 = vunpack.c.h.b16 %v201
      %v231 = vunpack.c.l.b16 %v202
      %v232 = vunpack.c.h.b16 %v202
      %v233 = vpack.c.b16 %v227, %v225
      %v234 = vpack.c.b16 %v228, %v226
      %v235 = vpack.c.b16 %v231, %v229
      %v236 = vpack.c.b16 %v232, %v230
      %v257 = vunpack.c.l.b16 %v203
      %v258 = vunpack.c.l.b16 %v204
      %v259 = vunpack.c.l.b16 %v205
      %v260 = vunpack.c.l.b16 %v206
      %v261 = vunpack.c.l.b16 %v207
      %v262 = vunpack.c.l.b16 %v208
      %v263 = vunpack.c.l.b16 %v209
      %v264 = vunpack.c.l.b16 %v210
      %v265 = vunpack.c.l.b16 %v211
      %v266 = vunpack.c.l.b16 %v212
      %v267 = vunpack.c.l.b16 %v213
      %v268 = vunpack.c.l.b16 %v214
      %v269 = vunpack.c.l.b16 %v215
      %v270 = vunpack.c.l.b16 %v216
      %v271 = vunpack.c.l.b16 %v217
      %v272 = vunpack.c.l.b16 %v218
      %v273 = vunpack.c.l.b16 %v219
      %v274 = vunpack.c.l.b16 %v220
      %v275 = vpack.c.b16 %v258, %v257
      %v276 = vpack.c.b16 %v260, %v259
      %v277 = vpack.c.b16 %v262, %v261
      %v278 = vpack.c.b16 %v264, %v263
      %v279 = vpack.c.b16 %v266, %v265
      %v280 = vpack.c.b16 %v268, %v267
      %v281 = vpack.c.b16 %v270, %v269
      %v282 = vpack.c.b16 %v272, %v271
      %v283 = vpack.c.b16 %v274, %v273
      %vm293 = vcmask 130048
      %v295 = vsel %vm293, %v234, 0
      %v298 = vsel %vm293, %v236, 0
      %300 = vmatprep.subr.bf16.mxu0 0
      %301 = vmatpush1.bf16.msra.mxu0 %v275
      %302 = vmatprep.subr.bf16.mxu0 0
      %303 = vmatpush1.bf16.msra.mxu0 %v276
      %304 = vmatprep.subr.bf16.mxu0 0
      %305 = vmatpush1.bf16.msra.mxu0 %v277
      %306 = vmatprep.subr.bf16.mxu0 0
      %307 = vmatpush1.bf16.msra.mxu0 %v278
      %308 = vmatprep.subr.bf16.mxu0 0
      %309 = vmatpush1.bf16.msra.mxu0 %v279
      %310 = vmatprep.subr.bf16.mxu0 0
      %311 = vmatpush1.bf16.msra.mxu0 %v280
      %312 = vmatprep.subr.bf16.mxu0 0
      %313 = vmatpush1.bf16.msra.mxu0 %v281
      %314 = vmatprep.subr.bf16.mxu0 0
      %315 = vmatpush1.bf16.msra.mxu0 %v282
      %316 = vmatprep.subr.bf16.mxu0 0
      %317 = vmatpush1.bf16.msra.mxu0 %v283
      %318 = vmatprep.subr.bf16.mxu0 0
      %319 = vmatpush1.bf16.msra.mxu0 0
      %320 = vmatprep.subr.bf16.mxu0 0
      %321 = vmatpush1.bf16.msra.mxu0 0
      %322 = vmatprep.subr.bf16.mxu0 0
      %323 = vmatpush1.bf16.msra.mxu0 0
      %324 = vmatprep.subr.bf16.mxu0 0
      %325 = vmatpush1.bf16.msra.mxu0 0
      %326 = vmatprep.subr.bf16.mxu0 0
      %327 = vmatpush1.bf16.msra.mxu0 0
      %328 = vmatprep.subr.bf16.mxu0 0
      %329 = vmatpush1.bf16.msra.mxu0 0
      %330 = vmatprep.subr.bf16.mxu0 0
      %331 = vmatpush1.bf16.msra.mxu0 0
      %332 = vmatprep.mubr.bf16.mxu0 %v295
      %333 = vmatmul.mubr.bf16.gmra.mrb[0].mxu0 %v233
      %v334 = vpop.f32.mrb[0].mxu0
      %v335 = vadd.f32 0.0, %v334
      %v336 = vpop.f32.mrb[0].mxu0
      %v337 = vpop.f32.mrb[0].mxu0
      %v338 = vadd.f32 0.0, %v337
      %v339 = vpop.f32.mrb[0].mxu0
      %340 = vmatprep.mubr.bf16.mxu0 %v298
      %341 = vmatmul.mubr.bf16.gmra.mrb[0].mxu0 %v235
      %v342 = vpop.f32.mrb[0].mxu0
      %v343 = vadd.f32 0.0, %v342
      %v344 = vpop.f32.mrb[0].mxu0
      %v345 = vpop.f32.mrb[0].mxu0
      %v346 = vadd.f32 0.0, %v345
      %v347 = vpop.f32.mrb[0].mxu0
      %348 = vdwg.mxu0
      %v349 = vadd.f32 %v335, %v338
      %v350 = vadd.f32 %v349, %v343
      %v351 = vadd.f32 %v350, %v346
      %vm352 = vcmask 523264
      %v353 = vsel %vm352, %v351, 0.0
      %354 = vadd.xlane.f32.xlu0 %v353
      %v355 = vpop.xlane.xlu0 %354
      %v356 = vmul.f32 %v355, 0.00390625
      %v357 = vsub.f32 %v335, %v356
      %v358 = vsub.f32 %v338, %v356
      %v359 = vsub.f32 %v343, %v356
      %v360 = vsub.f32 %v346, %v356
      %v361 = vmul.f32 %v357, %v357
      %v362 = vmul.f32 %v358, %v358
      %v363 = vadd.f32 %v361, %v362
      %v364 = vmul.f32 %v359, %v359
      %v365 = vadd.f32 %v363, %v364
      %v366 = vmul.f32 %v360, %v360
      %v367 = vadd.f32 %v365, %v366
      %v368 = vsel %vm352, %v367, 0.0
      %369 = vadd.xlane.f32.xlu0 %v368
      %v370 = vpop.xlane.xlu0 %369
      %v371 = vmul.f32 %v370, 0.00390625
      %v372 = vadd.f32 %v371, 1e-05
      %v373 = vrsqrt.pop %v372
      %v374 = vld [vmem:[%s2] sm:$0xff]
      %v375 = vmul.f32 %v373, %v374
      %v376 = vld [vmem:[%s3] sm:$0xff]
      %378 = vset.pattern.permute.xlu0 0
      %379 = vperm.xlu0 %378, %v375
      %v380 = vpop.permute.xlu0 %379
      %v382 = vmul.f32 %v357, %v380
      %384 = vset.pattern.permute.xlu0 0
      %385 = vperm.xlu0 %384, %v376
      %v386 = vpop.permute.xlu0 %385
      %v388 = vadd.f32 %v382, %v386
      %v389 = vmax.f32 %v388, 0.0
      %390 = vst.msk [vmem:[%s197] sm:$0xff] %vm352, %v389
      %v391 = vmul.f32 %v358, %v380
      %v392 = vadd.f32 %v391, %v386
      %v393 = vmax.f32 %v392, 0.0
      %394 = vst.msk [vmem:[%s197 + $0x8] sm:$0xff] %vm352, %v393
      %v395 = vmul.f32 %v359, %v380
      %v396 = vadd.f32 %v395, %v386
      %v397 = vmax.f32 %v396, 0.0
      %398 = vst.msk [vmem:[%s197 + $0x10] sm:$0xff] %vm352, %v397
      %v399 = vmul.f32 %v360, %v380
      %v400 = vadd.f32 %v399, %v386
      %v401 = vmax.f32 %v400, 0.0
      %402 = vst.msk [vmem:[%s197 + $0x18] sm:$0xff] %vm352, %v401
      %p403 = scmp.lt.s32.totalorder %s15, 1
      %s404 = scalar_select %p403, %s15, 1
      %s405 = smul.addr %s404, 4
      %s406 = smul.addr %s405, 8
      %s407 = scalar_lea.vmem %s4, %s406
      // Predicated region
      $region37: #{hnet_forward.18} parent=35 // pred_check
        %p408 = pneg %p122
      $region38: #{hnet_forward.18} parent=35 // pred_check_branch
        %410 = sbr.rel (%p408) target = $region40
      $region39: #{hnet_forward.18} parent=35 // pred_region
        _
      $region40: #{hnet_forward.18} parent=35 // pred_fallthru
        _
    $region36: #{hnet_forward.18} parent=5 // pred_fallthru
      _
    %p411 = scmp.le.s32.totalorder 2, %s10
    // Predicated region
    $region41: #{hnet_forward.18} parent=5 // pred_check
      %p412 = pneg %p411
    $region42: #{hnet_forward.18} parent=5 // pred_check_branch
      %414 = sbr.rel (%p412) target = $region44
    $region43: #{hnet_forward.18} parent=5 // pred_region
      %s415 = ssub.s32 %s10, 2
      // Predicated region
      $region45: #{hnet_forward.18} parent=43 // pred_check
        %p416 = pneg %p128
      $region46: #{hnet_forward.18} parent=43 // pred_check_branch
        %418 = sbr.rel (%p416) target = $region48
      $region47: #{hnet_forward.18} parent=43 // pred_region
        %p419 = scmp.lt.s32.totalorder %s16, 1
        %s420 = scalar_select %p419, %s16, 1
        %s421 = smul.addr %s420, 4
        %s422 = smul.addr %s421, 8
        %s423 = scalar_lea.vmem %s4, %s422
      $region48: #{hnet_forward.18} parent=43 // pred_fallthru
        _
    $region44: #{hnet_forward.18} parent=5 // pred_fallthru
      _
  $region6: #{hnet_forward.18} parent=0 // loop_footer
    %s14 = sadd.s32 1, %s10
  $region7: #{hnet_forward.18} parent=0 // loop_footer_branch
    %9 = sbr.rel target = $region3
  $region8: #{hnet_forward.18} parent=0 // loop_exit
    _

// kernel: hnet_forward.19
$region0: #{hnet_forward.19}
  #allocation0 [shape = 'u32[]', space=smem, size = 0x4, offset = 0x4, fixed_abs, tag = 'smem constant byte address 0x4 - core index']
  #allocation1 [shape = 'u32[144,128]{1,0:T(1,128)}', space=vmem, size = 0x12000, scoped, tag = 'internal scratch']
  %s0 = inlined_call_operand.vmem [shape: bf16[2,392,256], index: 0, kind: input, shape index: {}]
  %s1 = inlined_call_operand.vmem [shape: bf16[3,392], index: 1, kind: input, shape index: {}]
  %s2 = inlined_call_operand.vmem [shape: f32[2,3,256], index: 2, kind: output, shape index: {}]
  %s3 = sld [smem:[#allocation0]]
  $region41: #{hnet_forward.19} parent=0
    _
  %s5 = ssub.s32 1, %s3
  %s6 = scalar_select 0, %s5, %s3
  loop: start=0, step=1, limit=4
  $region2: #{hnet_forward.19} parent=0 // loop_pre_header
    _
  $region3: #{hnet_forward.19} parent=0 // loop_header
    %s8 = sphi 0, %s12
    %p9 = scmp.ge.s32.totalorder %s8, 4
    %s15 = sphi 0, %s27
    %s16 = sphi 0, %s23
    %s17 = sphi 0, %s15
    %s18 = sphi 0, %s16
    %s19 = sphi 0, %s17
    %s20 = sphi 0, %s18
    %s32 = sphi 0, %s34
    %s35 = sphi 0, %s32
    %s36 = sphi 0, %s35
    %s52 = sphi 0, %s36
    %s56 = sphi 0, %s56
    %s58 = sphi 0, %s56
    %s59 = sphi 0, %s58
    %s73 = sphi 0, %s59
    %s81 = sphi 0, %s83
    %s84 = sphi 0, %s81
    %s85 = sphi 0, %s84
    %s101 = sphi 0, %s85
  $region4: #{hnet_forward.19} parent=0 // loop_header_branch
    %11 = sbr.rel (%p9) target = $region8
  $region5: #{hnet_forward.19} parent=0 // loop_body
    %s13 = ssub.s32 %s8, 1
    %s14 = ssub.s32 %s8, 2
    %s21 = sadd.s32 1, %s16
    %p22 = scmp.ge.s32.totalorder %s21, 1
    %s23 = scalar_select %p22, 0, %s21
    %s24 = sadd.s32 1, %s15
    %s25 = scalar_select %p22, %s24, %s15
    %p26 = scmp.ge.s32.totalorder %s25, 2
    %s27 = scalar_select %p26, 0, %s25
    %s28 = ssub.s32 %s15, %s27
    %s29 = ssub.s32 %s16, %s23
    %s30 = sor.u32 %s28, %s29
    %p31 = scmp.eq.s32.totalorder %s30, 0
    %s33 = sadd.s32 %s32, 1
    %s34 = scalar_select %p31, %s32, %s33
    %p37 = pneg %p31
    %p38 = scmp.eq.s32.totalorder %s8, 1
    %p39 = por %p37, %p38
    %p40 = scmp.ne.s32.totalorder %s32, %s35
    %p41 = scmp.eq.s32.totalorder %s8, 0
    %p42 = por %p40, %p41
    %p43 = scmp.ne.s32.totalorder %s32, %s35
    %p44 = scmp.eq.s32.totalorder %s13, 1
    %p45 = por %p43, %p44
    %p46 = scmp.ne.s32.totalorder %s35, %s36
    %p47 = scmp.eq.s32.totalorder %s13, 0
    %p48 = por %p46, %p47
    %p49 = scmp.ne.s32.totalorder %s35, %s36
    %p50 = scmp.eq.s32.totalorder %s14, 1
    %p51 = por %p49, %p50
    %p53 = scmp.ne.s32.totalorder %s36, %s52
    %p54 = scmp.eq.s32.totalorder %s14, 0
    %p55 = por %p53, %p54
    %s57 = sadd.s32 %s56, 1
    %p60 = scmp.eq.s32.totalorder %s8, 1
    %p61 = scmp.ne.s32.totalorder %s56, %s58
    %p62 = scmp.eq.s32.totalorder %s8, 0
    %p63 = por %p61, %p62
    %p64 = scmp.ne.s32.totalorder %s56, %s58
    %p65 = scmp.eq.s32.totalorder %s13, 1
    %p66 = por %p64, %p65
    %p67 = scmp.ne.s32.totalorder %s58, %s59
    %p68 = scmp.eq.s32.totalorder %s13, 0
    %p69 = por %p67, %p68
    %p70 = scmp.ne.s32.totalorder %s58, %s59
    %p71 = scmp.eq.s32.totalorder %s14, 1
    %p72 = por %p70, %p71
    %p74 = scmp.ne.s32.totalorder %s59, %s73
    %p75 = scmp.eq.s32.totalorder %s14, 0
    %p76 = por %p74, %p75
    %s77 = ssub.s32 %s15, %s27
    %s78 = ssub.s32 %s16, %s23
    %s79 = sor.u32 %s77, %s78
    %p80 = scmp.eq.s32.totalorder %s79, 0
    %s82 = sadd.s32 %s81, 1
    %s83 = scalar_select %p80, %s81, %s82
    %p86 = pneg %p80
    %p87 = scmp.eq.s32.totalorder %s8, 1
    %p88 = por %p86, %p87
    %p89 = scmp.ne.s32.totalorder %s81, %s84
    %p90 = scmp.eq.s32.totalorder %s8, 0
    %p91 = por %p89, %p90
    %p92 = scmp.ne.s32.totalorder %s81, %s84
    %p93 = scmp.eq.s32.totalorder %s13, 1
    %p94 = por %p92, %p93
    %p95 = scmp.ne.s32.totalorder %s84, %s85
    %p96 = scmp.eq.s32.totalorder %s13, 0
    %p97 = por %p95, %p96
    %p98 = scmp.ne.s32.totalorder %s84, %s85
    %p99 = scmp.eq.s32.totalorder %s14, 1
    %p100 = por %p98, %p99
    %p102 = scmp.ne.s32.totalorder %s85, %s101
    %p103 = scmp.eq.s32.totalorder %s14, 0
    %p104 = por %p102, %p103
    %p105 = scmp.le.s32.totalorder 1, %s8
    %p106 = scmp.lt.s32.totalorder %s8, 3
    %p107 = pnand %p105, %p106
    %p108 = pneg %p107
    // Predicated region
    $region9: #{hnet_forward.19} parent=5 // pred_check
      _
    $region10: #{hnet_forward.19} parent=5 // pred_check_branch
      %110 = sbr.rel (%p107) target = $region12
    $region11: #{hnet_forward.19} parent=5 // pred_region
      %s111 = ssub.s32 %s8, 1
      // Predicated region
      $region13: #{hnet_forward.19} parent=11 // pred_check
        %p112 = pneg %p69
      $region14: #{hnet_forward.19} parent=11 // pred_check_branch
        %114 = sbr.rel (%p112) target = $region16
      $region15: #{hnet_forward.19} parent=11 // pred_region
        _
      $region16: #{hnet_forward.19} parent=11 // pred_fallthru
        _
    $region12: #{hnet_forward.19} parent=5 // pred_fallthru
      _
    %p115 = scmp.lt.s32.totalorder %s8, 2
    // Predicated region
    $region17: #{hnet_forward.19} parent=5 // pred_check
      %p116 = pneg %p115
    $region18: #{hnet_forward.19} parent=5 // pred_check_branch
      %118 = sbr.rel (%p116) target = $region20
    $region19: #{hnet_forward.19} parent=5 // pred_region
      // Predicated region
      $region21: #{hnet_forward.19} parent=19 // pred_check
        %p119 = pneg %p42
      $region22: #{hnet_forward.19} parent=19 // pred_check_branch
        %121 = sbr.rel (%p119) target = $region24
      $region23: #{hnet_forward.19} parent=19 // pred_region
        %s122 = smul.u32 2, %s16
        %p123 = scmp.lt.s32.totalorder %s15, 1
        %s124 = scalar_select %p123, %s15, 1
        %p125 = scmp.lt.s32.totalorder %s122, 1
        %s126 = scalar_select %p125, %s122, 1
        %s127 = smul.addr %s124, 98
        %s128 = sadd.s32 %s126, %s127
        %s129 = smul.addr %s128, 4
        %s130 = scalar_lea.vmem %s0, %s129
        %s131 = smul.u32 2, %s16
      $region24: #{hnet_forward.19} parent=19 // pred_fallthru
        _
    $region20: #{hnet_forward.19} parent=5 // pred_fallthru
      _
    %p132 = scmp.le.s32.totalorder 1, %s8
    %p133 = scmp.lt.s32.totalorder %s8, 3
    %p134 = pnand %p132, %p133
    %p135 = pneg %p134
    // Predicated region
    $region25: #{hnet_forward.19} parent=5 // pred_check
      _
    $region26: #{hnet_forward.19} parent=5 // pred_check_branch
      %137 = sbr.rel (%p134) target = $region28
    $region27: #{hnet_forward.19} parent=5 // pred_region
      %s138 = ssub.s32 %s8, 1
      %s139 = smul.u32 2, %s18
      %p140 = scmp.lt.s32.totalorder %s17, 1
      %s141 = scalar_select %p140, %s17, 1
      %p142 = scmp.lt.s32.totalorder %s139, 1
      %s143 = scalar_select %p142, %s139, 1
      %s144 = smul.addr %s141, 98
      %s145 = sadd.s32 %s143, %s144
      %s146 = smul.addr %s145, 4
      %s147 = scalar_lea.vmem %s0, %s146
      %p148 = pneg %p48
      %p149 = pneg %p45
      %p150 = pneg %p69
      %p151 = pneg %p66
      %p152 = pneg %p97
      %p153 = pneg %p94
      %s154 = smul.u32 2, %s18
      %p155 = scmp.lt.s32.totalorder %s17, 1
      %s156 = scalar_select %p155, %s17, 1
      %p157 = scmp.lt.s32.totalorder %s154, 1
      %s158 = scalar_select %p157, %s154, 1
      %s159 = smul.addr %s156, 2
      %s160 = sadd.s32 %s158, %s159
      %s161 = smul.addr %s160, 4
      %s162 = scalar_lea.vmem %s2, %s161
      %s163 = smul.u32 2, %s18
      %p164 = scmp.lt.s32.totalorder %s17, 1
      %s165 = scalar_select %p164, %s17, 1
      %p166 = scmp.lt.s32.totalorder %s163, 1
      %s167 = scalar_select %p166, %s163, 1
      %s168 = smul.addr %s165, 98
      %s169 = sadd.s32 %s167, %s168
      %s170 = smul.addr %s169, 4
      %s171 = scalar_lea.vmem %s0, %s170
      %s172 = smul.u32 2, %s18
      %s173 = smul.u32 2, %s18
      %p174 = scmp.lt.s32.totalorder %s17, 1
      %s175 = scalar_select %p174, %s17, 1
      %p176 = scmp.lt.s32.totalorder %s173, 1
      %s177 = scalar_select %p176, %s173, 1
      %s178 = smul.addr %s175, 2
      %s179 = sadd.s32 %s177, %s178
      %s180 = smul.addr %s179, 4
      %s181 = scalar_lea.vmem %s2, %s180
      %s182 = smul.u32 2, %s18
      %v184 = vld [vmem:[%s1] sm:$0xff]
      %v185 = vld [vmem:[%s171] sm:$0xff]
      %v186 = vld [vmem:[%s171 + $0x8] sm:$0xff]
      %v187 = vld [vmem:[%s171 + $0x10] sm:$0xff]
      %v188 = vld [vmem:[%s171 + $0x18] sm:$0xff]
      %v189 = vld [vmem:[%s171 + $0x20] sm:$0xff]
      %v190 = vld [vmem:[%s171 + $0x28] sm:$0xff]
      %v191 = vld [vmem:[%s171 + $0x30] sm:$0xff]
      %v192 = vld [vmem:[%s171 + $0x38] sm:$0xff]
      %v193 = vld [vmem:[%s171 + $0x40] sm:$0xff]
      %v194 = vld [vmem:[%s171 + $0x48] sm:$0xff]
      %v195 = vld [vmem:[%s171 + $0x50] sm:$0xff]
      %v196 = vld [vmem:[%s171 + $0x58] sm:$0xff]
      %v197 = vld [vmem:[%s171 + $0x60] sm:$0xff]
      %v198 = vld [vmem:[%s171 + $0x68] sm:$0xff]
      %v199 = vld [vmem:[%s171 + $0x70] sm:$0xff]
      %v200 = vld [vmem:[%s171 + $0x78] sm:$0xff]
      %v201 = vld [vmem:[%s171 + $0x80] sm:$0xff]
      %v202 = vld [vmem:[%s171 + $0x88] sm:$0xff]
      %v203 = vld [vmem:[%s171 + $0x90] sm:$0xff]
      %v204 = vld [vmem:[%s171 + $0x98] sm:$0xff]
      %v205 = vld [vmem:[%s171 + $0xa0] sm:$0xff]
      %v206 = vld [vmem:[%s171 + $0xa8] sm:$0xff]
      %v207 = vld [vmem:[%s171 + $0xb0] sm:$0xff]
      %v208 = vld [vmem:[%s171 + $0xb8] sm:$0xff]
      %v209 = vld [vmem:[%s171 + $0xc0] sm:$0xff]
      %v210 = vld [vmem:[%s171 + $0xc8] sm:$0xff]
      %v211 = vld [vmem:[%s171 + $0xd0] sm:$0xff]
      %v212 = vld [vmem:[%s171 + $0xd8] sm:$0xff]
      %v213 = vld [vmem:[%s171 + $0xe0] sm:$0xff]
      %v214 = vld [vmem:[%s171 + $0xe8] sm:$0xff]
      %v215 = vld [vmem:[%s171 + $0xf0] sm:$0xff]
      %v216 = vld [vmem:[%s171 + $0xf8] sm:$0xff]
      %v217 = vld [vmem:[%s171 + $0x100] sm:$0xff]
      %v218 = vld [vmem:[%s171 + $0x108] sm:$0xff]
      %v219 = vld [vmem:[%s171 + $0x110] sm:$0xff]
      %v220 = vld [vmem:[%s171 + $0x118] sm:$0xff]
      %v221 = vld [vmem:[%s171 + $0x120] sm:$0xff]
      %v222 = vld [vmem:[%s171 + $0x128] sm:$0xff]
      %v223 = vld [vmem:[%s171 + $0x130] sm:$0xff]
      %v224 = vld [vmem:[%s171 + $0x138] sm:$0xff]
      %v225 = vld [vmem:[%s171 + $0x140] sm:$0xff]
      %v226 = vld [vmem:[%s171 + $0x148] sm:$0xff]
      %v227 = vld [vmem:[%s171 + $0x150] sm:$0xff]
      %v228 = vld [vmem:[%s171 + $0x158] sm:$0xff]
      %v229 = vld [vmem:[%s171 + $0x160] sm:$0xff]
      %v230 = vld [vmem:[%s171 + $0x168] sm:$0xff]
      %v231 = vld [vmem:[%s171 + $0x170] sm:$0xff]
      %v232 = vld [vmem:[%s171 + $0x178] sm:$0xff]
      %v233 = vld [vmem:[%s171 + $0x180] sm:$0xff]
      %v235 = vcombine.high %v184, %v184
      %v237 = vunpack.c.l.s4 1983009808
      %v238 = vunpack.c.0.s8 %v237
      %v239 = vlaneseq
      %v240 = vshrl.u32 %v239, 7
      %v241 = vsub.s32 %v238, %v240
      %v242 = vrot.slane %v184, %v241
      %v244 = vunpack.c.l.s4 1983009808
      %v245 = vunpack.c.0.s8 %v244
      %v246 = vlaneseq
      %v247 = vshrl.u32 %v246, 7
      %v248 = vsub.s32 %v245, %v247
      %v249 = vrot.slane %v235, %v248
      %v250 = vcombine.high %v242, %v242
      %v251 = vcombine.high %v249, %v249
      %v304 = vunpack.c.l.b16 %v185
      %v305 = vunpack.c.h.b16 %v185
      %v306 = vunpack.c.l.b16 %v186
      %v307 = vunpack.c.h.b16 %v186
      %v308 = vunpack.c.l.b16 %v187
      %v309 = vunpack.c.h.b16 %v187
      %v310 = vunpack.c.l.b16 %v188
      %v311 = vunpack.c.h.b16 %v188
      %v312 = vunpack.c.l.b16 %v189
      %v313 = vunpack.c.h.b16 %v189
      %v314 = vunpack.c.l.b16 %v190
      %v315 = vunpack.c.h.b16 %v190
      %v316 = vunpack.c.l.b16 %v191
      %v317 = vunpack.c.h.b16 %v191
      %v318 = vunpack.c.l.b16 %v192
      %v319 = vunpack.c.h.b16 %v192
      %v320 = vunpack.c.l.b16 %v193
      %v321 = vunpack.c.h.b16 %v193
      %v322 = vunpack.c.l.b16 %v194
      %v323 = vunpack.c.h.b16 %v194
      %v324 = vunpack.c.l.b16 %v195
      %v325 = vunpack.c.h.b16 %v195
      %v326 = vunpack.c.l.b16 %v196
      %v327 = vunpack.c.h.b16 %v196
      %v328 = vunpack.c.l.b16 %v197
      %v329 = vunpack.c.h.b16 %v197
      %v330 = vunpack.c.l.b16 %v198
      %v331 = vunpack.c.h.b16 %v198
      %v332 = vunpack.c.l.b16 %v199
      %v333 = vunpack.c.h.b16 %v199
      %v334 = vunpack.c.l.b16 %v200
      %v335 = vunpack.c.h.b16 %v200
      %v336 = vunpack.c.l.b16 %v201
      %v337 = vunpack.c.h.b16 %v201
      %v338 = vunpack.c.l.b16 %v202
      %v339 = vunpack.c.h.b16 %v202
      %v340 = vunpack.c.l.b16 %v203
      %v341 = vunpack.c.h.b16 %v203
      %v342 = vunpack.c.l.b16 %v204
      %v343 = vunpack.c.h.b16 %v204
      %v344 = vunpack.c.l.b16 %v205
      %v345 = vunpack.c.h.b16 %v205
      %v346 = vunpack.c.l.b16 %v206
      %v347 = vunpack.c.h.b16 %v206
      %v348 = vunpack.c.l.b16 %v207
      %v349 = vunpack.c.h.b16 %v207
      %v350 = vunpack.c.l.b16 %v208
      %v351 = vunpack.c.h.b16 %v208
      %v352 = vunpack.c.l.b16 %v209
      %v353 = vunpack.c.h.b16 %v209
      %v354 = vunpack.c.l.b16 %v210
      %v355 = vunpack.c.h.b16 %v210
      %v356 = vunpack.c.l.b16 %v211
      %v357 = vunpack.c.h.b16 %v211
      %v358 = vunpack.c.l.b16 %v212
      %v359 = vunpack.c.h.b16 %v212
      %v360 = vunpack.c.l.b16 %v213
      %v361 = vunpack.c.h.b16 %v213
      %v362 = vunpack.c.l.b16 %v214
      %v363 = vunpack.c.h.b16 %v214
      %v364 = vunpack.c.l.b16 %v215
      %v365 = vunpack.c.h.b16 %v215
      %v366 = vunpack.c.l.b16 %v216
      %v367 = vunpack.c.h.b16 %v216
      %v368 = vunpack.c.l.b16 %v217
      %v369 = vunpack.c.h.b16 %v217
      %v370 = vunpack.c.l.b16 %v218
      %v371 = vunpack.c.h.b16 %v218
      %v372 = vunpack.c.l.b16 %v219
      %v373 = vunpack.c.h.b16 %v219
      %v374 = vunpack.c.l.b16 %v220
      %v375 = vunpack.c.h.b16 %v220
      %v376 = vunpack.c.l.b16 %v221
      %v377 = vunpack.c.h.b16 %v221
      %v378 = vunpack.c.l.b16 %v222
      %v379 = vunpack.c.h.b16 %v222
      %v380 = vunpack.c.l.b16 %v223
      %v381 = vunpack.c.h.b16 %v223
      %v382 = vunpack.c.l.b16 %v224
      %v383 = vunpack.c.h.b16 %v224
      %v384 = vunpack.c.l.b16 %v225
      %v385 = vunpack.c.h.b16 %v225
      %v386 = vunpack.c.l.b16 %v226
      %v387 = vunpack.c.h.b16 %v226
      %v388 = vunpack.c.l.b16 %v227
      %v389 = vunpack.c.h.b16 %v227
      %v390 = vunpack.c.l.b16 %v228
      %v391 = vunpack.c.h.b16 %v228
      %v392 = vunpack.c.l.b16 %v229
      %v393 = vunpack.c.h.b16 %v229
      %v394 = vunpack.c.l.b16 %v230
      %v395 = vunpack.c.h.b16 %v230
      %v396 = vunpack.c.l.b16 %v231
      %v397 = vunpack.c.h.b16 %v231
      %v398 = vunpack.c.l.b16 %v232
      %v399 = vunpack.c.h.b16 %v232
      %v400 = vunpack.c.l.b16 %v233
      %v401 = vunpack.c.h.b16 %v233
      %v402 = vpack.c.b16 %v306, %v304
      %v403 = vpack.c.b16 %v307, %v305
      %v404 = vpack.c.b16 %v310, %v308
      %v405 = vpack.c.b16 %v311, %v309
      %v406 = vpack.c.b16 %v314, %v312
      %v407 = vpack.c.b16 %v315, %v313
      %v408 = vpack.c.b16 %v318, %v316
      %v409 = vpack.c.b16 %v319, %v317
      %v410 = vpack.c.b16 %v322, %v320
      %v411 = vpack.c.b16 %v323, %v321
      %v412 = vpack.c.b16 %v326, %v324
      %v413 = vpack.c.b16 %v327, %v325
      %v414 = vpack.c.b16 %v330, %v328
      %v415 = vpack.c.b16 %v331, %v329
      %v416 = vpack.c.b16 %v334, %v332
      %v417 = vpack.c.b16 %v335, %v333
      %v418 = vpack.c.b16 %v338, %v336
      %v419 = vpack.c.b16 %v339, %v337
      %v420 = vpack.c.b16 %v342, %v340
      %v421 = vpack.c.b16 %v343, %v341
      %v422 = vpack.c.b16 %v346, %v344
      %v423 = vpack.c.b16 %v347, %v345
      %v424 = vpack.c.b16 %v350, %v348
      %v425 = vpack.c.b16 %v351, %v349
      %v426 = vpack.c.b16 %v354, %v352
      %v427 = vpack.c.b16 %v355, %v353
      %v428 = vpack.c.b16 %v358, %v356
      %v429 = vpack.c.b16 %v359, %v357
      %v430 = vpack.c.b16 %v362, %v360
      %v431 = vpack.c.b16 %v363, %v361
      %v432 = vpack.c.b16 %v366, %v364
      %v433 = vpack.c.b16 %v367, %v365
      %v434 = vpack.c.b16 %v370, %v368
      %v435 = vpack.c.b16 %v371, %v369
      %v436 = vpack.c.b16 %v374, %v372
      %v437 = vpack.c.b16 %v375, %v373
      %v438 = vpack.c.b16 %v378, %v376
      %v439 = vpack.c.b16 %v379, %v377
      %v440 = vpack.c.b16 %v382, %v380
      %v441 = vpack.c.b16 %v383, %v381
      %v442 = vpack.c.b16 %v386, %v384
      %v443 = vpack.c.b16 %v387, %v385
      %v444 = vpack.c.b16 %v390, %v388
      %v445 = vpack.c.b16 %v391, %v389
      %v446 = vpack.c.b16 %v394, %v392
      %v447 = vpack.c.b16 %v395, %v393
      %v448 = vpack.c.b16 %v398, %v396
      %v449 = vpack.c.b16 %v399, %v397
      %v450 = vpack.c.b16 %v400, %v400
      %v451 = vpack.c.b16 %v401, %v401
      %vm500 = vcmask 64512
      %v502 = vsel %vm500, %v251, 0
      %vm504 = vcmask 1043456
      %v506 = vsel %vm504, %v450, 0
      %v509 = vsel %vm504, %v451, 0
      %511 = vmatprep.subr.bf16.mxu0 %v403
      %512 = vmatpush1.bf16.msra.mxu0 %v402
      %513 = vmatprep.subr.bf16.mxu0 %v405
      %514 = vmatpush1.bf16.msra.mxu0 %v404
      %515 = vmatprep.subr.bf16.mxu0 %v407
      %516 = vmatpush1.bf16.msra.mxu0 %v406
      %517 = vmatprep.subr.bf16.mxu0 %v409
      %518 = vmatpush1.bf16.msra.mxu0 %v408
      %519 = vmatprep.subr.bf16.mxu0 %v411
      %520 = vmatpush1.bf16.msra.mxu0 %v410
      %521 = vmatprep.subr.bf16.mxu0 %v413
      %522 = vmatpush1.bf16.msra.mxu0 %v412
      %523 = vmatprep.subr.bf16.mxu0 %v415
      %524 = vmatpush1.bf16.msra.mxu0 %v414
      %525 = vmatprep.subr.bf16.mxu0 %v417
      %526 = vmatpush1.bf16.msra.mxu0 %v416
      %527 = vmatprep.subr.bf16.mxu0 %v419
      %528 = vmatpush1.bf16.msra.mxu0 %v418
      %529 = vmatprep.subr.bf16.mxu0 %v421
      %530 = vmatpush1.bf16.msra.mxu0 %v420
      %531 = vmatprep.subr.bf16.mxu0 %v423
      %532 = vmatpush1.bf16.msra.mxu0 %v422
      %533 = vmatprep.subr.bf16.mxu0 %v425
      %534 = vmatpush1.bf16.msra.mxu0 %v424
      %535 = vmatprep.subr.bf16.mxu0 %v427
      %536 = vmatpush1.bf16.msra.mxu0 %v426
      %537 = vmatprep.subr.bf16.mxu0 %v429
      %538 = vmatpush1.bf16.msra.mxu0 %v428
      %539 = vmatprep.subr.bf16.mxu0 %v431
      %540 = vmatpush1.bf16.msra.mxu0 %v430
      %541 = vmatprep.subr.bf16.mxu0 %v433
      %542 = vmatpush1.bf16.msra.mxu0 %v432
      %543 = vmatprep.mubr.bf16.mxu0 %v250
      %544 = vmatmul.mubr.bf16.gmra.mrb[0].mxu0 %v242
      %v545 = vpop.f32.mrb[0].mxu0
      %v546 = vadd.f32 0.0, %v545
      %v547 = vpop.f32.mrb[0].mxu0
      %v548 = vadd.f32 0.0, %v547
      %v549 = vpop.f32.mrb[0].mxu0
      %v550 = vpop.f32.mrb[0].mxu0
      %551 = vdwg.mxu0
      %552 = vmatprep.subr.bf16.mxu0 %v435
      %553 = vmatpush1.bf16.msra.mxu0 %v434
      %554 = vmatprep.subr.bf16.mxu0 %v437
      %555 = vmatpush1.bf16.msra.mxu0 %v436
      %556 = vmatprep.subr.bf16.mxu0 %v439
      %557 = vmatpush1.bf16.msra.mxu0 %v438
      %558 = vmatprep.subr.bf16.mxu0 %v441
      %559 = vmatpush1.bf16.msra.mxu0 %v440
      %560 = vmatprep.subr.bf16.mxu0 %v443
      %561 = vmatpush1.bf16.msra.mxu0 %v442
      %562 = vmatprep.subr.bf16.mxu0 %v445
      %563 = vmatpush1.bf16.msra.mxu0 %v444
      %564 = vmatprep.subr.bf16.mxu0 %v447
      %565 = vmatpush1.bf16.msra.mxu0 %v446
      %566 = vmatprep.subr.bf16.mxu0 %v449
      %567 = vmatpush1.bf16.msra.mxu0 %v448
      %568 = vmatprep.subr.bf16.mxu0 %v509
      %569 = vmatpush1.bf16.msra.mxu0 %v506
      %570 = vmatprep.subr.bf16.mxu0 0
      %571 = vmatpush1.bf16.msra.mxu0 0
      %572 = vmatprep.subr.bf16.mxu0 0
      %573 = vmatpush1.bf16.msra.mxu0 0
      %574 = vmatprep.subr.bf16.mxu0 0
      %575 = vmatpush1.bf16.msra.mxu0 0
      %576 = vmatprep.subr.bf16.mxu0 0
      %577 = vmatpush1.bf16.msra.mxu0 0
      %578 = vmatprep.subr.bf16.mxu0 0
      %579 = vmatpush1.bf16.msra.mxu0 0
      %580 = vmatprep.subr.bf16.mxu0 0
      %581 = vmatpush1.bf16.msra.mxu0 0
      %582 = vmatprep.subr.bf16.mxu0 0
      %583 = vmatpush1.bf16.msra.mxu0 0
      %584 = vmatprep.mubr.bf16.mxu0 %v502
      %585 = vmatmul.mubr.bf16.gmra.mrb[0].mxu0 %v249
      %v586 = vpop.f32.mrb[0].mxu0
      %v587 = vadd.f32 %v546, %v586
      %v588 = vpop.f32.mrb[0].mxu0
      %v589 = vadd.f32 %v548, %v588
      %v590 = vpop.f32.mrb[0].mxu0
      %v591 = vpop.f32.mrb[0].mxu0
      %592 = vdwg.mxu0
      %v593 = vmax.f32 %v587, 0.0
      %v594 = vmax.f32 %v589, 0.0
      %v595 = vmin.f32 %v593, 6.0
      %v596 = vmin.f32 %v594, 6.0
      %v597 = vmul.f32 %v595, 0.16666667
      %v598 = vmul.f32 %v596, 0.16666667
      %v601 = vcombine.low %v597, %v598
      %603 = vst [vmem:[%s181] sm:$0x77] %v601
      %s604 = smul.u32 2, %s18
      %p605 = scmp.lt.s32.totalorder %s17, 1
      %s606 = scalar_select %p605, %s17, 1
      %p607 = scmp.lt.s32.totalorder %s604, 1
      %s608 = scalar_select %p607, %s604, 1
      %s609 = smul.addr %s606, 2
      %s610 = sadd.s32 %s608, %s609
      %s611 = smul.addr %s610, 4
      %s612 = scalar_lea.vmem %s2, %s611
      // Predicated region
      $region29: #{hnet_forward.19} parent=27 // pred_check
        %p613 = pneg %p94
      $region30: #{hnet_forward.19} parent=27 // pred_check_branch
        %615 = sbr.rel (%p613) target = $region32
      $region31: #{hnet_forward.19} parent=27 // pred_region
        %s616 = smul.u32 2, %s18
      $region32: #{hnet_forward.19} parent=27 // pred_fallthru
        _
    $region28: #{hnet_forward.19} parent=5 // pred_fallthru
      _
    %p617 = scmp.le.s32.totalorder 2, %s8
    // Predicated region
    $region33: #{hnet_forward.19} parent=5 // pred_check
      %p618 = pneg %p617
    $region34: #{hnet_forward.19} parent=5 // pred_check_branch
      %620 = sbr.rel (%p618) target = $region36
    $region35: #{hnet_forward.19} parent=5 // pred_region
      %s621 = ssub.s32 %s8, 2
      // Predicated region
      $region37: #{hnet_forward.19} parent=35 // pred_check
        %p622 = pneg %p100
      $region38: #{hnet_forward.19} parent=35 // pred_check_branch
        %624 = sbr.rel (%p622) target = $region40
      $region39: #{hnet_forward.19} parent=35 // pred_region
        %s625 = smul.u32 2, %s20
        %p626 = scmp.lt.s32.totalorder %s19, 1
        %s627 = scalar_select %p626, %s19, 1
        %p628 = scmp.lt.s32.totalorder %s625, 1
        %s629 = scalar_select %p628, %s625, 1
        %s630 = smul.addr %s627, 2
        %s631 = sadd.s32 %s629, %s630
        %s632 = smul.addr %s631, 4
        %s633 = scalar_lea.vmem %s2, %s632
      $region40: #{hnet_forward.19} parent=35 // pred_fallthru
        _
    $region36: #{hnet_forward.19} parent=5 // pred_fallthru
      _
  $region6: #{hnet_forward.19} parent=0 // loop_footer
    %s12 = sadd.s32 1, %s8
  $region7: #{hnet_forward.19} parent=0 // loop_footer_branch
    %7 = sbr.rel target = $region3
  $region8: #{hnet_forward.19} parent=0 // loop_exit
    _

</llo_original>
